<compile_context>
chip_gen: v7x
topology: tpu7x:2x2x1
jax: 0.10.0
libtpu: 0.0.40
codegen_flags: <defaults>
</compile_context>

<pallas_src>
import functools
import math

import jax
import jax.numpy as jnp
from jax import lax
from jax.experimental import pallas as pl
from jax.experimental.pallas import tpu as pltpu

LN_EPS = 1e-8          # LightSeq layer-norm epsilon
NEG_INF = -1e9
CACHE_DTYPE = jnp.bfloat16   # matmul-operand / KV-cache dtype (accumulation stays f32)

_PIPELINE_FALLBACK_ERRORS = tuple(
    e for e in (TypeError, ValueError, NotImplementedError,
                getattr(pltpu, "LoweringException", None),
                getattr(jax.errors, "JaxRuntimeError", None))
    if e is not None)


# ----------------------------- in-kernel helpers -----------------------------
def _layer_norm(x, g, b):
    mu = jnp.mean(x, axis=-1, keepdims=True)
    var = jnp.mean((x - mu) ** 2, axis=-1, keepdims=True)
    return (x - mu) * lax.rsqrt(var + LN_EPS) * g + b


def _softmax_last(s):
    m = jnp.max(s, axis=-1, keepdims=True)
    e = jnp.exp(s - m)
    return e * pl.reciprocal(jnp.sum(e, axis=-1, keepdims=True), approx=True)


# --------------------------------- kernel ------------------------------------
# All weight matrices arrive pre-transposed (and the attention output projections reshaped
# per-head to [nhead, hd, HS]) so every in-kernel matmul is a plain `h @ W` / batched einsum
# with no in-kernel .T or head concat.
def decoder_layer_kernel(
    dec_ref, enc_ref, mask_ref,
    qkvw_ref, qkvb_ref, ow_ref, ob_ref, nw_ref, nb_ref,
    eqw_ref, eqb_ref, eow_ref, eob_ref, enw_ref, enb_ref,
    iw_ref, ib_ref, outw_ref, outb_ref, fnw_ref, fnb_ref,
    kvw_ref, kvb_ref,
    out_ref,
    k_cache, v_cache, ek_cache, ev_cache,
    *, nhead, pre_layer_norm,
):
    t = pl.program_id(1)
    tile, hs = dec_ref.shape
    sl = k_cache.shape[1]
    hd = hs // nhead
    cdt = k_cache.dtype
    scale = 1.0 / math.sqrt(hd)

    # ---- once per batch element: enc-dec K/V into VMEM cache; zero self-attn cache
    #      (so stale VMEM can never leak NaN/Inf into the masked-out columns).
    @pl.when(t == 0)
    def _init_caches():
        k_cache[...] = jnp.zeros_like(k_cache)
        v_cache[...] = jnp.zeros_like(v_cache)
        kv = jnp.dot(enc_ref[...].astype(cdt), kvw_ref[...],
                     preferred_element_type=jnp.float32) + kvb_ref[...]
        for h in range(nhead):
            ek_cache[h, :, :] = kv[:, h * hd:(h + 1) * hd].astype(cdt)
            ev_cache[h, :, :] = kv[:, hs + h * hd: hs + (h + 1) * hd].astype(cdt)

    def split_heads(y):  # [tile, hs] -> [nhead, tile, hd]  (lane slices + stack)
        return jnp.stack([y[:, h * hd:(h + 1) * hd] for h in range(nhead)], axis=0)

    def merge_heads_project(ctx, w_ref, b_ref):
        # head merge folded into the output projection: w_ref is [nhead, hd, hs]
        y = jnp.einsum('nqd,ndh->nqh', ctx.astype(cdt), w_ref[...],
                       preferred_element_type=jnp.float32)
        return jnp.sum(y, axis=0) + b_ref[...]

    x = dec_ref[...].astype(jnp.float32)               # [tile, hs]
    row_base = t * tile
    row_start = pl.multiple_of(row_base, 16) if tile % 16 == 0 else row_base

    # ---------------- causal self attention ----------------
    residual = x
    h = _layer_norm(x, nw_ref[...], nb_ref[...]) if pre_layer_norm else x
    qkv = jnp.dot(h.astype(cdt), qkvw_ref[...],
                  preferred_element_type=jnp.float32) + qkvb_ref[...]
    # append this tile's per-head K/V to the running cache (earlier tiles already stored)
    for hh in range(nhead):
        k_cache[hh, pl.ds(row_start, tile), :] = (
            qkv[:, hs + hh * hd: hs + (hh + 1) * hd].astype(cdt))
        v_cache[hh, pl.ds(row_start, tile), :] = (
            qkv[:, 2 * hs + hh * hd: 2 * hs + (hh + 1) * hd].astype(cdt))
    qh = split_heads(qkv[:, :hs]).astype(cdt)           # [nhead, tile, hd]
    s = jnp.einsum('nqd,nkd->nqk', qh, k_cache[...],
                   preferred_element_type=jnp.float32) * scale   # [nhead, tile, sl]
    # 2-D causal mask (global row offset), broadcast over heads.  Columns beyond the
    # current tile are masked by causality, so un-filled cache rows never contribute.
    qrow = row_base + lax.broadcasted_iota(jnp.int32, (tile, sl), 0)
    kcol = lax.broadcasted_iota(jnp.int32, (tile, sl), 1)
    s = jnp.where((qrow >= kcol)[None, :, :], s, NEG_INF)
    p = _softmax_last(s)
    ctx = jnp.einsum('nqk,nkd->nqd', p.astype(cdt), v_cache[...],
                     preferred_element_type=jnp.float32)
    x = residual + merge_heads_project(ctx, ow_ref, ob_ref)
    if not pre_layer_norm:
        x = _layer_norm(x, nw_ref[...], nb_ref[...])

    # ---------------- encoder-decoder attention ----------------
    residual = x
    h = _layer_norm(x, enw_ref[...], enb_ref[...]) if pre_layer_norm else x
    q2 = jnp.dot(h.astype(cdt), eqw_ref[...],
                 preferred_element_type=jnp.float32) + eqb_ref[...]
    q2h = split_heads(q2).astype(cdt)
    s2 = jnp.einsum('nqd,nkd->nqk', q2h, ek_cache[...],
                    preferred_element_type=jnp.float32) * scale + mask_ref[...]
    p2 = _softmax_last(s2)
    ctx2 = jnp.einsum('nqk,nkd->nqd', p2.astype(cdt), ev_cache[...],
                      preferred_element_type=jnp.float32)
    x = residual + merge_heads_project(ctx2, eow_ref, eob_ref)
    if not pre_layer_norm:
        x = _layer_norm(x, enw_ref[...], enb_ref[...])

    # ---------------- feed-forward (ReLU) ----------------
    residual = x
    h = _layer_norm(x, fnw_ref[...], fnb_ref[...]) if pre_layer_norm else x
    inter = jnp.maximum(
        jnp.dot(h.astype(cdt), iw_ref[...], preferred_element_type=jnp.float32)
        + ib_ref[...], 0.0)
    ffn = jnp.dot(inter.astype(cdt), outw_ref[...],
                  preferred_element_type=jnp.float32) + outb_ref[...]
    x = residual + ffn
    if not pre_layer_norm:
        x = _layer_norm(x, fnw_ref[...], fnb_ref[...])

    out_ref[...] = x.astype(out_ref.dtype)


# ------------------------------ wrapper helpers --------------------------------
def _const_idx(ndim):
    if ndim == 2:
        return lambda b, t: (0, 0)
    return lambda b, t: (0, 0, 0)


def _vmem_limit_bytes(weight_list, tile, sl, src, hs, ims, nhead):
    """Rough per-core VMEM residency of one grid step (with headroom)."""
    lane = 128
    pad = lambda n: -(-n // lane) * lane
    hd = hs // nhead
    w = sum(int(a.size) * a.dtype.itemsize for a in weight_list) * 2   # worst case double-buffered
    io = 4 * tile * pad(hs) * 4 + 2 * src * pad(hs) * 2 + 2 * 8 * pad(src) * 4
    caches = 2 * nhead * (sl + src) * pad(hd) * 2
    acts = (nhead * tile * (pad(sl) + pad(src)) * 4      # score / prob tiles (f32)
            + tile * pad(ims) * 4                        # FFN intermediate
            + 8 * tile * pad(hs) * 4)                    # misc activations
    est = int((w + io + caches + acts) * 1.25)
    if est <= 24 * 1024 * 1024:
        return None                        # default scoped limit is plenty; don't override
    return min(est, 64 * 1024 * 1024)      # cap at v7x physical VMEM


# --------------------------------- wrapper ------------------------------------
def ls_transformer_decoder_layer(decoder_states, encoder_out, encoder_padding_mask,
                                 params, *, nhead, pre_layer_norm=True, q_tile=128):
    B, SL, HS = decoder_states.shape
    SRC = encoder_out.shape[0]
    assert HS % nhead == 0
    hd = HS // nhead

    # Same preprocessing as the PyTorch forward().  encoder_out is cast to bf16 host-side
    # (only used as a matmul operand -> halves its DMA bytes); decoder_states stay f32
    # (residual stream precision).
    enc = jnp.transpose(encoder_out, (1, 0, 2)).astype(CACHE_DTYPE)            # [B, SRC, HS]
    mask = (encoder_padding_mask.astype(jnp.float32) * -1e8)[:, None, :]       # [B, 1, SRC]

    (qkvw, qkvb, ow, ob, nw, nb,
     eqw, eqb, eow, eob, enw, enb,
     iw, ib, outw, outb, fnw, fnb,
     kvw, kvb) = params
    IMS = iw.shape[0]

    f32, wdt = jnp.float32, CACHE_DTYPE
    # One-time host-side transposes/reshapes + bf16 cast of the matmul weights.
    weight_list = (
        qkvw.T.astype(wdt), qkvb.astype(f32),
        ow.T.reshape(nhead, hd, HS).astype(wdt), ob.astype(f32),     # per-head out proj
        nw.astype(f32), nb.astype(f32),
        eqw.T.astype(wdt), eqb.astype(f32),
        eow.T.reshape(nhead, hd, HS).astype(wdt), eob.astype(f32),
        enw.astype(f32), enb.astype(f32),
        iw.T.astype(wdt), ib.astype(f32),
        outw.T.astype(wdt), outb.astype(f32),
        fnw.astype(f32), fnb.astype(f32),
        kvw.T.astype(wdt), kvb.astype(f32),
    )

    # Query-row tiling: bounds the activation footprint and (with the parallel batch axis)
    # gives v7x's two TensorCores enough work when B is small.  Tiles must keep the bf16
    # sublane alignment of the KV-cache stores -> multiple of 16, else fall back to full SL.
    if q_tile and q_tile < SL and SL % q_tile == 0 and q_tile % 16 == 0:
        tile = q_tile
    else:
        tile = SL
    num_tiles = SL // tile

    kernel = functools.partial(decoder_layer_kernel, nhead=nhead,
                               pre_layer_norm=pre_layer_norm)

    scratch_shapes = [
        pltpu.VMEM((nhead, SL, hd), CACHE_DTYPE),    # self-attn K cache
        pltpu.VMEM((nhead, SL, hd), CACHE_DTYPE),    # self-attn V cache
        pltpu.VMEM((nhead, SRC, hd), CACHE_DTYPE),   # enc-dec K cache
        pltpu.VMEM((nhead, SRC, hd), CACHE_DTYPE),   # enc-dec V cache
    ]
    vmem_limit = _vmem_limit_bytes(weight_list, tile, SL, SRC, HS, IMS, nhead)

    def run(single_buffer_weights):
        def wspec(a):
            idx = _const_idx(a.ndim)
            if single_buffer_weights:
                # Weight block index never changes across the grid -> one buffer is enough
                # (halves weight VMEM vs. the default double buffering).
                return pl.BlockSpec(a.shape, idx, pipeline_mode=pl.Buffered(1))
            return pl.BlockSpec(a.shape, idx)

        in_specs = [
            pl.BlockSpec((None, tile, HS), lambda b, t: (b, t, 0)),   # decoder row tile
            pl.BlockSpec((None, SRC, HS), lambda b, t: (b, 0, 0)),    # encoder out (per batch)
            pl.BlockSpec((None, 1, SRC), lambda b, t: (b, 0, 0)),     # additive padding bias
        ] + [wspec(a) for a in weight_list]
        out_spec = pl.BlockSpec((None, tile, HS), lambda b, t: (b, t, 0))

        return pl.pallas_call(
            kernel,
            out_shape=jax.ShapeDtypeStruct((B, SL, HS), decoder_states.dtype),
            grid=(B, num_tiles),
            in_specs=in_specs,
            out_specs=out_spec,
            scratch_shapes=scratch_shapes,
            compiler_params=pltpu.CompilerParams(
                # batch elements independent -> megacore parallel; row tiles must run in
                # order (KV cache carry) -> arbitrary.
                dimension_semantics=("parallel", "arbitrary"),
                vmem_limit_bytes=vmem_limit),
        )(decoder_states, enc, mask, *weight_list)

    if hasattr(pl, "Buffered"):
        try:
            return run(True)
        except _PIPELINE_FALLBACK_ERRORS:
            # pipeline_mode=pl.Buffered(1) unsupported on this build -> default buffering.
            pass
    return run(False)


# --------------------------- plain-JAX reference ------------------------------
def _ref_mha(q, k, v, nhead, bias=None, causal=False):
    B, SL, HS = q.shape
    SRC = k.shape[1]
    hd = HS // nhead
    qh = q.reshape(B, SL, nhead, hd).transpose(0, 2, 1, 3)
    kh = k.reshape(B, SRC, nhead, hd).transpose(0, 2, 1, 3)
    vh = v.reshape(B, SRC, nhead, hd).transpose(0, 2, 1, 3)
    s = jnp.einsum('bhqd,bhkd->bhqk', qh, kh) / math.sqrt(hd)
    if bias is not None:
        s = s + bias[:, None, None, :]
    if causal:
        row = jnp.arange(SL)[:, None]
        col = jnp.arange(SRC)[None, :]
        s = jnp.where(row >= col, s, NEG_INF)
    p = jax.nn.softmax(s, axis=-1)
    ctx = jnp.einsum('bhqk,bhkd->bhqd', p, vh)
    return ctx.transpose(0, 2, 1, 3).reshape(B, SL, HS)


def reference_forward(decoder_states, encoder_out, encoder_padding_mask, params,
                      *, nhead, pre_layer_norm=True):
    (qkvw, qkvb, ow, ob, nw, nb, eqw, eqb, eow, eob,
     enw, enb, iw, ib, outw, outb, fnw, fnb, kvw, kvb) = params
    HS = decoder_states.shape[-1]
    enc = jnp.transpose(encoder_out, (1, 0, 2))
    bias = encoder_padding_mask.astype(jnp.float32) * -1e8

    def ln(x, g, b):
        mu = jnp.mean(x, -1, keepdims=True)
        var = jnp.mean((x - mu) ** 2, -1, keepdims=True)
        return (x - mu) * lax.rsqrt(var + LN_EPS) * g + b

    x = decoder_states.astype(jnp.float32)
    res = x
    h = ln(x, nw, nb) if pre_layer_norm else x
    qkv = h @ qkvw.T + qkvb
    q, k, v = qkv[..., :HS], qkv[..., HS:2 * HS], qkv[..., 2 * HS:]
    x = res + (_ref_mha(q, k, v, nhead, causal=True) @ ow.T + ob)
    if not pre_layer_norm:
        x = ln(x, nw, nb)

    res = x
    h = ln(x, enw, enb) if pre_layer_norm else x
    q2 = h @ eqw.T + eqb
    kv = enc @ kvw.T + kvb
    k2, v2 = kv[..., :HS], kv[..., HS:]
    x = res + (_ref_mha(q2, k2, v2, nhead, bias=bias) @ eow.T + eob)
    if not pre_layer_norm:
        x = ln(x, enw, enb)

    res = x
    h = ln(x, fnw, fnb) if pre_layer_norm else x
    x = res + (jnp.maximum(h @ iw.T + ib, 0.0) @ outw.T + outb)
    if not pre_layer_norm:
        x = ln(x, fnw, fnb)
    return x


# ----------------------------------- main --------------------------------------
if __name__ == "__main__":
    B, TRG, SRC = 2, 32, 8
    HS, IMS, NH = 32, 64, 4
    Q_TILE = 16   # 2 row tiles -> exercises the tiled path + VMEM KV caches

    key = jax.random.PRNGKey(0)
    ks = jax.random.split(key, 12)

    def w(k, shape, scale=0.05):
        return (scale * jax.random.normal(k, shape)).astype(jnp.float32)

    params = (
        w(ks[0], (3 * HS, HS)),            # attn_qkvw
        w(ks[1], (1, 3 * HS), 0.01),       # attn_qkvb
        w(ks[2], (HS, HS)),                # attn_ow
        jnp.zeros((1, HS), jnp.float32),   # attn_ob
        jnp.ones((1, HS), jnp.float32),    # attn_nw
        jnp.zeros((1, HS), jnp.float32),   # attn_nb
        w(ks[3], (HS, HS)),                # encdec_attn_qw
        w(ks[4], (1, HS), 0.01),           # encdec_attn_qb
        w(ks[5], (HS, HS)),                # encdec_attn_ow
        jnp.zeros((1, HS), jnp.float32),   # encdec_attn_ob
        jnp.ones((1, HS), jnp.float32),    # encdec_attn_nw
        jnp.zeros((1, HS), jnp.float32),   # encdec_attn_nb
        w(ks[6], (IMS, HS)),               # inter_w
        w(ks[7], (1, IMS), 0.01),          # inter_b
        w(ks[8], (HS, IMS)),               # output_w
        jnp.zeros((1, HS), jnp.float32),   # output_b
        jnp.ones((1, HS), jnp.float32),    # ffn_nw
        jnp.zeros((1, HS), jnp.float32),   # ffn_nb
        w(ks[9], (2 * HS, HS)),            # encdec_attn_kvw (shared, layer 0 slice)
        w(ks[10], (1, 2 * HS), 0.01),      # encdec_attn_kvb
    )

    dk, ek = jax.random.split(ks[11])
    decoder_states = jax.random.normal(dk, (B, TRG, HS), jnp.float32)
    encoder_out = jax.random.normal(ek, (SRC, B, HS), jnp.float32)
    encoder_padding_mask = jnp.zeros((B, SRC), jnp.float32).at[1, SRC - 2:].set(1.0)

    out = ls_transformer_decoder_layer(decoder_states, encoder_out,
                                       encoder_padding_mask, params,
                                       nhead=NH, pre_layer_norm=True, q_tile=Q_TILE)
    out = jax.block_until_ready(out)

    ref = reference_forward(decoder_states, encoder_out, encoder_padding_mask,
                            params, nhead=NH, pre_layer_norm=True)
    assert out.shape == (B, TRG, HS)
    # Tolerance accounts for bf16 matmul operands (f32 accumulation) and the approximate
    # EUP reciprocal in the softmax; the f32 reference is exact.
    err = float(jnp.max(jnp.abs(out - ref)))
    assert jnp.allclose(out, ref, atol=3e-2, rtol=3e-2), err

    print("KERNEL_OK")
</pallas_src>

<mosaic_0001>
module attributes {stable_mosaic.version = 11 : i64} {
  func.func @decoder_layer_kernel(%arg0: i32, %arg1: i32, %arg2: memref<1x16x32xf32, #tpu.memory_space<vmem>>, %arg3: memref<1x8x32xbf16, #tpu.memory_space<vmem>>, %arg4: memref<1x1x8xf32, #tpu.memory_space<vmem>>, %arg5: memref<32x96xbf16, #tpu.memory_space<vmem>>, %arg6: memref<1x96xf32, #tpu.memory_space<vmem>>, %arg7: memref<4x8x32xbf16, #tpu.memory_space<vmem>>, %arg8: memref<1x32xf32, #tpu.memory_space<vmem>>, %arg9: memref<1x32xf32, #tpu.memory_space<vmem>>, %arg10: memref<1x32xf32, #tpu.memory_space<vmem>>, %arg11: memref<32x32xbf16, #tpu.memory_space<vmem>>, %arg12: memref<1x32xf32, #tpu.memory_space<vmem>>, %arg13: memref<4x8x32xbf16, #tpu.memory_space<vmem>>, %arg14: memref<1x32xf32, #tpu.memory_space<vmem>>, %arg15: memref<1x32xf32, #tpu.memory_space<vmem>>, %arg16: memref<1x32xf32, #tpu.memory_space<vmem>>, %arg17: memref<32x64xbf16, #tpu.memory_space<vmem>>, %arg18: memref<1x64xf32, #tpu.memory_space<vmem>>, %arg19: memref<64x32xbf16, #tpu.memory_space<vmem>>, %arg20: memref<1x32xf32, #tpu.memory_space<vmem>>, %arg21: memref<1x32xf32, #tpu.memory_space<vmem>>, %arg22: memref<1x32xf32, #tpu.memory_space<vmem>>, %arg23: memref<32x64xbf16, #tpu.memory_space<vmem>>, %arg24: memref<1x64xf32, #tpu.memory_space<vmem>>, %arg25: memref<1x16x32xf32, #tpu.memory_space<vmem>>, %arg26: memref<4x32x8xbf16, #tpu.memory_space<vmem>>, %arg27: memref<4x32x8xbf16, #tpu.memory_space<vmem>>, %arg28: memref<4x8x8xbf16, #tpu.memory_space<vmem>>, %arg29: memref<4x8x8xbf16, #tpu.memory_space<vmem>>) attributes {dimension_semantics = [#tpu.dimension_semantics<parallel>, #tpu.dimension_semantics<arbitrary>], iteration_bounds = array<i64: 2, 2>, scalar_prefetch = 0 : i64, scratch_operands = 4 : i64, tpu.core_type = #tpu.core_type<tc>, window_params = [{transform_indices = @transform_0, window_bounds = array<i64: 1, 16, 32>}, {transform_indices = @transform_1, window_bounds = array<i64: 1, 8, 32>}, {transform_indices = @transform_2, window_bounds = array<i64: 1, 1, 8>}, {pipeline_mode = #tpu.pipeline_mode<synchronous>, transform_indices = @transform_3, window_bounds = array<i64: 32, 96>}, {pipeline_mode = #tpu.pipeline_mode<synchronous>, transform_indices = @transform_4, window_bounds = array<i64: 1, 96>}, {pipeline_mode = #tpu.pipeline_mode<synchronous>, transform_indices = @transform_5, window_bounds = array<i64: 4, 8, 32>}, {pipeline_mode = #tpu.pipeline_mode<synchronous>, transform_indices = @transform_6, window_bounds = array<i64: 1, 32>}, {pipeline_mode = #tpu.pipeline_mode<synchronous>, transform_indices = @transform_7, window_bounds = array<i64: 1, 32>}, {pipeline_mode = #tpu.pipeline_mode<synchronous>, transform_indices = @transform_8, window_bounds = array<i64: 1, 32>}, {pipeline_mode = #tpu.pipeline_mode<synchronous>, transform_indices = @transform_9, window_bounds = array<i64: 32, 32>}, {pipeline_mode = #tpu.pipeline_mode<synchronous>, transform_indices = @transform_10, window_bounds = array<i64: 1, 32>}, {pipeline_mode = #tpu.pipeline_mode<synchronous>, transform_indices = @transform_11, window_bounds = array<i64: 4, 8, 32>}, {pipeline_mode = #tpu.pipeline_mode<synchronous>, transform_indices = @transform_12, window_bounds = array<i64: 1, 32>}, {pipeline_mode = #tpu.pipeline_mode<synchronous>, transform_indices = @transform_13, window_bounds = array<i64: 1, 32>}, {pipeline_mode = #tpu.pipeline_mode<synchronous>, transform_indices = @transform_14, window_bounds = array<i64: 1, 32>}, {pipeline_mode = #tpu.pipeline_mode<synchronous>, transform_indices = @transform_15, window_bounds = array<i64: 32, 64>}, {pipeline_mode = #tpu.pipeline_mode<synchronous>, transform_indices = @transform_16, window_bounds = array<i64: 1, 64>}, {pipeline_mode = #tpu.pipeline_mode<synchronous>, transform_indices = @transform_17, window_bounds = array<i64: 64, 32>}, {pipeline_mode = #tpu.pipeline_mode<synchronous>, transform_indices = @transform_18, window_bounds = array<i64: 1, 32>}, {pipeline_mode = #tpu.pipeline_mode<synchronous>, transform_indices = @transform_19, window_bounds = array<i64: 1, 32>}, {pipeline_mode = #tpu.pipeline_mode<synchronous>, transform_indices = @transform_20, window_bounds = array<i64: 1, 32>}, {pipeline_mode = #tpu.pipeline_mode<synchronous>, transform_indices = @transform_21, window_bounds = array<i64: 32, 64>}, {pipeline_mode = #tpu.pipeline_mode<synchronous>, transform_indices = @transform_22, window_bounds = array<i64: 1, 64>}, {transform_indices = @transform_23, window_bounds = array<i64: 1, 16, 32>}]} {
    %c0_i32 = arith.constant 0 : i32
    %0 = arith.cmpi eq, %arg1, %c0_i32 : i32
    %1 = arith.extui %0 : i1 to i32
    %c0_i32_0 = arith.constant 0 : i32
    %2 = arith.cmpi ne, %1, %c0_i32_0 : i32
    scf.if %2 {
      %cst_106 = arith.constant 0.000000e+00 : bf16
      %243 = vector.broadcast %cst_106 : bf16 to vector<4x32x8xbf16>
      %c0_107 = arith.constant 0 : index
      %c0_108 = arith.constant 0 : index
      %c0_109 = arith.constant 0 : index
      %244 = vector.load %arg26[%c0_107, %c0_108, %c0_109] : memref<4x32x8xbf16, #tpu.memory_space<vmem>>, vector<4x32x8xbf16>
      tpu.vector_store %arg26[%c0_107, %c0_108, %c0_109], %243 {strides = array<i32>} : memref<4x32x8xbf16, #tpu.memory_space<vmem>>, vector<4x32x8xbf16>,
      %cst_110 = arith.constant 0.000000e+00 : bf16
      %245 = vector.broadcast %cst_110 : bf16 to vector<4x32x8xbf16>
      %c0_111 = arith.constant 0 : index
      %c0_112 = arith.constant 0 : index
      %c0_113 = arith.constant 0 : index
      %246 = vector.load %arg27[%c0_111, %c0_112, %c0_113] : memref<4x32x8xbf16, #tpu.memory_space<vmem>>, vector<4x32x8xbf16>
      tpu.vector_store %arg27[%c0_111, %c0_112, %c0_113], %245 {strides = array<i32>} : memref<4x32x8xbf16, #tpu.memory_space<vmem>>, vector<4x32x8xbf16>,
      %c0_114 = arith.constant 0 : index
      %c0_115 = arith.constant 0 : index
      %c0_116 = arith.constant 0 : index
      %247 = vector.load %arg3[%c0_114, %c0_115, %c0_116] : memref<1x8x32xbf16, #tpu.memory_space<vmem>>, vector<1x8x32xbf16>
      %248 = vector.shape_cast %247 : vector<1x8x32xbf16> to vector<8x32xbf16>
      %c0_117 = arith.constant 0 : index
      %c0_118 = arith.constant 0 : index
      %249 = vector.load %arg23[%c0_117, %c0_118] : memref<32x64xbf16, #tpu.memory_space<vmem>>, vector<32x64xbf16>
      %cst_119 = arith.constant dense<0.000000e+00> : vector<8x64xf32>
      %250 = tpu.matmul %248, %249, %cst_119 {dimension_numbers = #tpu.dot_dimension_numbers<[1], [0], [0], [1], [0, 0, 1, 1], [], []>} : vector<8x32xbf16>, vector<32x64xbf16>, vector<8x64xf32> -> vector<8x64xf32>
      %c0_120 = arith.constant 0 : index
      %c0_121 = arith.constant 0 : index
      %251 = vector.load %arg24[%c0_120, %c0_121] : memref<1x64xf32, #tpu.memory_space<vmem>>, vector<1x64xf32>
      %252 = vector.broadcast %251 : vector<1x64xf32> to vector<8x64xf32>
      %253 = arith.addf %250, %252 : vector<8x64xf32>
      %254 = vector.extract_strided_slice %253 {offsets = [0, 0], sizes = [8, 8], strides = [1, 1]} : vector<8x64xf32> to vector<8x8xf32>
      %255 = arith.truncf %254 : vector<8x8xf32> to vector<8x8xbf16>
      %c0_122 = arith.constant 0 : index
      %c0_123 = arith.constant 0 : index
      %c0_124 = arith.constant 0 : index
      %256 = vector.load %arg28[%c0_122, %c0_123, %c0_124] : memref<4x8x8xbf16, #tpu.memory_space<vmem>>, vector<1x8x8xbf16>
      %257 = vector.shape_cast %256 : vector<1x8x8xbf16> to vector<8x8xbf16>
      %258 = vector.shape_cast %255 : vector<8x8xbf16> to vector<1x8x8xbf16>
      tpu.vector_store %arg28[%c0_122, %c0_123, %c0_124], %258 {strides = array<i32>} : memref<4x8x8xbf16, #tpu.memory_space<vmem>>, vector<1x8x8xbf16>,
      %259 = vector.extract_strided_slice %253 {offsets = [0, 32], sizes = [8, 8], strides = [1, 1]} : vector<8x64xf32> to vector<8x8xf32>
      %260 = arith.truncf %259 : vector<8x8xf32> to vector<8x8xbf16>
      %c0_125 = arith.constant 0 : index
      %c0_126 = arith.constant 0 : index
      %c0_127 = arith.constant 0 : index
      %261 = vector.load %arg29[%c0_125, %c0_126, %c0_127] : memref<4x8x8xbf16, #tpu.memory_space<vmem>>, vector<1x8x8xbf16>
      %262 = vector.shape_cast %261 : vector<1x8x8xbf16> to vector<8x8xbf16>
      %263 = vector.shape_cast %260 : vector<8x8xbf16> to vector<1x8x8xbf16>
      tpu.vector_store %arg29[%c0_125, %c0_126, %c0_127], %263 {strides = array<i32>} : memref<4x8x8xbf16, #tpu.memory_space<vmem>>, vector<1x8x8xbf16>,
      %264 = vector.extract_strided_slice %253 {offsets = [0, 8], sizes = [8, 8], strides = [1, 1]} : vector<8x64xf32> to vector<8x8xf32>
      %265 = arith.truncf %264 : vector<8x8xf32> to vector<8x8xbf16>
      %c1_128 = arith.constant 1 : index
      %c0_129 = arith.constant 0 : index
      %c0_130 = arith.constant 0 : index
      %266 = vector.load %arg28[%c1_128, %c0_129, %c0_130] : memref<4x8x8xbf16, #tpu.memory_space<vmem>>, vector<1x8x8xbf16>
      %267 = vector.shape_cast %266 : vector<1x8x8xbf16> to vector<8x8xbf16>
      %268 = vector.shape_cast %265 : vector<8x8xbf16> to vector<1x8x8xbf16>
      tpu.vector_store %arg28[%c1_128, %c0_129, %c0_130], %268 {strides = array<i32>} : memref<4x8x8xbf16, #tpu.memory_space<vmem>>, vector<1x8x8xbf16>,
      %269 = vector.extract_strided_slice %253 {offsets = [0, 40], sizes = [8, 8], strides = [1, 1]} : vector<8x64xf32> to vector<8x8xf32>
      %270 = arith.truncf %269 : vector<8x8xf32> to vector<8x8xbf16>
      %c1_131 = arith.constant 1 : index
      %c0_132 = arith.constant 0 : index
      %c0_133 = arith.constant 0 : index
      %271 = vector.load %arg29[%c1_131, %c0_132, %c0_133] : memref<4x8x8xbf16, #tpu.memory_space<vmem>>, vector<1x8x8xbf16>
      %272 = vector.shape_cast %271 : vector<1x8x8xbf16> to vector<8x8xbf16>
      %273 = vector.shape_cast %270 : vector<8x8xbf16> to vector<1x8x8xbf16>
      tpu.vector_store %arg29[%c1_131, %c0_132, %c0_133], %273 {strides = array<i32>} : memref<4x8x8xbf16, #tpu.memory_space<vmem>>, vector<1x8x8xbf16>,
      %274 = vector.extract_strided_slice %253 {offsets = [0, 16], sizes = [8, 8], strides = [1, 1]} : vector<8x64xf32> to vector<8x8xf32>
      %275 = arith.truncf %274 : vector<8x8xf32> to vector<8x8xbf16>
      %c2_134 = arith.constant 2 : index
      %c0_135 = arith.constant 0 : index
      %c0_136 = arith.constant 0 : index
      %276 = vector.load %arg28[%c2_134, %c0_135, %c0_136] : memref<4x8x8xbf16, #tpu.memory_space<vmem>>, vector<1x8x8xbf16>
      %277 = vector.shape_cast %276 : vector<1x8x8xbf16> to vector<8x8xbf16>
      %278 = vector.shape_cast %275 : vector<8x8xbf16> to vector<1x8x8xbf16>
      tpu.vector_store %arg28[%c2_134, %c0_135, %c0_136], %278 {strides = array<i32>} : memref<4x8x8xbf16, #tpu.memory_space<vmem>>, vector<1x8x8xbf16>,
      %279 = vector.extract_strided_slice %253 {offsets = [0, 48], sizes = [8, 8], strides = [1, 1]} : vector<8x64xf32> to vector<8x8xf32>
      %280 = arith.truncf %279 : vector<8x8xf32> to vector<8x8xbf16>
      %c2_137 = arith.constant 2 : index
      %c0_138 = arith.constant 0 : index
      %c0_139 = arith.constant 0 : index
      %281 = vector.load %arg29[%c2_137, %c0_138, %c0_139] : memref<4x8x8xbf16, #tpu.memory_space<vmem>>, vector<1x8x8xbf16>
      %282 = vector.shape_cast %281 : vector<1x8x8xbf16> to vector<8x8xbf16>
      %283 = vector.shape_cast %280 : vector<8x8xbf16> to vector<1x8x8xbf16>
      tpu.vector_store %arg29[%c2_137, %c0_138, %c0_139], %283 {strides = array<i32>} : memref<4x8x8xbf16, #tpu.memory_space<vmem>>, vector<1x8x8xbf16>,
      %284 = vector.extract_strided_slice %253 {offsets = [0, 24], sizes = [8, 8], strides = [1, 1]} : vector<8x64xf32> to vector<8x8xf32>
      %285 = arith.truncf %284 : vector<8x8xf32> to vector<8x8xbf16>
      %c3_140 = arith.constant 3 : index
      %c0_141 = arith.constant 0 : index
      %c0_142 = arith.constant 0 : index
      %286 = vector.load %arg28[%c3_140, %c0_141, %c0_142] : memref<4x8x8xbf16, #tpu.memory_space<vmem>>, vector<1x8x8xbf16>
      %287 = vector.shape_cast %286 : vector<1x8x8xbf16> to vector<8x8xbf16>
      %288 = vector.shape_cast %285 : vector<8x8xbf16> to vector<1x8x8xbf16>
      tpu.vector_store %arg28[%c3_140, %c0_141, %c0_142], %288 {strides = array<i32>} : memref<4x8x8xbf16, #tpu.memory_space<vmem>>, vector<1x8x8xbf16>,
      %289 = vector.extract_strided_slice %253 {offsets = [0, 56], sizes = [8, 8], strides = [1, 1]} : vector<8x64xf32> to vector<8x8xf32>
      %290 = arith.truncf %289 : vector<8x8xf32> to vector<8x8xbf16>
      %c3_143 = arith.constant 3 : index
      %c0_144 = arith.constant 0 : index
      %c0_145 = arith.constant 0 : index
      %291 = vector.load %arg29[%c3_143, %c0_144, %c0_145] : memref<4x8x8xbf16, #tpu.memory_space<vmem>>, vector<1x8x8xbf16>
      %292 = vector.shape_cast %291 : vector<1x8x8xbf16> to vector<8x8xbf16>
      %293 = vector.shape_cast %290 : vector<8x8xbf16> to vector<1x8x8xbf16>
      tpu.vector_store %arg29[%c3_143, %c0_144, %c0_145], %293 {strides = array<i32>} : memref<4x8x8xbf16, #tpu.memory_space<vmem>>, vector<1x8x8xbf16>,
    } else {
    }
    %c0 = arith.constant 0 : index
    %c0_1 = arith.constant 0 : index
    %c0_2 = arith.constant 0 : index
    %3 = vector.load %arg2[%c0, %c0_1, %c0_2] : memref<1x16x32xf32, #tpu.memory_space<vmem>>, vector<1x16x32xf32>
    %4 = vector.shape_cast %3 : vector<1x16x32xf32> to vector<16x32xf32>
    %c16_i32 = arith.constant 16 : i32
    %5 = arith.muli %arg1, %c16_i32 : i32
    %6 = tpu.assume_multiple %5, 16 : i32
    %c0_3 = arith.constant 0 : index
    %c0_4 = arith.constant 0 : index
    %7 = vector.load %arg9[%c0_3, %c0_4] : memref<1x32xf32, #tpu.memory_space<vmem>>, vector<1x32xf32>
    %c0_5 = arith.constant 0 : index
    %c0_6 = arith.constant 0 : index
    %8 = vector.load %arg10[%c0_5, %c0_6] : memref<1x32xf32, #tpu.memory_space<vmem>>, vector<1x32xf32>
    %cst = arith.constant dense<0.000000e+00> : vector<16xf32>
    %9 = vector.multi_reduction <add>, %4, %cst [1] : vector<16x32xf32> to vector<16xf32>
    %10 = vector.shape_cast %9 : vector<16xf32> to vector<16x1xf32>
    %cst_7 = arith.constant 3.200000e+01 : f32
    %11 = vector.broadcast %cst_7 : f32 to vector<16x1xf32>
    %12 = arith.divf %10, %11 : vector<16x1xf32>
    %13 = vector.broadcast %12 : vector<16x1xf32> to vector<16x32xf32>
    %14 = arith.subf %4, %13 : vector<16x32xf32>
    %15 = arith.mulf %14, %14 : vector<16x32xf32>
    %cst_8 = arith.constant dense<0.000000e+00> : vector<16xf32>
    %16 = vector.multi_reduction <add>, %15, %cst_8 [1] : vector<16x32xf32> to vector<16xf32>
    %17 = vector.shape_cast %16 : vector<16xf32> to vector<16x1xf32>
    %cst_9 = arith.constant 3.200000e+01 : f32
    %18 = vector.broadcast %cst_9 : f32 to vector<16x1xf32>
    %19 = arith.divf %17, %18 : vector<16x1xf32>
    %20 = vector.broadcast %12 : vector<16x1xf32> to vector<16x32xf32>
    %21 = arith.subf %4, %20 : vector<16x32xf32>
    %cst_10 = arith.constant 9.99999993E-9 : f32
    %22 = vector.broadcast %cst_10 : f32 to vector<16x1xf32>
    %23 = arith.addf %19, %22 : vector<16x1xf32>
    %24 = math.rsqrt %23 : vector<16x1xf32>
    %25 = vector.broadcast %24 : vector<16x1xf32> to vector<16x32xf32>
    %26 = arith.mulf %21, %25 : vector<16x32xf32>
    %27 = vector.broadcast %7 : vector<1x32xf32> to vector<16x32xf32>
    %28 = arith.mulf %26, %27 : vector<16x32xf32>
    %29 = vector.broadcast %8 : vector<1x32xf32> to vector<16x32xf32>
    %30 = arith.addf %28, %29 : vector<16x32xf32>
    %31 = arith.truncf %30 : vector<16x32xf32> to vector<16x32xbf16>
    %c0_11 = arith.constant 0 : index
    %c0_12 = arith.constant 0 : index
    %32 = vector.load %arg5[%c0_11, %c0_12] : memref<32x96xbf16, #tpu.memory_space<vmem>>, vector<32x96xbf16>
    %cst_13 = arith.constant dense<0.000000e+00> : vector<16x96xf32>
    %33 = tpu.matmul %31, %32, %cst_13 {dimension_numbers = #tpu.dot_dimension_numbers<[1], [0], [0], [1], [0, 0, 1, 1], [], []>} : vector<16x32xbf16>, vector<32x96xbf16>, vector<16x96xf32> -> vector<16x96xf32>
    %c0_14 = arith.constant 0 : index
    %c0_15 = arith.constant 0 : index
    %34 = vector.load %arg6[%c0_14, %c0_15] : memref<1x96xf32, #tpu.memory_space<vmem>>, vector<1x96xf32>
    %35 = vector.broadcast %34 : vector<1x96xf32> to vector<16x96xf32>
    %36 = arith.addf %33, %35 : vector<16x96xf32>
    %37 = vector.extract_strided_slice %36 {offsets = [0, 32], sizes = [16, 8], strides = [1, 1]} : vector<16x96xf32> to vector<16x8xf32>
    %38 = arith.truncf %37 : vector<16x8xf32> to vector<16x8xbf16>
    %c0_16 = arith.constant 0 : index
    %39 = arith.index_cast %6 : i32 to index
    %c0_17 = arith.constant 0 : index
    %40 = vector.load %arg26[%c0_16, %39, %c0_17] : memref<4x32x8xbf16, #tpu.memory_space<vmem>>, vector<1x16x8xbf16>
    %41 = vector.shape_cast %40 : vector<1x16x8xbf16> to vector<16x8xbf16>
    %42 = vector.shape_cast %38 : vector<16x8xbf16> to vector<1x16x8xbf16>
    tpu.vector_store %arg26[%c0_16, %39, %c0_17], %42 {strides = array<i32>} : memref<4x32x8xbf16, #tpu.memory_space<vmem>>, vector<1x16x8xbf16>,
    %43 = vector.extract_strided_slice %36 {offsets = [0, 64], sizes = [16, 8], strides = [1, 1]} : vector<16x96xf32> to vector<16x8xf32>
    %44 = arith.truncf %43 : vector<16x8xf32> to vector<16x8xbf16>
    %c0_18 = arith.constant 0 : index
    %45 = arith.index_cast %6 : i32 to index
    %c0_19 = arith.constant 0 : index
    %46 = vector.load %arg27[%c0_18, %45, %c0_19] : memref<4x32x8xbf16, #tpu.memory_space<vmem>>, vector<1x16x8xbf16>
    %47 = vector.shape_cast %46 : vector<1x16x8xbf16> to vector<16x8xbf16>
    %48 = vector.shape_cast %44 : vector<16x8xbf16> to vector<1x16x8xbf16>
    tpu.vector_store %arg27[%c0_18, %45, %c0_19], %48 {strides = array<i32>} : memref<4x32x8xbf16, #tpu.memory_space<vmem>>, vector<1x16x8xbf16>,
    %49 = vector.extract_strided_slice %36 {offsets = [0, 40], sizes = [16, 8], strides = [1, 1]} : vector<16x96xf32> to vector<16x8xf32>
    %50 = arith.truncf %49 : vector<16x8xf32> to vector<16x8xbf16>
    %c1 = arith.constant 1 : index
    %51 = arith.index_cast %6 : i32 to index
    %c0_20 = arith.constant 0 : index
    %52 = vector.load %arg26[%c1, %51, %c0_20] : memref<4x32x8xbf16, #tpu.memory_space<vmem>>, vector<1x16x8xbf16>
    %53 = vector.shape_cast %52 : vector<1x16x8xbf16> to vector<16x8xbf16>
    %54 = vector.shape_cast %50 : vector<16x8xbf16> to vector<1x16x8xbf16>
    tpu.vector_store %arg26[%c1, %51, %c0_20], %54 {strides = array<i32>} : memref<4x32x8xbf16, #tpu.memory_space<vmem>>, vector<1x16x8xbf16>,
    %55 = vector.extract_strided_slice %36 {offsets = [0, 72], sizes = [16, 8], strides = [1, 1]} : vector<16x96xf32> to vector<16x8xf32>
    %56 = arith.truncf %55 : vector<16x8xf32> to vector<16x8xbf16>
    %c1_21 = arith.constant 1 : index
    %57 = arith.index_cast %6 : i32 to index
    %c0_22 = arith.constant 0 : index
    %58 = vector.load %arg27[%c1_21, %57, %c0_22] : memref<4x32x8xbf16, #tpu.memory_space<vmem>>, vector<1x16x8xbf16>
    %59 = vector.shape_cast %58 : vector<1x16x8xbf16> to vector<16x8xbf16>
    %60 = vector.shape_cast %56 : vector<16x8xbf16> to vector<1x16x8xbf16>
    tpu.vector_store %arg27[%c1_21, %57, %c0_22], %60 {strides = array<i32>} : memref<4x32x8xbf16, #tpu.memory_space<vmem>>, vector<1x16x8xbf16>,
    %61 = vector.extract_strided_slice %36 {offsets = [0, 48], sizes = [16, 8], strides = [1, 1]} : vector<16x96xf32> to vector<16x8xf32>
    %62 = arith.truncf %61 : vector<16x8xf32> to vector<16x8xbf16>
    %c2 = arith.constant 2 : index
    %63 = arith.index_cast %6 : i32 to index
    %c0_23 = arith.constant 0 : index
    %64 = vector.load %arg26[%c2, %63, %c0_23] : memref<4x32x8xbf16, #tpu.memory_space<vmem>>, vector<1x16x8xbf16>
    %65 = vector.shape_cast %64 : vector<1x16x8xbf16> to vector<16x8xbf16>
    %66 = vector.shape_cast %62 : vector<16x8xbf16> to vector<1x16x8xbf16>
    tpu.vector_store %arg26[%c2, %63, %c0_23], %66 {strides = array<i32>} : memref<4x32x8xbf16, #tpu.memory_space<vmem>>, vector<1x16x8xbf16>,
    %67 = vector.extract_strided_slice %36 {offsets = [0, 80], sizes = [16, 8], strides = [1, 1]} : vector<16x96xf32> to vector<16x8xf32>
    %68 = arith.truncf %67 : vector<16x8xf32> to vector<16x8xbf16>
    %c2_24 = arith.constant 2 : index
    %69 = arith.index_cast %6 : i32 to index
    %c0_25 = arith.constant 0 : index
    %70 = vector.load %arg27[%c2_24, %69, %c0_25] : memref<4x32x8xbf16, #tpu.memory_space<vmem>>, vector<1x16x8xbf16>
    %71 = vector.shape_cast %70 : vector<1x16x8xbf16> to vector<16x8xbf16>
    %72 = vector.shape_cast %68 : vector<16x8xbf16> to vector<1x16x8xbf16>
    tpu.vector_store %arg27[%c2_24, %69, %c0_25], %72 {strides = array<i32>} : memref<4x32x8xbf16, #tpu.memory_space<vmem>>, vector<1x16x8xbf16>,
    %73 = vector.extract_strided_slice %36 {offsets = [0, 56], sizes = [16, 8], strides = [1, 1]} : vector<16x96xf32> to vector<16x8xf32>
    %74 = arith.truncf %73 : vector<16x8xf32> to vector<16x8xbf16>
    %c3 = arith.constant 3 : index
    %75 = arith.index_cast %6 : i32 to index
    %c0_26 = arith.constant 0 : index
    %76 = vector.load %arg26[%c3, %75, %c0_26] : memref<4x32x8xbf16, #tpu.memory_space<vmem>>, vector<1x16x8xbf16>
    %77 = vector.shape_cast %76 : vector<1x16x8xbf16> to vector<16x8xbf16>
    %78 = vector.shape_cast %74 : vector<16x8xbf16> to vector<1x16x8xbf16>
    tpu.vector_store %arg26[%c3, %75, %c0_26], %78 {strides = array<i32>} : memref<4x32x8xbf16, #tpu.memory_space<vmem>>, vector<1x16x8xbf16>,
    %79 = vector.extract_strided_slice %36 {offsets = [0, 88], sizes = [16, 8], strides = [1, 1]} : vector<16x96xf32> to vector<16x8xf32>
    %80 = arith.truncf %79 : vector<16x8xf32> to vector<16x8xbf16>
    %c3_27 = arith.constant 3 : index
    %81 = arith.index_cast %6 : i32 to index
    %c0_28 = arith.constant 0 : index
    %82 = vector.load %arg27[%c3_27, %81, %c0_28] : memref<4x32x8xbf16, #tpu.memory_space<vmem>>, vector<1x16x8xbf16>
    %83 = vector.shape_cast %82 : vector<1x16x8xbf16> to vector<16x8xbf16>
    %84 = vector.shape_cast %80 : vector<16x8xbf16> to vector<1x16x8xbf16>
    tpu.vector_store %arg27[%c3_27, %81, %c0_28], %84 {strides = array<i32>} : memref<4x32x8xbf16, #tpu.memory_space<vmem>>, vector<1x16x8xbf16>,
    %85 = vector.extract_strided_slice %36 {offsets = [0, 0], sizes = [16, 32], strides = [1, 1]} : vector<16x96xf32> to vector<16x32xf32>
    %86 = vector.extract_strided_slice %85 {offsets = [0, 0], sizes = [16, 8], strides = [1, 1]} : vector<16x32xf32> to vector<16x8xf32>
    %87 = vector.extract_strided_slice %85 {offsets = [0, 8], sizes = [16, 8], strides = [1, 1]} : vector<16x32xf32> to vector<16x8xf32>
    %88 = vector.extract_strided_slice %85 {offsets = [0, 16], sizes = [16, 8], strides = [1, 1]} : vector<16x32xf32> to vector<16x8xf32>
    %89 = vector.extract_strided_slice %85 {offsets = [0, 24], sizes = [16, 8], strides = [1, 1]} : vector<16x32xf32> to vector<16x8xf32>
    %90 = vector.shape_cast %86 : vector<16x8xf32> to vector<1x16x8xf32>
    %91 = vector.shape_cast %87 : vector<16x8xf32> to vector<1x16x8xf32>
    %92 = vector.shape_cast %88 : vector<16x8xf32> to vector<1x16x8xf32>
    %93 = vector.shape_cast %89 : vector<16x8xf32> to vector<1x16x8xf32>
    %94 = tpu.concatenate %90, %91, %92, %93 in 0 : vector<1x16x8xf32>, vector<1x16x8xf32>, vector<1x16x8xf32>, vector<1x16x8xf32> -> vector<4x16x8xf32>
    %95 = arith.truncf %94 : vector<4x16x8xf32> to vector<4x16x8xbf16>
    %c0_29 = arith.constant 0 : index
    %c0_30 = arith.constant 0 : index
    %c0_31 = arith.constant 0 : index
    %96 = vector.load %arg26[%c0_29, %c0_30, %c0_31] : memref<4x32x8xbf16, #tpu.memory_space<vmem>>, vector<4x32x8xbf16>
    "tpu.trace_start"() <{level = 10 : i32, message = "nqd,nkd->nqk"}> : () -> ()
    %cst_32 = arith.constant dense<0.000000e+00> : vector<4x16x32xf32>
    %97 = tpu.matmul %95, %96, %cst_32 {dimension_numbers = #tpu.dot_dimension_numbers<[2], [2], [1], [1], [0, 0, 0, 1, 1, 1], [0], [0]>} : vector<4x16x8xbf16>, vector<4x32x8xbf16>, vector<4x16x32xf32> -> vector<4x16x32xf32>
    "tpu.trace_stop"() : () -> ()
    %cst_33 = arith.constant 0.353553385 : f32
    %98 = vector.broadcast %cst_33 : f32 to vector<4x16x32xf32>
    %99 = arith.mulf %97, %98 : vector<4x16x32xf32>
    %100 = tpu.iota {dimensions = array<i32: 0>} : vector<16x32xi32>
    %101 = vector.broadcast %5 : i32 to vector<16x32xi32>
    %102 = arith.addi %101, %100 : vector<16x32xi32>
    %103 = tpu.iota {dimensions = array<i32: 1>} : vector<16x32xi32>
    %104 = arith.cmpi sge, %102, %103 : vector<16x32xi32>
    %105 = vector.shape_cast %104 : vector<16x32xi1> to vector<1x16x32xi1>
    %cst_34 = arith.constant -1.000000e+09 : f32
    %106 = vector.shape_cast %105 : vector<1x16x32xi1> to vector<1x16x32xi1>
    %107 = vector.broadcast %106 : vector<1x16x32xi1> to vector<4x16x32xi1>
    %108 = vector.broadcast %cst_34 : f32 to vector<4x16x32xf32>
    %109 = arith.select %107, %99, %108 : vector<4x16x32xi1>, vector<4x16x32xf32>
    %cst_35 = arith.constant dense<0xFF800000> : vector<4x16xf32>
    %110 = vector.multi_reduction <maximumf>, %109, %cst_35 [2] : vector<4x16x32xf32> to vector<4x16xf32>
    %111 = vector.shape_cast %110 : vector<4x16xf32> to vector<4x16x1xf32>
    %112 = vector.broadcast %111 : vector<4x16x1xf32> to vector<4x16x32xf32>
    %113 = arith.subf %109, %112 : vector<4x16x32xf32>
    %114 = math.exp %113 : vector<4x16x32xf32>
    %cst_36 = arith.constant dense<0.000000e+00> : vector<4x16xf32>
    %115 = vector.multi_reduction <add>, %114, %cst_36 [2] : vector<4x16x32xf32> to vector<4x16xf32>
    %116 = vector.shape_cast %115 : vector<4x16xf32> to vector<4x16x1xf32>
    %117 = tpu.reciprocal %116 {approx = true} : vector<4x16x1xf32> -> vector<4x16x1xf32>
    %118 = vector.broadcast %117 : vector<4x16x1xf32> to vector<4x16x32xf32>
    %119 = arith.mulf %114, %118 : vector<4x16x32xf32>
    %120 = arith.truncf %119 : vector<4x16x32xf32> to vector<4x16x32xbf16>
    %c0_37 = arith.constant 0 : index
    %c0_38 = arith.constant 0 : index
    %c0_39 = arith.constant 0 : index
    %121 = vector.load %arg27[%c0_37, %c0_38, %c0_39] : memref<4x32x8xbf16, #tpu.memory_space<vmem>>, vector<4x32x8xbf16>
    "tpu.trace_start"() <{level = 10 : i32, message = "nqk,nkd->nqd"}> : () -> ()
    %cst_40 = arith.constant dense<0.000000e+00> : vector<4x16x8xf32>
    %122 = tpu.matmul %120, %121, %cst_40 {dimension_numbers = #tpu.dot_dimension_numbers<[2], [1], [1], [2], [0, 0, 0, 1, 1, 2], [0], [0]>} : vector<4x16x32xbf16>, vector<4x32x8xbf16>, vector<4x16x8xf32> -> vector<4x16x8xf32>
    "tpu.trace_stop"() : () -> ()
    %123 = arith.truncf %122 : vector<4x16x8xf32> to vector<4x16x8xbf16>
    %c0_41 = arith.constant 0 : index
    %c0_42 = arith.constant 0 : index
    %c0_43 = arith.constant 0 : index
    %124 = vector.load %arg7[%c0_41, %c0_42, %c0_43] : memref<4x8x32xbf16, #tpu.memory_space<vmem>>, vector<4x8x32xbf16>
    "tpu.trace_start"() <{level = 10 : i32, message = "nqd,ndh->nqh"}> : () -> ()
    %cst_44 = arith.constant dense<0.000000e+00> : vector<4x16x32xf32>
    %125 = tpu.matmul %123, %124, %cst_44 {dimension_numbers = #tpu.dot_dimension_numbers<[2], [1], [1], [2], [0, 0, 0, 1, 1, 2], [0], [0]>} : vector<4x16x8xbf16>, vector<4x8x32xbf16>, vector<4x16x32xf32> -> vector<4x16x32xf32>
    "tpu.trace_stop"() : () -> ()
    %cst_45 = arith.constant dense<0.000000e+00> : vector<16x32xf32>
    %126 = vector.multi_reduction <add>, %125, %cst_45 [0] : vector<4x16x32xf32> to vector<16x32xf32>
    %c0_46 = arith.constant 0 : index
    %c0_47 = arith.constant 0 : index
    %127 = vector.load %arg8[%c0_46, %c0_47] : memref<1x32xf32, #tpu.memory_space<vmem>>, vector<1x32xf32>
    %128 = vector.broadcast %127 : vector<1x32xf32> to vector<16x32xf32>
    %129 = arith.addf %126, %128 : vector<16x32xf32>
    %130 = arith.addf %4, %129 : vector<16x32xf32>
    %c0_48 = arith.constant 0 : index
    %c0_49 = arith.constant 0 : index
    %131 = vector.load %arg15[%c0_48, %c0_49] : memref<1x32xf32, #tpu.memory_space<vmem>>, vector<1x32xf32>
    %c0_50 = arith.constant 0 : index
    %c0_51 = arith.constant 0 : index
    %132 = vector.load %arg16[%c0_50, %c0_51] : memref<1x32xf32, #tpu.memory_space<vmem>>, vector<1x32xf32>
    %cst_52 = arith.constant dense<0.000000e+00> : vector<16xf32>
    %133 = vector.multi_reduction <add>, %130, %cst_52 [1] : vector<16x32xf32> to vector<16xf32>
    %134 = vector.shape_cast %133 : vector<16xf32> to vector<16x1xf32>
    %cst_53 = arith.constant 3.200000e+01 : f32
    %135 = vector.broadcast %cst_53 : f32 to vector<16x1xf32>
    %136 = arith.divf %134, %135 : vector<16x1xf32>
    %137 = vector.broadcast %136 : vector<16x1xf32> to vector<16x32xf32>
    %138 = arith.subf %130, %137 : vector<16x32xf32>
    %139 = arith.mulf %138, %138 : vector<16x32xf32>
    %cst_54 = arith.constant dense<0.000000e+00> : vector<16xf32>
    %140 = vector.multi_reduction <add>, %139, %cst_54 [1] : vector<16x32xf32> to vector<16xf32>
    %141 = vector.shape_cast %140 : vector<16xf32> to vector<16x1xf32>
    %cst_55 = arith.constant 3.200000e+01 : f32
    %142 = vector.broadcast %cst_55 : f32 to vector<16x1xf32>
    %143 = arith.divf %141, %142 : vector<16x1xf32>
    %144 = vector.broadcast %136 : vector<16x1xf32> to vector<16x32xf32>
    %145 = arith.subf %130, %144 : vector<16x32xf32>
    %cst_56 = arith.constant 9.99999993E-9 : f32
    %146 = vector.broadcast %cst_56 : f32 to vector<16x1xf32>
    %147 = arith.addf %143, %146 : vector<16x1xf32>
    %148 = math.rsqrt %147 : vector<16x1xf32>
    %149 = vector.broadcast %148 : vector<16x1xf32> to vector<16x32xf32>
    %150 = arith.mulf %145, %149 : vector<16x32xf32>
    %151 = vector.broadcast %131 : vector<1x32xf32> to vector<16x32xf32>
    %152 = arith.mulf %150, %151 : vector<16x32xf32>
    %153 = vector.broadcast %132 : vector<1x32xf32> to vector<16x32xf32>
    %154 = arith.addf %152, %153 : vector<16x32xf32>
    %155 = arith.truncf %154 : vector<16x32xf32> to vector<16x32xbf16>
    %c0_57 = arith.constant 0 : index
    %c0_58 = arith.constant 0 : index
    %156 = vector.load %arg11[%c0_57, %c0_58] : memref<32x32xbf16, #tpu.memory_space<vmem>>, vector<32x32xbf16>
    %cst_59 = arith.constant dense<0.000000e+00> : vector<16x32xf32>
    %157 = tpu.matmul %155, %156, %cst_59 {dimension_numbers = #tpu.dot_dimension_numbers<[1], [0], [0], [1], [0, 0, 1, 1], [], []>} : vector<16x32xbf16>, vector<32x32xbf16>, vector<16x32xf32> -> vector<16x32xf32>
    %c0_60 = arith.constant 0 : index
    %c0_61 = arith.constant 0 : index
    %158 = vector.load %arg12[%c0_60, %c0_61] : memref<1x32xf32, #tpu.memory_space<vmem>>, vector<1x32xf32>
    %159 = vector.broadcast %158 : vector<1x32xf32> to vector<16x32xf32>
    %160 = arith.addf %157, %159 : vector<16x32xf32>
    %161 = vector.extract_strided_slice %160 {offsets = [0, 0], sizes = [16, 8], strides = [1, 1]} : vector<16x32xf32> to vector<16x8xf32>
    %162 = vector.extract_strided_slice %160 {offsets = [0, 8], sizes = [16, 8], strides = [1, 1]} : vector<16x32xf32> to vector<16x8xf32>
    %163 = vector.extract_strided_slice %160 {offsets = [0, 16], sizes = [16, 8], strides = [1, 1]} : vector<16x32xf32> to vector<16x8xf32>
    %164 = vector.extract_strided_slice %160 {offsets = [0, 24], sizes = [16, 8], strides = [1, 1]} : vector<16x32xf32> to vector<16x8xf32>
    %165 = vector.shape_cast %161 : vector<16x8xf32> to vector<1x16x8xf32>
    %166 = vector.shape_cast %162 : vector<16x8xf32> to vector<1x16x8xf32>
    %167 = vector.shape_cast %163 : vector<16x8xf32> to vector<1x16x8xf32>
    %168 = vector.shape_cast %164 : vector<16x8xf32> to vector<1x16x8xf32>
    %169 = tpu.concatenate %165, %166, %167, %168 in 0 : vector<1x16x8xf32>, vector<1x16x8xf32>, vector<1x16x8xf32>, vector<1x16x8xf32> -> vector<4x16x8xf32>
    %170 = arith.truncf %169 : vector<4x16x8xf32> to vector<4x16x8xbf16>
    %c0_62 = arith.constant 0 : index
    %c0_63 = arith.constant 0 : index
    %c0_64 = arith.constant 0 : index
    %171 = vector.load %arg28[%c0_62, %c0_63, %c0_64] : memref<4x8x8xbf16, #tpu.memory_space<vmem>>, vector<4x8x8xbf16>
    "tpu.trace_start"() <{level = 10 : i32, message = "nqd,nkd->nqk"}> : () -> ()
    %cst_65 = arith.constant dense<0.000000e+00> : vector<4x16x8xf32>
    %172 = tpu.matmul %170, %171, %cst_65 {dimension_numbers = #tpu.dot_dimension_numbers<[2], [2], [1], [1], [0, 0, 0, 1, 1, 1], [0], [0]>} : vector<4x16x8xbf16>, vector<4x8x8xbf16>, vector<4x16x8xf32> -> vector<4x16x8xf32>
    "tpu.trace_stop"() : () -> ()
    %cst_66 = arith.constant 0.353553385 : f32
    %173 = vector.broadcast %cst_66 : f32 to vector<4x16x8xf32>
    %174 = arith.mulf %172, %173 : vector<4x16x8xf32>
    %c0_67 = arith.constant 0 : index
    %c0_68 = arith.constant 0 : index
    %c0_69 = arith.constant 0 : index
    %175 = vector.load %arg4[%c0_67, %c0_68, %c0_69] : memref<1x1x8xf32, #tpu.memory_space<vmem>>, vector<1x1x8xf32>
    %176 = vector.shape_cast %175 : vector<1x1x8xf32> to vector<1x8xf32>
    %177 = vector.shape_cast %176 : vector<1x8xf32> to vector<1x1x8xf32>
    %178 = vector.broadcast %177 : vector<1x1x8xf32> to vector<4x16x8xf32>
    %179 = arith.addf %174, %178 : vector<4x16x8xf32>
    %cst_70 = arith.constant dense<0xFF800000> : vector<4x16xf32>
    %180 = vector.multi_reduction <maximumf>, %179, %cst_70 [2] : vector<4x16x8xf32> to vector<4x16xf32>
    %181 = vector.shape_cast %180 : vector<4x16xf32> to vector<4x16x1xf32>
    %182 = vector.broadcast %181 : vector<4x16x1xf32> to vector<4x16x8xf32>
    %183 = arith.subf %179, %182 : vector<4x16x8xf32>
    %184 = math.exp %183 : vector<4x16x8xf32>
    %cst_71 = arith.constant dense<0.000000e+00> : vector<4x16xf32>
    %185 = vector.multi_reduction <add>, %184, %cst_71 [2] : vector<4x16x8xf32> to vector<4x16xf32>
    %186 = vector.shape_cast %185 : vector<4x16xf32> to vector<4x16x1xf32>
    %187 = tpu.reciprocal %186 {approx = true} : vector<4x16x1xf32> -> vector<4x16x1xf32>
    %188 = vector.broadcast %187 : vector<4x16x1xf32> to vector<4x16x8xf32>
    %189 = arith.mulf %184, %188 : vector<4x16x8xf32>
    %190 = arith.truncf %189 : vector<4x16x8xf32> to vector<4x16x8xbf16>
    %c0_72 = arith.constant 0 : index
    %c0_73 = arith.constant 0 : index
    %c0_74 = arith.constant 0 : index
    %191 = vector.load %arg29[%c0_72, %c0_73, %c0_74] : memref<4x8x8xbf16, #tpu.memory_space<vmem>>, vector<4x8x8xbf16>
    "tpu.trace_start"() <{level = 10 : i32, message = "nqk,nkd->nqd"}> : () -> ()
    %cst_75 = arith.constant dense<0.000000e+00> : vector<4x16x8xf32>
    %192 = tpu.matmul %190, %191, %cst_75 {dimension_numbers = #tpu.dot_dimension_numbers<[2], [1], [1], [2], [0, 0, 0, 1, 1, 2], [0], [0]>} : vector<4x16x8xbf16>, vector<4x8x8xbf16>, vector<4x16x8xf32> -> vector<4x16x8xf32>
    "tpu.trace_stop"() : () -> ()
    %193 = arith.truncf %192 : vector<4x16x8xf32> to vector<4x16x8xbf16>
    %c0_76 = arith.constant 0 : index
    %c0_77 = arith.constant 0 : index
    %c0_78 = arith.constant 0 : index
    %194 = vector.load %arg13[%c0_76, %c0_77, %c0_78] : memref<4x8x32xbf16, #tpu.memory_space<vmem>>, vector<4x8x32xbf16>
    "tpu.trace_start"() <{level = 10 : i32, message = "nqd,ndh->nqh"}> : () -> ()
    %cst_79 = arith.constant dense<0.000000e+00> : vector<4x16x32xf32>
    %195 = tpu.matmul %193, %194, %cst_79 {dimension_numbers = #tpu.dot_dimension_numbers<[2], [1], [1], [2], [0, 0, 0, 1, 1, 2], [0], [0]>} : vector<4x16x8xbf16>, vector<4x8x32xbf16>, vector<4x16x32xf32> -> vector<4x16x32xf32>
    "tpu.trace_stop"() : () -> ()
    %cst_80 = arith.constant dense<0.000000e+00> : vector<16x32xf32>
    %196 = vector.multi_reduction <add>, %195, %cst_80 [0] : vector<4x16x32xf32> to vector<16x32xf32>
    %c0_81 = arith.constant 0 : index
    %c0_82 = arith.constant 0 : index
    %197 = vector.load %arg14[%c0_81, %c0_82] : memref<1x32xf32, #tpu.memory_space<vmem>>, vector<1x32xf32>
    %198 = vector.broadcast %197 : vector<1x32xf32> to vector<16x32xf32>
    %199 = arith.addf %196, %198 : vector<16x32xf32>
    %200 = arith.addf %130, %199 : vector<16x32xf32>
    %c0_83 = arith.constant 0 : index
    %c0_84 = arith.constant 0 : index
    %201 = vector.load %arg21[%c0_83, %c0_84] : memref<1x32xf32, #tpu.memory_space<vmem>>, vector<1x32xf32>
    %c0_85 = arith.constant 0 : index
    %c0_86 = arith.constant 0 : index
    %202 = vector.load %arg22[%c0_85, %c0_86] : memref<1x32xf32, #tpu.memory_space<vmem>>, vector<1x32xf32>
    %cst_87 = arith.constant dense<0.000000e+00> : vector<16xf32>
    %203 = vector.multi_reduction <add>, %200, %cst_87 [1] : vector<16x32xf32> to vector<16xf32>
    %204 = vector.shape_cast %203 : vector<16xf32> to vector<16x1xf32>
    %cst_88 = arith.constant 3.200000e+01 : f32
    %205 = vector.broadcast %cst_88 : f32 to vector<16x1xf32>
    %206 = arith.divf %204, %205 : vector<16x1xf32>
    %207 = vector.broadcast %206 : vector<16x1xf32> to vector<16x32xf32>
    %208 = arith.subf %200, %207 : vector<16x32xf32>
    %209 = arith.mulf %208, %208 : vector<16x32xf32>
    %cst_89 = arith.constant dense<0.000000e+00> : vector<16xf32>
    %210 = vector.multi_reduction <add>, %209, %cst_89 [1] : vector<16x32xf32> to vector<16xf32>
    %211 = vector.shape_cast %210 : vector<16xf32> to vector<16x1xf32>
    %cst_90 = arith.constant 3.200000e+01 : f32
    %212 = vector.broadcast %cst_90 : f32 to vector<16x1xf32>
    %213 = arith.divf %211, %212 : vector<16x1xf32>
    %214 = vector.broadcast %206 : vector<16x1xf32> to vector<16x32xf32>
    %215 = arith.subf %200, %214 : vector<16x32xf32>
    %cst_91 = arith.constant 9.99999993E-9 : f32
    %216 = vector.broadcast %cst_91 : f32 to vector<16x1xf32>
    %217 = arith.addf %213, %216 : vector<16x1xf32>
    %218 = math.rsqrt %217 : vector<16x1xf32>
    %219 = vector.broadcast %218 : vector<16x1xf32> to vector<16x32xf32>
    %220 = arith.mulf %215, %219 : vector<16x32xf32>
    %221 = vector.broadcast %201 : vector<1x32xf32> to vector<16x32xf32>
    %222 = arith.mulf %220, %221 : vector<16x32xf32>
    %223 = vector.broadcast %202 : vector<1x32xf32> to vector<16x32xf32>
    %224 = arith.addf %222, %223 : vector<16x32xf32>
    %225 = arith.truncf %224 : vector<16x32xf32> to vector<16x32xbf16>
    %c0_92 = arith.constant 0 : index
    %c0_93 = arith.constant 0 : index
    %226 = vector.load %arg17[%c0_92, %c0_93] : memref<32x64xbf16, #tpu.memory_space<vmem>>, vector<32x64xbf16>
    %cst_94 = arith.constant dense<0.000000e+00> : vector<16x64xf32>
    %227 = tpu.matmul %225, %226, %cst_94 {dimension_numbers = #tpu.dot_dimension_numbers<[1], [0], [0], [1], [0, 0, 1, 1], [], []>} : vector<16x32xbf16>, vector<32x64xbf16>, vector<16x64xf32> -> vector<16x64xf32>
    %c0_95 = arith.constant 0 : index
    %c0_96 = arith.constant 0 : index
    %228 = vector.load %arg18[%c0_95, %c0_96] : memref<1x64xf32, #tpu.memory_space<vmem>>, vector<1x64xf32>
    %229 = vector.broadcast %228 : vector<1x64xf32> to vector<16x64xf32>
    %230 = arith.addf %227, %229 : vector<16x64xf32>
    %cst_97 = arith.constant 0.000000e+00 : f32
    %231 = vector.broadcast %cst_97 : f32 to vector<16x64xf32>
    %232 = arith.maximumf %230, %231 : vector<16x64xf32>
    %233 = arith.truncf %232 : vector<16x64xf32> to vector<16x64xbf16>
    %c0_98 = arith.constant 0 : index
    %c0_99 = arith.constant 0 : index
    %234 = vector.load %arg19[%c0_98, %c0_99] : memref<64x32xbf16, #tpu.memory_space<vmem>>, vector<64x32xbf16>
    %cst_100 = arith.constant dense<0.000000e+00> : vector<16x32xf32>
    %235 = tpu.matmul %233, %234, %cst_100 {dimension_numbers = #tpu.dot_dimension_numbers<[1], [0], [0], [1], [0, 0, 1, 1], [], []>} : vector<16x64xbf16>, vector<64x32xbf16>, vector<16x32xf32> -> vector<16x32xf32>
    %c0_101 = arith.constant 0 : index
    %c0_102 = arith.constant 0 : index
    %236 = vector.load %arg20[%c0_101, %c0_102] : memref<1x32xf32, #tpu.memory_space<vmem>>, vector<1x32xf32>
    %237 = vector.broadcast %236 : vector<1x32xf32> to vector<16x32xf32>
    %238 = arith.addf %235, %237 : vector<16x32xf32>
    %239 = arith.addf %200, %238 : vector<16x32xf32>
    %c0_103 = arith.constant 0 : index
    %c0_104 = arith.constant 0 : index
    %c0_105 = arith.constant 0 : index
    %240 = vector.load %arg25[%c0_103, %c0_104, %c0_105] : memref<1x16x32xf32, #tpu.memory_space<vmem>>, vector<1x16x32xf32>
    %241 = vector.shape_cast %240 : vector<1x16x32xf32> to vector<16x32xf32>
    %242 = vector.shape_cast %239 : vector<16x32xf32> to vector<1x16x32xf32>
    tpu.vector_store %arg25[%c0_103, %c0_104, %c0_105], %242 {strides = array<i32>} : memref<1x16x32xf32, #tpu.memory_space<vmem>>, vector<1x16x32xf32>,
    return
  }
  func.func @transform_0(%arg0: i32, %arg1: i32) -> (i32, i32, i32) {
    %c0_i32 = arith.constant 0 : i32
    %c0_i32_0 = arith.constant 0 : i32
    return %arg0, %arg1, %c0_i32 : i32, i32, i32
  }
  func.func @transform_1(%arg0: i32, %arg1: i32) -> (i32, i32, i32) {
    %c0_i32 = arith.constant 0 : i32
    %c0_i32_0 = arith.constant 0 : i32
    %c0_i32_1 = arith.constant 0 : i32
    return %arg0, %c0_i32, %c0_i32_0 : i32, i32, i32
  }
  func.func @transform_2(%arg0: i32, %arg1: i32) -> (i32, i32, i32) {
    %c0_i32 = arith.constant 0 : i32
    %c0_i32_0 = arith.constant 0 : i32
    %c0_i32_1 = arith.constant 0 : i32
    return %arg0, %c0_i32, %c0_i32_0 : i32, i32, i32
  }
  func.func @transform_3(%arg0: i32, %arg1: i32) -> (i32, i32) {
    %c0_i32 = arith.constant 0 : i32
    %c0_i32_0 = arith.constant 0 : i32
    %c0_i32_1 = arith.constant 0 : i32
    return %c0_i32, %c0_i32_0 : i32, i32
  }
  func.func @transform_4(%arg0: i32, %arg1: i32) -> (i32, i32) {
    %c0_i32 = arith.constant 0 : i32
    %c0_i32_0 = arith.constant 0 : i32
    %c0_i32_1 = arith.constant 0 : i32
    return %c0_i32, %c0_i32_0 : i32, i32
  }
  func.func @transform_5(%arg0: i32, %arg1: i32) -> (i32, i32, i32) {
    %c0_i32 = arith.constant 0 : i32
    %c0_i32_0 = arith.constant 0 : i32
    %c0_i32_1 = arith.constant 0 : i32
    %c0_i32_2 = arith.constant 0 : i32
    return %c0_i32, %c0_i32_0, %c0_i32_1 : i32, i32, i32
  }
  func.func @transform_6(%arg0: i32, %arg1: i32) -> (i32, i32) {
    %c0_i32 = arith.constant 0 : i32
    %c0_i32_0 = arith.constant 0 : i32
    %c0_i32_1 = arith.constant 0 : i32
    return %c0_i32, %c0_i32_0 : i32, i32
  }
  func.func @transform_7(%arg0: i32, %arg1: i32) -> (i32, i32) {
    %c0_i32 = arith.constant 0 : i32
    %c0_i32_0 = arith.constant 0 : i32
    %c0_i32_1 = arith.constant 0 : i32
    return %c0_i32, %c0_i32_0 : i32, i32
  }
  func.func @transform_8(%arg0: i32, %arg1: i32) -> (i32, i32) {
    %c0_i32 = arith.constant 0 : i32
    %c0_i32_0 = arith.constant 0 : i32
    %c0_i32_1 = arith.constant 0 : i32
    return %c0_i32, %c0_i32_0 : i32, i32
  }
  func.func @transform_9(%arg0: i32, %arg1: i32) -> (i32, i32) {
    %c0_i32 = arith.constant 0 : i32
    %c0_i32_0 = arith.constant 0 : i32
    %c0_i32_1 = arith.constant 0 : i32
    return %c0_i32, %c0_i32_0 : i32, i32
  }
  func.func @transform_10(%arg0: i32, %arg1: i32) -> (i32, i32) {
    %c0_i32 = arith.constant 0 : i32
    %c0_i32_0 = arith.constant 0 : i32
    %c0_i32_1 = arith.constant 0 : i32
    return %c0_i32, %c0_i32_0 : i32, i32
  }
  func.func @transform_11(%arg0: i32, %arg1: i32) -> (i32, i32, i32) {
    %c0_i32 = arith.constant 0 : i32
    %c0_i32_0 = arith.constant 0 : i32
    %c0_i32_1 = arith.constant 0 : i32
    %c0_i32_2 = arith.constant 0 : i32
    return %c0_i32, %c0_i32_0, %c0_i32_1 : i32, i32, i32
  }
  func.func @transform_12(%arg0: i32, %arg1: i32) -> (i32, i32) {
    %c0_i32 = arith.constant 0 : i32
    %c0_i32_0 = arith.constant 0 : i32
    %c0_i32_1 = arith.constant 0 : i32
    return %c0_i32, %c0_i32_0 : i32, i32
  }
  func.func @transform_13(%arg0: i32, %arg1: i32) -> (i32, i32) {
    %c0_i32 = arith.constant 0 : i32
    %c0_i32_0 = arith.constant 0 : i32
    %c0_i32_1 = arith.constant 0 : i32
    return %c0_i32, %c0_i32_0 : i32, i32
  }
  func.func @transform_14(%arg0: i32, %arg1: i32) -> (i32, i32) {
    %c0_i32 = arith.constant 0 : i32
    %c0_i32_0 = arith.constant 0 : i32
    %c0_i32_1 = arith.constant 0 : i32
    return %c0_i32, %c0_i32_0 : i32, i32
  }
  func.func @transform_15(%arg0: i32, %arg1: i32) -> (i32, i32) {
    %c0_i32 = arith.constant 0 : i32
    %c0_i32_0 = arith.constant 0 : i32
    %c0_i32_1 = arith.constant 0 : i32
    return %c0_i32, %c0_i32_0 : i32, i32
  }
  func.func @transform_16(%arg0: i32, %arg1: i32) -> (i32, i32) {
    %c0_i32 = arith.constant 0 : i32
    %c0_i32_0 = arith.constant 0 : i32
    %c0_i32_1 = arith.constant 0 : i32
    return %c0_i32, %c0_i32_0 : i32, i32
  }
  func.func @transform_17(%arg0: i32, %arg1: i32) -> (i32, i32) {
    %c0_i32 = arith.constant 0 : i32
    %c0_i32_0 = arith.constant 0 : i32
    %c0_i32_1 = arith.constant 0 : i32
    return %c0_i32, %c0_i32_0 : i32, i32
  }
  func.func @transform_18(%arg0: i32, %arg1: i32) -> (i32, i32) {
    %c0_i32 = arith.constant 0 : i32
    %c0_i32_0 = arith.constant 0 : i32
    %c0_i32_1 = arith.constant 0 : i32
    return %c0_i32, %c0_i32_0 : i32, i32
  }
  func.func @transform_19(%arg0: i32, %arg1: i32) -> (i32, i32) {
    %c0_i32 = arith.constant 0 : i32
    %c0_i32_0 = arith.constant 0 : i32
    %c0_i32_1 = arith.constant 0 : i32
    return %c0_i32, %c0_i32_0 : i32, i32
  }
  func.func @transform_20(%arg0: i32, %arg1: i32) -> (i32, i32) {
    %c0_i32 = arith.constant 0 : i32
    %c0_i32_0 = arith.constant 0 : i32
    %c0_i32_1 = arith.constant 0 : i32
    return %c0_i32, %c0_i32_0 : i32, i32
  }
  func.func @transform_21(%arg0: i32, %arg1: i32) -> (i32, i32) {
    %c0_i32 = arith.constant 0 : i32
    %c0_i32_0 = arith.constant 0 : i32
    %c0_i32_1 = arith.constant 0 : i32
    return %c0_i32, %c0_i32_0 : i32, i32
  }
  func.func @transform_22(%arg0: i32, %arg1: i32) -> (i32, i32) {
    %c0_i32 = arith.constant 0 : i32
    %c0_i32_0 = arith.constant 0 : i32
    %c0_i32_1 = arith.constant 0 : i32
    return %c0_i32, %c0_i32_0 : i32, i32
  }
  func.func @transform_23(%arg0: i32, %arg1: i32) -> (i32, i32, i32) {
    %c0_i32 = arith.constant 0 : i32
    %c0_i32_0 = arith.constant 0 : i32
    return %arg0, %arg1, %c0_i32 : i32, i32, i32
  }
}

</mosaic_0001>

<llo_original>
// kernel: tpu_custom_call.1
$region0: #{tpu_custom_call.1}
  #allocation0 [shape = 'u32[]', space=smem, size = 0x4, offset = 0x4, fixed_abs, tag = 'smem constant byte address 0x4 - core index']
  #allocation1 [shape = 'u32[144,128]{1,0:T(1,128)}', space=vmem, size = 0x12000, scoped, tag = 'internal scratch']
  #allocation2 [shape = 'bf16[4,32,8]{2,1,0:T(16,128)(2,1)}', space=vmem, size = 0x8000, scoped, tag = 'scratch operand']
  #allocation3 [shape = 'bf16[4,32,8]{2,1,0:T(16,128)(2,1)}', space=vmem, size = 0x8000, scoped, tag = 'scratch operand']
  #allocation4 [shape = 'bf16[4,8,8]{2,1,0:T(8,128)(2,1)}', space=vmem, size = 0x2000, scoped, tag = 'scratch operand']
  #allocation5 [shape = 'bf16[4,8,8]{2,1,0:T(8,128)(2,1)}', space=vmem, size = 0x2000, scoped, tag = 'scratch operand']
  %s0 = inlined_call_operand.hbm [shape: f32[2,32,32], index: 0, kind: input, shape index: {}]
  %s1 = inlined_call_operand.hbm [shape: bf16[2,8,32], index: 1, kind: input, shape index: {}]
  %s2 = inlined_call_operand.hbm [shape: f32[2,1,8], index: 2, kind: input, shape index: {}]
  %s3 = inlined_call_operand.vmem [shape: bf16[32,96], index: 3, kind: input, shape index: {}]
  %s4 = inlined_call_operand.hbm [shape: f32[1,96], index: 4, kind: input, shape index: {}]
  %s5 = inlined_call_operand.vmem [shape: bf16[4,8,32], index: 5, kind: input, shape index: {}]
  %s6 = inlined_call_operand.hbm [shape: f32[1,32], index: 6, kind: input, shape index: {}]
  %s7 = inlined_call_operand.hbm [shape: f32[1,32], index: 7, kind: input, shape index: {}]
  %s8 = inlined_call_operand.hbm [shape: f32[1,32], index: 8, kind: input, shape index: {}]
  %s9 = inlined_call_operand.vmem [shape: bf16[32,32], index: 9, kind: input, shape index: {}]
  %s10 = inlined_call_operand.hbm [shape: f32[1,32], index: 10, kind: input, shape index: {}]
  %s11 = inlined_call_operand.vmem [shape: bf16[4,8,32], index: 11, kind: input, shape index: {}]
  %s12 = inlined_call_operand.hbm [shape: f32[1,32], index: 12, kind: input, shape index: {}]
  %s13 = inlined_call_operand.hbm [shape: f32[1,32], index: 13, kind: input, shape index: {}]
  %s14 = inlined_call_operand.hbm [shape: f32[1,32], index: 14, kind: input, shape index: {}]
  %s15 = inlined_call_operand.vmem [shape: bf16[32,64], index: 15, kind: input, shape index: {}]
  %s16 = inlined_call_operand.hbm [shape: f32[1,64], index: 16, kind: input, shape index: {}]
  %s17 = inlined_call_operand.vmem [shape: bf16[64,32], index: 17, kind: input, shape index: {}]
  %s18 = inlined_call_operand.vmem [shape: f32[1,32], index: 18, kind: input, shape index: {}]
  %s19 = inlined_call_operand.vmem [shape: f32[1,32], index: 19, kind: input, shape index: {}]
  %s20 = inlined_call_operand.vmem [shape: f32[1,32], index: 20, kind: input, shape index: {}]
  %s21 = inlined_call_operand.vmem [shape: bf16[32,64], index: 21, kind: input, shape index: {}]
  %s22 = inlined_call_operand.vmem [shape: f32[1,64], index: 22, kind: input, shape index: {}]
  %s23 = inlined_call_operand.hbm [shape: f32[2,32,32], index: 23, kind: output, shape index: {}]
  %s24 = sld [smem:[#allocation0]]
  $region177: #{tpu_custom_call.1} parent=0
    _
  %s26 = ssub.s32 1, %s24
  %s27 = scalar_select 0, %s26, %s24
  $region1: #{tpu_custom_call.1} parent=0
    #allocation6 [shape = 'u8[16384]{0}', space=vmem, size = 0x4000, scoped, tag = 'input window, operand 0']
    #allocation7 [shape = 's32[2]{0}', space=sflag, size = 0x8, scoped, tag = 'scoped memory for tpu_custom_call.1']
    #allocation8 [shape = 's32[2]{0}', space=sflag, size = 0x8, scoped, tag = 'scoped memory for tpu_custom_call.1']
    #allocation9 [shape = 'u8[4096]{0}', space=vmem, size = 0x1000, scoped, tag = 'input window, operand 1']
    #allocation10 [shape = 's32[2]{0}', space=sflag, size = 0x8, scoped, tag = 'scoped memory for tpu_custom_call.1']
    #allocation11 [shape = 'u8[1024]{0}', space=vmem, size = 0x400, scoped, tag = 'input window, operand 2']
    #allocation12 [shape = 'u8[512]{0}', space=vmem, size = 0x400, scoped, tag = 'input window, operand 4, single buffered']
    #allocation13 [shape = 's32[1]{0}', space=sflag, size = 0x4, scoped, tag = 'scoped memory for tpu_custom_call.1']
    #allocation14 [shape = 'u8[512]{0}', space=vmem, size = 0x400, scoped, tag = 'input window, operand 6, single buffered']
    #allocation15 [shape = 'u8[512]{0}', space=vmem, size = 0x400, scoped, tag = 'input window, operand 7, single buffered']
    #allocation16 [shape = 's32[1]{0}', space=sflag, size = 0x4, scoped, tag = 'scoped memory for tpu_custom_call.1']
    #allocation17 [shape = 'u8[512]{0}', space=vmem, size = 0x400, scoped, tag = 'input window, operand 8, single buffered']
    #allocation18 [shape = 'u8[512]{0}', space=vmem, size = 0x400, scoped, tag = 'input window, operand 10, single buffered']
    #allocation19 [shape = 's32[1]{0}', space=sflag, size = 0x4, scoped, tag = 'scoped memory for tpu_custom_call.1']
    #allocation20 [shape = 'u8[512]{0}', space=vmem, size = 0x400, scoped, tag = 'input window, operand 12, single buffered']
    #allocation21 [shape = 'u8[512]{0}', space=vmem, size = 0x400, scoped, tag = 'input window, operand 13, single buffered']
    #allocation22 [shape = 's32[1]{0}', space=sflag, size = 0x4, scoped, tag = 'scoped memory for tpu_custom_call.1']
    #allocation23 [shape = 'u8[512]{0}', space=vmem, size = 0x400, scoped, tag = 'input window, operand 14, single buffered']
    #allocation24 [shape = 'u8[512]{0}', space=vmem, size = 0x400, scoped, tag = 'input window, operand 16, single buffered']
    #allocation25 [shape = 's32[1]{0}', space=sflag, size = 0x4, scoped, tag = 'scoped memory for tpu_custom_call.1']
    #allocation26 [shape = 'u8[16384]{0}', space=vmem, size = 0x4000, scoped, tag = 'output window, operand 0']
    %28 = vsyncpa [#allocation7], 0
    %s29 = scalar_lea.sflag [#allocation7], 1
    %30 = vsyncpa %s29, 0
    %31 = vsyncpa [#allocation10], 0
    %s32 = scalar_lea.sflag [#allocation10], 1
    %33 = vsyncpa %s32, 0
    %34 = vsyncpa [#allocation13], 0
    %35 = vsyncpa [#allocation16], 0
    %36 = vsyncpa [#allocation19], 0
    %37 = vsyncpa [#allocation22], 0
    %38 = vsyncpa [#allocation25], 0
    %39 = vsyncpa [#allocation8], 0
    %s40 = scalar_lea.sflag [#allocation8], 1
    %41 = vsyncpa %s40, 0
    loop: start=0, step=1, limit=6
    $region2: #{tpu_custom_call.1} parent=1 // loop_pre_header
      _
    $region3: #{tpu_custom_call.1} parent=1 // loop_header
      %s43 = sphi 0, %s47
      %p44 = scmp.ge.s32.totalorder %s43, 6
      %s50 = sphi 0, %s62
      %s51 = sphi 0, %s58
      %s52 = sphi 0, %s50
      %s53 = sphi 0, %s51
      %s54 = sphi 0, %s52
      %s55 = sphi 0, %s53
      %s67 = sphi 0, %s69
      %s70 = sphi 0, %s67
      %s71 = sphi 0, %s70
      %s87 = sphi 0, %s71
      %s93 = sphi 0, %s95
      %s96 = sphi 0, %s93
      %s97 = sphi 0, %s96
      %s113 = sphi 0, %s97
      %s119 = sphi 0, %s121
      %s122 = sphi 0, %s119
      %s123 = sphi 0, %s122
      %s139 = sphi 0, %s123
      %s143 = sphi 0, %s143
      %s145 = sphi 0, %s143
      %s146 = sphi 0, %s145
      %s160 = sphi 0, %s146
      %s164 = sphi 0, %s164
      %s166 = sphi 0, %s164
      %s167 = sphi 0, %s166
      %s181 = sphi 0, %s167
      %s185 = sphi 0, %s185
      %s187 = sphi 0, %s185
      %s188 = sphi 0, %s187
      %s202 = sphi 0, %s188
      %s206 = sphi 0, %s206
      %s208 = sphi 0, %s206
      %s209 = sphi 0, %s208
      %s223 = sphi 0, %s209
      %s227 = sphi 0, %s227
      %s229 = sphi 0, %s227
      %s230 = sphi 0, %s229
      %s244 = sphi 0, %s230
      %s248 = sphi 0, %s248
      %s250 = sphi 0, %s248
      %s251 = sphi 0, %s250
      %s265 = sphi 0, %s251
      %s269 = sphi 0, %s269
      %s271 = sphi 0, %s269
      %s272 = sphi 0, %s271
      %s286 = sphi 0, %s272
      %s290 = sphi 0, %s290
      %s292 = sphi 0, %s290
      %s293 = sphi 0, %s292
      %s307 = sphi 0, %s293
      %s311 = sphi 0, %s311
      %s313 = sphi 0, %s311
      %s314 = sphi 0, %s313
      %s328 = sphi 0, %s314
      %s332 = sphi 0, %s332
      %s334 = sphi 0, %s332
      %s335 = sphi 0, %s334
      %s349 = sphi 0, %s335
      %s353 = sphi 0, %s353
      %s355 = sphi 0, %s353
      %s356 = sphi 0, %s355
      %s370 = sphi 0, %s356
      %s374 = sphi 0, %s374
      %s376 = sphi 0, %s374
      %s377 = sphi 0, %s376
      %s391 = sphi 0, %s377
      %s395 = sphi 0, %s395
      %s397 = sphi 0, %s395
      %s398 = sphi 0, %s397
      %s412 = sphi 0, %s398
      %s416 = sphi 0, %s416
      %s418 = sphi 0, %s416
      %s419 = sphi 0, %s418
      %s433 = sphi 0, %s419
      %s437 = sphi 0, %s437
      %s439 = sphi 0, %s437
      %s440 = sphi 0, %s439
      %s454 = sphi 0, %s440
      %s458 = sphi 0, %s458
      %s460 = sphi 0, %s458
      %s461 = sphi 0, %s460
      %s475 = sphi 0, %s461
      %s479 = sphi 0, %s479
      %s481 = sphi 0, %s479
      %s482 = sphi 0, %s481
      %s496 = sphi 0, %s482
      %s500 = sphi 0, %s500
      %s502 = sphi 0, %s500
      %s503 = sphi 0, %s502
      %s517 = sphi 0, %s503
      %s521 = sphi 0, %s521
      %s523 = sphi 0, %s521
      %s524 = sphi 0, %s523
      %s538 = sphi 0, %s524
      %s542 = sphi 0, %s542
      %s544 = sphi 0, %s542
      %s545 = sphi 0, %s544
      %s559 = sphi 0, %s545
      %s567 = sphi 0, %s569
      %s570 = sphi 0, %s567
      %s571 = sphi 0, %s570
      %s587 = sphi 0, %s571
    $region4: #{tpu_custom_call.1} parent=1 // loop_header_branch
      %46 = sbr.rel (%p44) target = $region8
    $region5: #{tpu_custom_call.1} parent=1 // loop_body
      %s48 = ssub.s32 %s43, 1
      %s49 = ssub.s32 %s43, 2
      %s56 = sadd.s32 1, %s51
      %p57 = scmp.ge.s32.totalorder %s56, 2
      %s58 = scalar_select %p57, 0, %s56
      %s59 = sadd.s32 1, %s50
      %s60 = scalar_select %p57, %s59, %s50
      %p61 = scmp.ge.s32.totalorder %s60, 2
      %s62 = scalar_select %p61, 0, %s60
      %s63 = ssub.s32 %s50, %s62
      %s64 = ssub.s32 %s51, %s58
      %s65 = sor.u32 %s63, %s64
      %p66 = scmp.eq.s32.totalorder %s65, 0
      %s68 = sadd.s32 %s67, 1
      %s69 = scalar_select %p66, %s67, %s68
      %p72 = pneg %p66
      %p73 = scmp.eq.s32.totalorder %s43, 3
      %p74 = por %p72, %p73
      %p75 = scmp.ne.s32.totalorder %s67, %s70
      %p76 = scmp.eq.s32.totalorder %s43, 0
      %p77 = por %p75, %p76
      %p78 = scmp.ne.s32.totalorder %s67, %s70
      %p79 = scmp.eq.s32.totalorder %s48, 3
      %p80 = por %p78, %p79
      %p81 = scmp.ne.s32.totalorder %s70, %s71
      %p82 = scmp.eq.s32.totalorder %s48, 0
      %p83 = por %p81, %p82
      %p84 = scmp.ne.s32.totalorder %s70, %s71
      %p85 = scmp.eq.s32.totalorder %s49, 3
      %p86 = por %p84, %p85
      %p88 = scmp.ne.s32.totalorder %s71, %s87
      %p89 = scmp.eq.s32.totalorder %s49, 0
      %p90 = por %p88, %p89
      %s91 = ssub.s32 %s50, %s62
      %p92 = scmp.eq.s32.totalorder %s91, 0
      %s94 = sadd.s32 %s93, 1
      %s95 = scalar_select %p92, %s93, %s94
      %p98 = pneg %p92
      %p99 = scmp.eq.s32.totalorder %s43, 3
      %p100 = por %p98, %p99
      %p101 = scmp.ne.s32.totalorder %s93, %s96
      %p102 = scmp.eq.s32.totalorder %s43, 0
      %p103 = por %p101, %p102
      %p104 = scmp.ne.s32.totalorder %s93, %s96
      %p105 = scmp.eq.s32.totalorder %s48, 3
      %p106 = por %p104, %p105
      %p107 = scmp.ne.s32.totalorder %s96, %s97
      %p108 = scmp.eq.s32.totalorder %s48, 0
      %p109 = por %p107, %p108
      %p110 = scmp.ne.s32.totalorder %s96, %s97
      %p111 = scmp.eq.s32.totalorder %s49, 3
      %p112 = por %p110, %p111
      %p114 = scmp.ne.s32.totalorder %s97, %s113
      %p115 = scmp.eq.s32.totalorder %s49, 0
      %p116 = por %p114, %p115
      %s117 = ssub.s32 %s50, %s62
      %p118 = scmp.eq.s32.totalorder %s117, 0
      %s120 = sadd.s32 %s119, 1
      %s121 = scalar_select %p118, %s119, %s120
      %p124 = pneg %p118
      %p125 = scmp.eq.s32.totalorder %s43, 3
      %p126 = por %p124, %p125
      %p127 = scmp.ne.s32.totalorder %s119, %s122
      %p128 = scmp.eq.s32.totalorder %s43, 0
      %p129 = por %p127, %p128
      %p130 = scmp.ne.s32.totalorder %s119, %s122
      %p131 = scmp.eq.s32.totalorder %s48, 3
      %p132 = por %p130, %p131
      %p133 = scmp.ne.s32.totalorder %s122, %s123
      %p134 = scmp.eq.s32.totalorder %s48, 0
      %p135 = por %p133, %p134
      %p136 = scmp.ne.s32.totalorder %s122, %s123
      %p137 = scmp.eq.s32.totalorder %s49, 3
      %p138 = por %p136, %p137
      %p140 = scmp.ne.s32.totalorder %s123, %s139
      %p141 = scmp.eq.s32.totalorder %s49, 0
      %p142 = por %p140, %p141
      %s144 = sadd.s32 %s143, 1
      %p147 = scmp.eq.s32.totalorder %s43, 3
      %p148 = scmp.ne.s32.totalorder %s143, %s145
      %p149 = scmp.eq.s32.totalorder %s43, 0
      %p150 = por %p148, %p149
      %p151 = scmp.ne.s32.totalorder %s143, %s145
      %p152 = scmp.eq.s32.totalorder %s48, 3
      %p153 = por %p151, %p152
      %p154 = scmp.ne.s32.totalorder %s145, %s146
      %p155 = scmp.eq.s32.totalorder %s48, 0
      %p156 = por %p154, %p155
      %p157 = scmp.ne.s32.totalorder %s145, %s146
      %p158 = scmp.eq.s32.totalorder %s49, 3
      %p159 = por %p157, %p158
      %p161 = scmp.ne.s32.totalorder %s146, %s160
      %p162 = scmp.eq.s32.totalorder %s49, 0
      %p163 = por %p161, %p162
      %s165 = sadd.s32 %s164, 1
      %p168 = scmp.eq.s32.totalorder %s43, 3
      %p169 = scmp.ne.s32.totalorder %s164, %s166
      %p170 = scmp.eq.s32.totalorder %s43, 0
      %p171 = por %p169, %p170
      %p172 = scmp.ne.s32.totalorder %s164, %s166
      %p173 = scmp.eq.s32.totalorder %s48, 3
      %p174 = por %p172, %p173
      %p175 = scmp.ne.s32.totalorder %s166, %s167
      %p176 = scmp.eq.s32.totalorder %s48, 0
      %p177 = por %p175, %p176
      %p178 = scmp.ne.s32.totalorder %s166, %s167
      %p179 = scmp.eq.s32.totalorder %s49, 3
      %p180 = por %p178, %p179
      %p182 = scmp.ne.s32.totalorder %s167, %s181
      %p183 = scmp.eq.s32.totalorder %s49, 0
      %p184 = por %p182, %p183
      %s186 = sadd.s32 %s185, 1
      %p189 = scmp.eq.s32.totalorder %s43, 3
      %p190 = scmp.ne.s32.totalorder %s185, %s187
      %p191 = scmp.eq.s32.totalorder %s43, 0
      %p192 = por %p190, %p191
      %p193 = scmp.ne.s32.totalorder %s185, %s187
      %p194 = scmp.eq.s32.totalorder %s48, 3
      %p195 = por %p193, %p194
      %p196 = scmp.ne.s32.totalorder %s187, %s188
      %p197 = scmp.eq.s32.totalorder %s48, 0
      %p198 = por %p196, %p197
      %p199 = scmp.ne.s32.totalorder %s187, %s188
      %p200 = scmp.eq.s32.totalorder %s49, 3
      %p201 = por %p199, %p200
      %p203 = scmp.ne.s32.totalorder %s188, %s202
      %p204 = scmp.eq.s32.totalorder %s49, 0
      %p205 = por %p203, %p204
      %s207 = sadd.s32 %s206, 1
      %p210 = scmp.eq.s32.totalorder %s43, 3
      %p211 = scmp.ne.s32.totalorder %s206, %s208
      %p212 = scmp.eq.s32.totalorder %s43, 0
      %p213 = por %p211, %p212
      %p214 = scmp.ne.s32.totalorder %s206, %s208
      %p215 = scmp.eq.s32.totalorder %s48, 3
      %p216 = por %p214, %p215
      %p217 = scmp.ne.s32.totalorder %s208, %s209
      %p218 = scmp.eq.s32.totalorder %s48, 0
      %p219 = por %p217, %p218
      %p220 = scmp.ne.s32.totalorder %s208, %s209
      %p221 = scmp.eq.s32.totalorder %s49, 3
      %p222 = por %p220, %p221
      %p224 = scmp.ne.s32.totalorder %s209, %s223
      %p225 = scmp.eq.s32.totalorder %s49, 0
      %p226 = por %p224, %p225
      %s228 = sadd.s32 %s227, 1
      %p231 = scmp.eq.s32.totalorder %s43, 3
      %p232 = scmp.ne.s32.totalorder %s227, %s229
      %p233 = scmp.eq.s32.totalorder %s43, 0
      %p234 = por %p232, %p233
      %p235 = scmp.ne.s32.totalorder %s227, %s229
      %p236 = scmp.eq.s32.totalorder %s48, 3
      %p237 = por %p235, %p236
      %p238 = scmp.ne.s32.totalorder %s229, %s230
      %p239 = scmp.eq.s32.totalorder %s48, 0
      %p240 = por %p238, %p239
      %p241 = scmp.ne.s32.totalorder %s229, %s230
      %p242 = scmp.eq.s32.totalorder %s49, 3
      %p243 = por %p241, %p242
      %p245 = scmp.ne.s32.totalorder %s230, %s244
      %p246 = scmp.eq.s32.totalorder %s49, 0
      %p247 = por %p245, %p246
      %s249 = sadd.s32 %s248, 1
      %p252 = scmp.eq.s32.totalorder %s43, 3
      %p253 = scmp.ne.s32.totalorder %s248, %s250
      %p254 = scmp.eq.s32.totalorder %s43, 0
      %p255 = por %p253, %p254
      %p256 = scmp.ne.s32.totalorder %s248, %s250
      %p257 = scmp.eq.s32.totalorder %s48, 3
      %p258 = por %p256, %p257
      %p259 = scmp.ne.s32.totalorder %s250, %s251
      %p260 = scmp.eq.s32.totalorder %s48, 0
      %p261 = por %p259, %p260
      %p262 = scmp.ne.s32.totalorder %s250, %s251
      %p263 = scmp.eq.s32.totalorder %s49, 3
      %p264 = por %p262, %p263
      %p266 = scmp.ne.s32.totalorder %s251, %s265
      %p267 = scmp.eq.s32.totalorder %s49, 0
      %p268 = por %p266, %p267
      %s270 = sadd.s32 %s269, 1
      %p273 = scmp.eq.s32.totalorder %s43, 3
      %p274 = scmp.ne.s32.totalorder %s269, %s271
      %p275 = scmp.eq.s32.totalorder %s43, 0
      %p276 = por %p274, %p275
      %p277 = scmp.ne.s32.totalorder %s269, %s271
      %p278 = scmp.eq.s32.totalorder %s48, 3
      %p279 = por %p277, %p278
      %p280 = scmp.ne.s32.totalorder %s271, %s272
      %p281 = scmp.eq.s32.totalorder %s48, 0
      %p282 = por %p280, %p281
      %p283 = scmp.ne.s32.totalorder %s271, %s272
      %p284 = scmp.eq.s32.totalorder %s49, 3
      %p285 = por %p283, %p284
      %p287 = scmp.ne.s32.totalorder %s272, %s286
      %p288 = scmp.eq.s32.totalorder %s49, 0
      %p289 = por %p287, %p288
      %s291 = sadd.s32 %s290, 1
      %p294 = scmp.eq.s32.totalorder %s43, 3
      %p295 = scmp.ne.s32.totalorder %s290, %s292
      %p296 = scmp.eq.s32.totalorder %s43, 0
      %p297 = por %p295, %p296
      %p298 = scmp.ne.s32.totalorder %s290, %s292
      %p299 = scmp.eq.s32.totalorder %s48, 3
      %p300 = por %p298, %p299
      %p301 = scmp.ne.s32.totalorder %s292, %s293
      %p302 = scmp.eq.s32.totalorder %s48, 0
      %p303 = por %p301, %p302
      %p304 = scmp.ne.s32.totalorder %s292, %s293
      %p305 = scmp.eq.s32.totalorder %s49, 3
      %p306 = por %p304, %p305
      %p308 = scmp.ne.s32.totalorder %s293, %s307
      %p309 = scmp.eq.s32.totalorder %s49, 0
      %p310 = por %p308, %p309
      %s312 = sadd.s32 %s311, 1
      %p315 = scmp.eq.s32.totalorder %s43, 3
      %p316 = scmp.ne.s32.totalorder %s311, %s313
      %p317 = scmp.eq.s32.totalorder %s43, 0
      %p318 = por %p316, %p317
      %p319 = scmp.ne.s32.totalorder %s311, %s313
      %p320 = scmp.eq.s32.totalorder %s48, 3
      %p321 = por %p319, %p320
      %p322 = scmp.ne.s32.totalorder %s313, %s314
      %p323 = scmp.eq.s32.totalorder %s48, 0
      %p324 = por %p322, %p323
      %p325 = scmp.ne.s32.totalorder %s313, %s314
      %p326 = scmp.eq.s32.totalorder %s49, 3
      %p327 = por %p325, %p326
      %p329 = scmp.ne.s32.totalorder %s314, %s328
      %p330 = scmp.eq.s32.totalorder %s49, 0
      %p331 = por %p329, %p330
      %s333 = sadd.s32 %s332, 1
      %p336 = scmp.eq.s32.totalorder %s43, 3
      %p337 = scmp.ne.s32.totalorder %s332, %s334
      %p338 = scmp.eq.s32.totalorder %s43, 0
      %p339 = por %p337, %p338
      %p340 = scmp.ne.s32.totalorder %s332, %s334
      %p341 = scmp.eq.s32.totalorder %s48, 3
      %p342 = por %p340, %p341
      %p343 = scmp.ne.s32.totalorder %s334, %s335
      %p344 = scmp.eq.s32.totalorder %s48, 0
      %p345 = por %p343, %p344
      %p346 = scmp.ne.s32.totalorder %s334, %s335
      %p347 = scmp.eq.s32.totalorder %s49, 3
      %p348 = por %p346, %p347
      %p350 = scmp.ne.s32.totalorder %s335, %s349
      %p351 = scmp.eq.s32.totalorder %s49, 0
      %p352 = por %p350, %p351
      %s354 = sadd.s32 %s353, 1
      %p357 = scmp.eq.s32.totalorder %s43, 3
      %p358 = scmp.ne.s32.totalorder %s353, %s355
      %p359 = scmp.eq.s32.totalorder %s43, 0
      %p360 = por %p358, %p359
      %p361 = scmp.ne.s32.totalorder %s353, %s355
      %p362 = scmp.eq.s32.totalorder %s48, 3
      %p363 = por %p361, %p362
      %p364 = scmp.ne.s32.totalorder %s355, %s356
      %p365 = scmp.eq.s32.totalorder %s48, 0
      %p366 = por %p364, %p365
      %p367 = scmp.ne.s32.totalorder %s355, %s356
      %p368 = scmp.eq.s32.totalorder %s49, 3
      %p369 = por %p367, %p368
      %p371 = scmp.ne.s32.totalorder %s356, %s370
      %p372 = scmp.eq.s32.totalorder %s49, 0
      %p373 = por %p371, %p372
      %s375 = sadd.s32 %s374, 1
      %p378 = scmp.eq.s32.totalorder %s43, 3
      %p379 = scmp.ne.s32.totalorder %s374, %s376
      %p380 = scmp.eq.s32.totalorder %s43, 0
      %p381 = por %p379, %p380
      %p382 = scmp.ne.s32.totalorder %s374, %s376
      %p383 = scmp.eq.s32.totalorder %s48, 3
      %p384 = por %p382, %p383
      %p385 = scmp.ne.s32.totalorder %s376, %s377
      %p386 = scmp.eq.s32.totalorder %s48, 0
      %p387 = por %p385, %p386
      %p388 = scmp.ne.s32.totalorder %s376, %s377
      %p389 = scmp.eq.s32.totalorder %s49, 3
      %p390 = por %p388, %p389
      %p392 = scmp.ne.s32.totalorder %s377, %s391
      %p393 = scmp.eq.s32.totalorder %s49, 0
      %p394 = por %p392, %p393
      %s396 = sadd.s32 %s395, 1
      %p399 = scmp.eq.s32.totalorder %s43, 3
      %p400 = scmp.ne.s32.totalorder %s395, %s397
      %p401 = scmp.eq.s32.totalorder %s43, 0
      %p402 = por %p400, %p401
      %p403 = scmp.ne.s32.totalorder %s395, %s397
      %p404 = scmp.eq.s32.totalorder %s48, 3
      %p405 = por %p403, %p404
      %p406 = scmp.ne.s32.totalorder %s397, %s398
      %p407 = scmp.eq.s32.totalorder %s48, 0
      %p408 = por %p406, %p407
      %p409 = scmp.ne.s32.totalorder %s397, %s398
      %p410 = scmp.eq.s32.totalorder %s49, 3
      %p411 = por %p409, %p410
      %p413 = scmp.ne.s32.totalorder %s398, %s412
      %p414 = scmp.eq.s32.totalorder %s49, 0
      %p415 = por %p413, %p414
      %s417 = sadd.s32 %s416, 1
      %p420 = scmp.eq.s32.totalorder %s43, 3
      %p421 = scmp.ne.s32.totalorder %s416, %s418
      %p422 = scmp.eq.s32.totalorder %s43, 0
      %p423 = por %p421, %p422
      %p424 = scmp.ne.s32.totalorder %s416, %s418
      %p425 = scmp.eq.s32.totalorder %s48, 3
      %p426 = por %p424, %p425
      %p427 = scmp.ne.s32.totalorder %s418, %s419
      %p428 = scmp.eq.s32.totalorder %s48, 0
      %p429 = por %p427, %p428
      %p430 = scmp.ne.s32.totalorder %s418, %s419
      %p431 = scmp.eq.s32.totalorder %s49, 3
      %p432 = por %p430, %p431
      %p434 = scmp.ne.s32.totalorder %s419, %s433
      %p435 = scmp.eq.s32.totalorder %s49, 0
      %p436 = por %p434, %p435
      %s438 = sadd.s32 %s437, 1
      %p441 = scmp.eq.s32.totalorder %s43, 3
      %p442 = scmp.ne.s32.totalorder %s437, %s439
      %p443 = scmp.eq.s32.totalorder %s43, 0
      %p444 = por %p442, %p443
      %p445 = scmp.ne.s32.totalorder %s437, %s439
      %p446 = scmp.eq.s32.totalorder %s48, 3
      %p447 = por %p445, %p446
      %p448 = scmp.ne.s32.totalorder %s439, %s440
      %p449 = scmp.eq.s32.totalorder %s48, 0
      %p450 = por %p448, %p449
      %p451 = scmp.ne.s32.totalorder %s439, %s440
      %p452 = scmp.eq.s32.totalorder %s49, 3
      %p453 = por %p451, %p452
      %p455 = scmp.ne.s32.totalorder %s440, %s454
      %p456 = scmp.eq.s32.totalorder %s49, 0
      %p457 = por %p455, %p456
      %s459 = sadd.s32 %s458, 1
      %p462 = scmp.eq.s32.totalorder %s43, 3
      %p463 = scmp.ne.s32.totalorder %s458, %s460
      %p464 = scmp.eq.s32.totalorder %s43, 0
      %p465 = por %p463, %p464
      %p466 = scmp.ne.s32.totalorder %s458, %s460
      %p467 = scmp.eq.s32.totalorder %s48, 3
      %p468 = por %p466, %p467
      %p469 = scmp.ne.s32.totalorder %s460, %s461
      %p470 = scmp.eq.s32.totalorder %s48, 0
      %p471 = por %p469, %p470
      %p472 = scmp.ne.s32.totalorder %s460, %s461
      %p473 = scmp.eq.s32.totalorder %s49, 3
      %p474 = por %p472, %p473
      %p476 = scmp.ne.s32.totalorder %s461, %s475
      %p477 = scmp.eq.s32.totalorder %s49, 0
      %p478 = por %p476, %p477
      %s480 = sadd.s32 %s479, 1
      %p483 = scmp.eq.s32.totalorder %s43, 3
      %p484 = scmp.ne.s32.totalorder %s479, %s481
      %p485 = scmp.eq.s32.totalorder %s43, 0
      %p486 = por %p484, %p485
      %p487 = scmp.ne.s32.totalorder %s479, %s481
      %p488 = scmp.eq.s32.totalorder %s48, 3
      %p489 = por %p487, %p488
      %p490 = scmp.ne.s32.totalorder %s481, %s482
      %p491 = scmp.eq.s32.totalorder %s48, 0
      %p492 = por %p490, %p491
      %p493 = scmp.ne.s32.totalorder %s481, %s482
      %p494 = scmp.eq.s32.totalorder %s49, 3
      %p495 = por %p493, %p494
      %p497 = scmp.ne.s32.totalorder %s482, %s496
      %p498 = scmp.eq.s32.totalorder %s49, 0
      %p499 = por %p497, %p498
      %s501 = sadd.s32 %s500, 1
      %p504 = scmp.eq.s32.totalorder %s43, 3
      %p505 = scmp.ne.s32.totalorder %s500, %s502
      %p506 = scmp.eq.s32.totalorder %s43, 0
      %p507 = por %p505, %p506
      %p508 = scmp.ne.s32.totalorder %s500, %s502
      %p509 = scmp.eq.s32.totalorder %s48, 3
      %p510 = por %p508, %p509
      %p511 = scmp.ne.s32.totalorder %s502, %s503
      %p512 = scmp.eq.s32.totalorder %s48, 0
      %p513 = por %p511, %p512
      %p514 = scmp.ne.s32.totalorder %s502, %s503
      %p515 = scmp.eq.s32.totalorder %s49, 3
      %p516 = por %p514, %p515
      %p518 = scmp.ne.s32.totalorder %s503, %s517
      %p519 = scmp.eq.s32.totalorder %s49, 0
      %p520 = por %p518, %p519
      %s522 = sadd.s32 %s521, 1
      %p525 = scmp.eq.s32.totalorder %s43, 3
      %p526 = scmp.ne.s32.totalorder %s521, %s523
      %p527 = scmp.eq.s32.totalorder %s43, 0
      %p528 = por %p526, %p527
      %p529 = scmp.ne.s32.totalorder %s521, %s523
      %p530 = scmp.eq.s32.totalorder %s48, 3
      %p531 = por %p529, %p530
      %p532 = scmp.ne.s32.totalorder %s523, %s524
      %p533 = scmp.eq.s32.totalorder %s48, 0
      %p534 = por %p532, %p533
      %p535 = scmp.ne.s32.totalorder %s523, %s524
      %p536 = scmp.eq.s32.totalorder %s49, 3
      %p537 = por %p535, %p536
      %p539 = scmp.ne.s32.totalorder %s524, %s538
      %p540 = scmp.eq.s32.totalorder %s49, 0
      %p541 = por %p539, %p540
      %s543 = sadd.s32 %s542, 1
      %p546 = scmp.eq.s32.totalorder %s43, 3
      %p547 = scmp.ne.s32.totalorder %s542, %s544
      %p548 = scmp.eq.s32.totalorder %s43, 0
      %p549 = por %p547, %p548
      %p550 = scmp.ne.s32.totalorder %s542, %s544
      %p551 = scmp.eq.s32.totalorder %s48, 3
      %p552 = por %p550, %p551
      %p553 = scmp.ne.s32.totalorder %s544, %s545
      %p554 = scmp.eq.s32.totalorder %s48, 0
      %p555 = por %p553, %p554
      %p556 = scmp.ne.s32.totalorder %s544, %s545
      %p557 = scmp.eq.s32.totalorder %s49, 3
      %p558 = por %p556, %p557
      %p560 = scmp.ne.s32.totalorder %s545, %s559
      %p561 = scmp.eq.s32.totalorder %s49, 0
      %p562 = por %p560, %p561
      %s563 = ssub.s32 %s50, %s62
      %s564 = ssub.s32 %s51, %s58
      %s565 = sor.u32 %s563, %s564
      %p566 = scmp.eq.s32.totalorder %s565, 0
      %s568 = sadd.s32 %s567, 1
      %s569 = scalar_select %p566, %s567, %s568
      %p572 = pneg %p566
      %p573 = scmp.eq.s32.totalorder %s43, 3
      %p574 = por %p572, %p573
      %p575 = scmp.ne.s32.totalorder %s567, %s570
      %p576 = scmp.eq.s32.totalorder %s43, 0
      %p577 = por %p575, %p576
      %p578 = scmp.ne.s32.totalorder %s567, %s570
      %p579 = scmp.eq.s32.totalorder %s48, 3
      %p580 = por %p578, %p579
      %p581 = scmp.ne.s32.totalorder %s570, %s571
      %p582 = scmp.eq.s32.totalorder %s48, 0
      %p583 = por %p581, %p582
      %p584 = scmp.ne.s32.totalorder %s570, %s571
      %p585 = scmp.eq.s32.totalorder %s49, 3
      %p586 = por %p584, %p585
      %p588 = scmp.ne.s32.totalorder %s571, %s587
      %p589 = scmp.eq.s32.totalorder %s49, 0
      %p590 = por %p588, %p589
      %p591 = scmp.le.s32.totalorder 1, %s43
      %p592 = scmp.lt.s32.totalorder %s43, 5
      %p593 = pnand %p591, %p592
      %p594 = pneg %p593
      // Predicated region
      $region9: #{tpu_custom_call.1} parent=5 // pred_check
        _
      $region10: #{tpu_custom_call.1} parent=5 // pred_check_branch
        %596 = sbr.rel (%p593) target = $region12
      $region11: #{tpu_custom_call.1} parent=5 // pred_region
        %s597 = ssub.s32 %s43, 1
        // Predicated region
        $region13: #{tpu_custom_call.1} parent=11 // pred_check
          %p598 = pneg %p156
        $region14: #{tpu_custom_call.1} parent=11 // pred_check_branch
          %600 = sbr.rel (%p598) target = $region16
        $region15: #{tpu_custom_call.1} parent=11 // pred_region
          _
        $region16: #{tpu_custom_call.1} parent=11 // pred_fallthru
          _
        // Predicated region
        $region17: #{tpu_custom_call.1} parent=11 // pred_check
          %p601 = pneg %p177
        $region18: #{tpu_custom_call.1} parent=11 // pred_check_branch
          %603 = sbr.rel (%p601) target = $region20
        $region19: #{tpu_custom_call.1} parent=11 // pred_region
          %s605 = ssub.s32 16, 16
          %606 = vsyncadd [#allocation13], %s605
          %s608 = sshll.u32 [#allocation12], 4
          %s609 = int_to_ptr.vmem [resolvable:$true] %s608
          %611 = dma.hbm_to_vmem [thread:$0]  %s4, 16, %s609, [#allocation13]
        $region20: #{tpu_custom_call.1} parent=11 // pred_fallthru
          _
        // Predicated region
        $region21: #{tpu_custom_call.1} parent=11 // pred_check
          %p612 = pneg %p198
        $region22: #{tpu_custom_call.1} parent=11 // pred_check_branch
          %614 = sbr.rel (%p612) target = $region24
        $region23: #{tpu_custom_call.1} parent=11 // pred_region
          _
        $region24: #{tpu_custom_call.1} parent=11 // pred_fallthru
          _
        // Predicated region
        $region25: #{tpu_custom_call.1} parent=11 // pred_check
          %p615 = pneg %p219
        $region26: #{tpu_custom_call.1} parent=11 // pred_check_branch
          %617 = sbr.rel (%p615) target = $region28
        $region27: #{tpu_custom_call.1} parent=11 // pred_region
          %s619 = ssub.s32 16, 16
          %620 = vsyncadd [#allocation13], %s619
          %s622 = sshll.u32 [#allocation14], 4
          %s623 = int_to_ptr.vmem [resolvable:$true] %s622
          %625 = dma.hbm_to_vmem [thread:$0]  %s6, 16, %s623, [#allocation13]
        $region28: #{tpu_custom_call.1} parent=11 // pred_fallthru
          _
        // Predicated region
        $region29: #{tpu_custom_call.1} parent=11 // pred_check
          %p626 = pneg %p240
        $region30: #{tpu_custom_call.1} parent=11 // pred_check_branch
          %628 = sbr.rel (%p626) target = $region32
        $region31: #{tpu_custom_call.1} parent=11 // pred_region
          %s630 = ssub.s32 16, 16
          %631 = vsyncadd [#allocation16], %s630
          %s633 = sshll.u32 [#allocation15], 4
          %s634 = int_to_ptr.vmem [resolvable:$true] %s633
          %636 = dma.hbm_to_vmem [thread:$0]  %s7, 16, %s634, [#allocation16]
        $region32: #{tpu_custom_call.1} parent=11 // pred_fallthru
          _
        // Predicated region
        $region33: #{tpu_custom_call.1} parent=11 // pred_check
          %p637 = pneg %p261
        $region34: #{tpu_custom_call.1} parent=11 // pred_check_branch
          %639 = sbr.rel (%p637) target = $region36
        $region35: #{tpu_custom_call.1} parent=11 // pred_region
          %s641 = ssub.s32 16, 16
          %642 = vsyncadd [#allocation16], %s641
          %s644 = sshll.u32 [#allocation17], 4
          %s645 = int_to_ptr.vmem [resolvable:$true] %s644
          %647 = dma.hbm_to_vmem [thread:$0]  %s8, 16, %s645, [#allocation16]
        $region36: #{tpu_custom_call.1} parent=11 // pred_fallthru
          _
        // Predicated region
        $region37: #{tpu_custom_call.1} parent=11 // pred_check
          %p648 = pneg %p282
        $region38: #{tpu_custom_call.1} parent=11 // pred_check_branch
          %650 = sbr.rel (%p648) target = $region40
        $region39: #{tpu_custom_call.1} parent=11 // pred_region
          _
        $region40: #{tpu_custom_call.1} parent=11 // pred_fallthru
          _
        // Predicated region
        $region41: #{tpu_custom_call.1} parent=11 // pred_check
          %p651 = pneg %p303
        $region42: #{tpu_custom_call.1} parent=11 // pred_check_branch
          %653 = sbr.rel (%p651) target = $region44
        $region43: #{tpu_custom_call.1} parent=11 // pred_region
          %s655 = ssub.s32 16, 16
          %656 = vsyncadd [#allocation19], %s655
          %s658 = sshll.u32 [#allocation18], 4
          %s659 = int_to_ptr.vmem [resolvable:$true] %s658
          %661 = dma.hbm_to_vmem [thread:$0]  %s10, 16, %s659, [#allocation19]
        $region44: #{tpu_custom_call.1} parent=11 // pred_fallthru
          _
        // Predicated region
        $region45: #{tpu_custom_call.1} parent=11 // pred_check
          %p662 = pneg %p324
        $region46: #{tpu_custom_call.1} parent=11 // pred_check_branch
          %664 = sbr.rel (%p662) target = $region48
        $region47: #{tpu_custom_call.1} parent=11 // pred_region
          _
        $region48: #{tpu_custom_call.1} parent=11 // pred_fallthru
          _
        // Predicated region
        $region49: #{tpu_custom_call.1} parent=11 // pred_check
          %p665 = pneg %p345
        $region50: #{tpu_custom_call.1} parent=11 // pred_check_branch
          %667 = sbr.rel (%p665) target = $region52
        $region51: #{tpu_custom_call.1} parent=11 // pred_region
          %s669 = ssub.s32 16, 16
          %670 = vsyncadd [#allocation19], %s669
          %s672 = sshll.u32 [#allocation20], 4
          %s673 = int_to_ptr.vmem [resolvable:$true] %s672
          %675 = dma.hbm_to_vmem [thread:$0]  %s12, 16, %s673, [#allocation19]
        $region52: #{tpu_custom_call.1} parent=11 // pred_fallthru
          _
        // Predicated region
        $region53: #{tpu_custom_call.1} parent=11 // pred_check
          %p676 = pneg %p366
        $region54: #{tpu_custom_call.1} parent=11 // pred_check_branch
          %678 = sbr.rel (%p676) target = $region56
        $region55: #{tpu_custom_call.1} parent=11 // pred_region
          %s680 = ssub.s32 16, 16
          %681 = vsyncadd [#allocation22], %s680
          %s683 = sshll.u32 [#allocation21], 4
          %s684 = int_to_ptr.vmem [resolvable:$true] %s683
          %686 = dma.hbm_to_vmem [thread:$0]  %s13, 16, %s684, [#allocation22]
        $region56: #{tpu_custom_call.1} parent=11 // pred_fallthru
          _
        // Predicated region
        $region57: #{tpu_custom_call.1} parent=11 // pred_check
          %p687 = pneg %p387
        $region58: #{tpu_custom_call.1} parent=11 // pred_check_branch
          %689 = sbr.rel (%p687) target = $region60
        $region59: #{tpu_custom_call.1} parent=11 // pred_region
          %s691 = ssub.s32 16, 16
          %692 = vsyncadd [#allocation22], %s691
          %s694 = sshll.u32 [#allocation23], 4
          %s695 = int_to_ptr.vmem [resolvable:$true] %s694
          %697 = dma.hbm_to_vmem [thread:$0]  %s14, 16, %s695, [#allocation22]
        $region60: #{tpu_custom_call.1} parent=11 // pred_fallthru
          _
        // Predicated region
        $region61: #{tpu_custom_call.1} parent=11 // pred_check
          %p698 = pneg %p408
        $region62: #{tpu_custom_call.1} parent=11 // pred_check_branch
          %700 = sbr.rel (%p698) target = $region64
        $region63: #{tpu_custom_call.1} parent=11 // pred_region
          _
        $region64: #{tpu_custom_call.1} parent=11 // pred_fallthru
          _
        // Predicated region
        $region65: #{tpu_custom_call.1} parent=11 // pred_check
          %p701 = pneg %p429
        $region66: #{tpu_custom_call.1} parent=11 // pred_check_branch
          %703 = sbr.rel (%p701) target = $region68
        $region67: #{tpu_custom_call.1} parent=11 // pred_region
          %s705 = ssub.s32 16, 16
          %706 = vsyncadd [#allocation25], %s705
          %s708 = sshll.u32 [#allocation24], 4
          %s709 = int_to_ptr.vmem [resolvable:$true] %s708
          %711 = dma.hbm_to_vmem [thread:$0]  %s16, 16, %s709, [#allocation25]
        $region68: #{tpu_custom_call.1} parent=11 // pred_fallthru
          _
        // Predicated region
        $region69: #{tpu_custom_call.1} parent=11 // pred_check
          %p712 = pneg %p450
        $region70: #{tpu_custom_call.1} parent=11 // pred_check_branch
          %714 = sbr.rel (%p712) target = $region72
        $region71: #{tpu_custom_call.1} parent=11 // pred_region
          _
        $region72: #{tpu_custom_call.1} parent=11 // pred_fallthru
          _
        // Predicated region
        $region73: #{tpu_custom_call.1} parent=11 // pred_check
          %p715 = pneg %p471
        $region74: #{tpu_custom_call.1} parent=11 // pred_check_branch
          %717 = sbr.rel (%p715) target = $region76
        $region75: #{tpu_custom_call.1} parent=11 // pred_region
          _
        $region76: #{tpu_custom_call.1} parent=11 // pred_fallthru
          _
        // Predicated region
        $region77: #{tpu_custom_call.1} parent=11 // pred_check
          %p718 = pneg %p492
        $region78: #{tpu_custom_call.1} parent=11 // pred_check_branch
          %720 = sbr.rel (%p718) target = $region80
        $region79: #{tpu_custom_call.1} parent=11 // pred_region
          _
        $region80: #{tpu_custom_call.1} parent=11 // pred_fallthru
          _
        // Predicated region
        $region81: #{tpu_custom_call.1} parent=11 // pred_check
          %p721 = pneg %p513
        $region82: #{tpu_custom_call.1} parent=11 // pred_check_branch
          %723 = sbr.rel (%p721) target = $region84
        $region83: #{tpu_custom_call.1} parent=11 // pred_region
          _
        $region84: #{tpu_custom_call.1} parent=11 // pred_fallthru
          _
        // Predicated region
        $region85: #{tpu_custom_call.1} parent=11 // pred_check
          %p724 = pneg %p534
        $region86: #{tpu_custom_call.1} parent=11 // pred_check_branch
          %726 = sbr.rel (%p724) target = $region88
        $region87: #{tpu_custom_call.1} parent=11 // pred_region
          _
        $region88: #{tpu_custom_call.1} parent=11 // pred_fallthru
          _
        // Predicated region
        $region89: #{tpu_custom_call.1} parent=11 // pred_check
          %p727 = pneg %p555
        $region90: #{tpu_custom_call.1} parent=11 // pred_check_branch
          %729 = sbr.rel (%p727) target = $region92
        $region91: #{tpu_custom_call.1} parent=11 // pred_region
          _
        $region92: #{tpu_custom_call.1} parent=11 // pred_fallthru
          _
      $region12: #{tpu_custom_call.1} parent=5 // pred_fallthru
        _
      %p730 = scmp.lt.s32.totalorder %s43, 4
      // Predicated region
      $region93: #{tpu_custom_call.1} parent=5 // pred_check
        %p731 = pneg %p730
      $region94: #{tpu_custom_call.1} parent=5 // pred_check_branch
        %733 = sbr.rel (%p731) target = $region96
      $region95: #{tpu_custom_call.1} parent=5 // pred_region
        // Predicated region
        $region97: #{tpu_custom_call.1} parent=95 // pred_check
          %p734 = pneg %p77
        $region98: #{tpu_custom_call.1} parent=95 // pred_check_branch
          %736 = sbr.rel (%p734) target = $region100
        $region99: #{tpu_custom_call.1} parent=95 // pred_region
          %s737 = sand.u32 %s67, 1
          %s738 = scalar_lea.sflag [#allocation7], %s737
          %s739 = sand.u32 %s67, 1
          %s740 = smul.addr %s739, 16
          %s741 = scalar_lea.vmem [#allocation6], %s740
          %s742 = smul.u32 2, %s51
          %s744 = ssub.s32 256, 256
          %745 = vsyncadd %s738, %s744
          %s746 = smul.addr %s50, 4
          %s747 = sadd.s32 %s742, %s746
          %s748 = smul.addr %s747, 128
          %s749 = scalar_lea.hbm %s0, %s748
          %s750 = sshll.u32 %s741, 4
          %s751 = int_to_ptr.vmem [resolvable:$true] %s750
          %756 = dma.hbm_to_vmem [thread:$0]  %s749, 256, %s751, %s738, 128, 128, 8
        $region100: #{tpu_custom_call.1} parent=95 // pred_fallthru
          _
        // Predicated region
        $region101: #{tpu_custom_call.1} parent=95 // pred_check
          %p757 = pneg %p103
        $region102: #{tpu_custom_call.1} parent=95 // pred_check_branch
          %759 = sbr.rel (%p757) target = $region104
        $region103: #{tpu_custom_call.1} parent=95 // pred_region
          %s760 = sand.u32 %s43, 1
          %s761 = scalar_lea.sflag [#allocation10], %s760
          %s762 = sand.u32 %s93, 1
          %s763 = smul.addr %s762, 4
          %s764 = scalar_lea.vmem [#allocation9], %s763
          %s766 = ssub.s32 64, 64
          %767 = vsyncadd %s761, %s766
          %s768 = smul.addr %s50, 64
          %s769 = scalar_lea.hbm %s1, %s768
          %s771 = sshll.u32 %s764, 4
          %s772 = int_to_ptr.vmem [resolvable:$true] %s771
          %774 = dma.hbm_to_vmem [thread:$0]  %s769, 64, %s772, %s761
        $region104: #{tpu_custom_call.1} parent=95 // pred_fallthru
          _
        // Predicated region
        $region105: #{tpu_custom_call.1} parent=95 // pred_check
          %p775 = pneg %p129
        $region106: #{tpu_custom_call.1} parent=95 // pred_check_branch
          %777 = sbr.rel (%p775) target = $region108
        $region107: #{tpu_custom_call.1} parent=95 // pred_region
          %s778 = sand.u32 %s43, 1
          %s779 = scalar_lea.sflag [#allocation10], %s778
          %s780 = sand.u32 %s119, 1
          %s781 = scalar_lea.vmem [#allocation11], %s780
          %s783 = ssub.s32 16, 16
          %784 = vsyncadd %s779, %s783
          %s785 = smul.addr %s50, 16
          %s786 = scalar_lea.hbm %s2, %s785
          %s788 = sshll.u32 %s781, 4
          %s789 = int_to_ptr.vmem [resolvable:$true] %s788
          %791 = dma.hbm_to_vmem [thread:$0]  %s786, 16, %s789, %s779
        $region108: #{tpu_custom_call.1} parent=95 // pred_fallthru
          _
      $region96: #{tpu_custom_call.1} parent=5 // pred_fallthru
        _
      %p792 = scmp.le.s32.totalorder 1, %s43
      %p793 = scmp.lt.s32.totalorder %s43, 5
      %p794 = pnand %p792, %p793
      %p795 = pneg %p794
      // Predicated region
      $region109: #{tpu_custom_call.1} parent=5 // pred_check
        _
      $region110: #{tpu_custom_call.1} parent=5 // pred_check_branch
        %797 = sbr.rel (%p794) target = $region112
      $region111: #{tpu_custom_call.1} parent=5 // pred_region
        %s798 = ssub.s32 %s43, 1
        %s799 = sand.u32 %s70, 1
        %s800 = scalar_lea.sflag [#allocation7], %s799
        %s801 = sand.u32 %s70, 1
        %s802 = smul.addr %s801, 16
        %s803 = scalar_lea.vmem [#allocation6], %s802
        // Predicated region
        $region113: #{tpu_custom_call.1} parent=111 // pred_check
          %p804 = pneg %p83
        $region114: #{tpu_custom_call.1} parent=111 // pred_check_branch
          %806 = sbr.rel (%p804) target = $region116
        $region115: #{tpu_custom_call.1} parent=111 // pred_region
          %807 = dma.done %s800, 256
        $region116: #{tpu_custom_call.1} parent=111 // pred_fallthru
          _
        %s808 = sand.u32 %s48, 1
        %s809 = scalar_lea.sflag [#allocation10], %s808
        %s810 = sand.u32 %s96, 1
        %s811 = smul.addr %s810, 4
        %s812 = scalar_lea.vmem [#allocation9], %s811
        // Predicated region
        $region117: #{tpu_custom_call.1} parent=111 // pred_check
          %p813 = pneg %p109
        $region118: #{tpu_custom_call.1} parent=111 // pred_check_branch
          %815 = sbr.rel (%p813) target = $region120
        $region119: #{tpu_custom_call.1} parent=111 // pred_region
          %816 = dma.done %s809, 64
        $region120: #{tpu_custom_call.1} parent=111 // pred_fallthru
          _
        %s817 = sand.u32 %s48, 1
        %s818 = scalar_lea.sflag [#allocation10], %s817
        %s819 = sand.u32 %s122, 1
        %s820 = scalar_lea.vmem [#allocation11], %s819
        // Predicated region
        $region121: #{tpu_custom_call.1} parent=111 // pred_check
          %p821 = pneg %p135
        $region122: #{tpu_custom_call.1} parent=111 // pred_check_branch
          %823 = sbr.rel (%p821) target = $region124
        $region123: #{tpu_custom_call.1} parent=111 // pred_region
          %824 = dma.done %s818, 16
        $region124: #{tpu_custom_call.1} parent=111 // pred_fallthru
          _
        // Predicated region
        $region125: #{tpu_custom_call.1} parent=111 // pred_check
          %p825 = pneg %p177
        $region126: #{tpu_custom_call.1} parent=111 // pred_check_branch
          %827 = sbr.rel (%p825) target = $region128
        $region127: #{tpu_custom_call.1} parent=111 // pred_region
          %828 = dma.done [#allocation13], 16
        $region128: #{tpu_custom_call.1} parent=111 // pred_fallthru
          _
        // Predicated region
        $region129: #{tpu_custom_call.1} parent=111 // pred_check
          %p829 = pneg %p219
        $region130: #{tpu_custom_call.1} parent=111 // pred_check_branch
          %831 = sbr.rel (%p829) target = $region132
        $region131: #{tpu_custom_call.1} parent=111 // pred_region
          %832 = dma.done [#allocation13], 16
        $region132: #{tpu_custom_call.1} parent=111 // pred_fallthru
          _
        // Predicated region
        $region133: #{tpu_custom_call.1} parent=111 // pred_check
          %p833 = pneg %p240
        $region134: #{tpu_custom_call.1} parent=111 // pred_check_branch
          %835 = sbr.rel (%p833) target = $region136
        $region135: #{tpu_custom_call.1} parent=111 // pred_region
          %836 = dma.done [#allocation16], 16
        $region136: #{tpu_custom_call.1} parent=111 // pred_fallthru
          _
        // Predicated region
        $region137: #{tpu_custom_call.1} parent=111 // pred_check
          %p837 = pneg %p261
        $region138: #{tpu_custom_call.1} parent=111 // pred_check_branch
          %839 = sbr.rel (%p837) target = $region140
        $region139: #{tpu_custom_call.1} parent=111 // pred_region
          %840 = dma.done [#allocation16], 16
        $region140: #{tpu_custom_call.1} parent=111 // pred_fallthru
          _
        // Predicated region
        $region141: #{tpu_custom_call.1} parent=111 // pred_check
          %p841 = pneg %p303
        $region142: #{tpu_custom_call.1} parent=111 // pred_check_branch
          %843 = sbr.rel (%p841) target = $region144
        $region143: #{tpu_custom_call.1} parent=111 // pred_region
          %844 = dma.done [#allocation19], 16
        $region144: #{tpu_custom_call.1} parent=111 // pred_fallthru
          _
        // Predicated region
        $region145: #{tpu_custom_call.1} parent=111 // pred_check
          %p845 = pneg %p345
        $region146: #{tpu_custom_call.1} parent=111 // pred_check_branch
          %847 = sbr.rel (%p845) target = $region148
        $region147: #{tpu_custom_call.1} parent=111 // pred_region
          %848 = dma.done [#allocation19], 16
        $region148: #{tpu_custom_call.1} parent=111 // pred_fallthru
          _
        // Predicated region
        $region149: #{tpu_custom_call.1} parent=111 // pred_check
          %p849 = pneg %p366
        $region150: #{tpu_custom_call.1} parent=111 // pred_check_branch
          %851 = sbr.rel (%p849) target = $region152
        $region151: #{tpu_custom_call.1} parent=111 // pred_region
          %852 = dma.done [#allocation22], 16
        $region152: #{tpu_custom_call.1} parent=111 // pred_fallthru
          _
        // Predicated region
        $region153: #{tpu_custom_call.1} parent=111 // pred_check
          %p853 = pneg %p387
        $region154: #{tpu_custom_call.1} parent=111 // pred_check_branch
          %855 = sbr.rel (%p853) target = $region156
        $region155: #{tpu_custom_call.1} parent=111 // pred_region
          %856 = dma.done [#allocation22], 16
        $region156: #{tpu_custom_call.1} parent=111 // pred_fallthru
          _
        // Predicated region
        $region157: #{tpu_custom_call.1} parent=111 // pred_check
          %p857 = pneg %p429
        $region158: #{tpu_custom_call.1} parent=111 // pred_check_branch
          %859 = sbr.rel (%p857) target = $region160
        $region159: #{tpu_custom_call.1} parent=111 // pred_region
          %860 = dma.done [#allocation25], 16
        $region160: #{tpu_custom_call.1} parent=111 // pred_fallthru
          _
        %s861 = sand.u32 %s70, 1
        %s862 = scalar_lea.sflag [#allocation7], %s861
        %s863 = sand.u32 %s70, 1
        %s864 = smul.addr %s863, 16
        %s865 = scalar_lea.vmem [#allocation6], %s864
        %p866 = pneg %p83
        %p867 = pneg %p80
        %s868 = sand.u32 %s48, 1
        %s869 = scalar_lea.sflag [#allocation10], %s868
        %s870 = sand.u32 %s96, 1
        %s871 = smul.addr %s870, 4
        %s872 = scalar_lea.vmem [#allocation9], %s871
        %p873 = pneg %p109
        %p874 = pneg %p106
        %s875 = sand.u32 %s48, 1
        %s876 = scalar_lea.sflag [#allocation10], %s875
        %s877 = sand.u32 %s122, 1
        %s878 = scalar_lea.vmem [#allocation11], %s877
        %p879 = pneg %p135
        %p880 = pneg %p132
        %p881 = pneg %p156
        %p882 = pneg %p153
        %p883 = pneg %p177
        %p884 = pneg %p174
        %p885 = pneg %p198
        %p886 = pneg %p195
        %p887 = pneg %p219
        %p888 = pneg %p216
        %p889 = pneg %p240
        %p890 = pneg %p237
        %p891 = pneg %p261
        %p892 = pneg %p258
        %p893 = pneg %p282
        %p894 = pneg %p279
        %p895 = pneg %p303
        %p896 = pneg %p300
        %p897 = pneg %p324
        %p898 = pneg %p321
        %p899 = pneg %p345
        %p900 = pneg %p342
        %p901 = pneg %p366
        %p902 = pneg %p363
        %p903 = pneg %p387
        %p904 = pneg %p384
        %p905 = pneg %p408
        %p906 = pneg %p405
        %p907 = pneg %p429
        %p908 = pneg %p426
        %p909 = pneg %p450
        %p910 = pneg %p447
        %p911 = pneg %p471
        %p912 = pneg %p468
        %p913 = pneg %p492
        %p914 = pneg %p489
        %p915 = pneg %p513
        %p916 = pneg %p510
        %p917 = pneg %p534
        %p918 = pneg %p531
        %p919 = pneg %p555
        %p920 = pneg %p552
        %p921 = pneg %p583
        %p922 = pneg %p580
        %s923 = sand.u32 %s570, 1
        %s924 = scalar_lea.sflag [#allocation8], %s923
        %s925 = sand.u32 %s570, 1
        %s926 = smul.addr %s925, 16
        %s927 = scalar_lea.vmem [#allocation26], %s926
        %s928 = smul.u32 2, %s53
        %s929 = smul.u32 2, %s53
        %p931 = scmp.eq.s32.totalorder %s53, 0
        // Predicated region
        $region161: #{tpu_custom_call.1} parent=111 // pred_check
          %p932 = pneg %p931
        $region162: #{tpu_custom_call.1} parent=111 // pred_check_branch
          %934 = sbr.rel (%p932) target = $region164
        $region163: #{tpu_custom_call.1} parent=111 // pred_region
          %vm935 = vcmask 64512
          %936 = vst.msk [vmem:[#allocation2] sm:$0xff] %vm935, 0
          %937 = vst.msk [vmem:[#allocation2 + $0x8] sm:$0xff] %vm935, 0
          %938 = vst.msk [vmem:[#allocation2 + $0x10] sm:$0xff] %vm935, 0
          %939 = vst.msk [vmem:[#allocation2 + $0x18] sm:$0xff] %vm935, 0
          %940 = vst.msk [vmem:[#allocation2 + $0x20] sm:$0xff] %vm935, 0
          %941 = vst.msk [vmem:[#allocation2 + $0x28] sm:$0xff] %vm935, 0
          %942 = vst.msk [vmem:[#allocation2 + $0x30] sm:$0xff] %vm935, 0
          %943 = vst.msk [vmem:[#allocation2 + $0x38] sm:$0xff] %vm935, 0
          %944 = vst.msk [vmem:[#allocation3] sm:$0xff] %vm935, 0
          %945 = vst.msk [vmem:[#allocation3 + $0x8] sm:$0xff] %vm935, 0
          %946 = vst.msk [vmem:[#allocation3 + $0x10] sm:$0xff] %vm935, 0
          %947 = vst.msk [vmem:[#allocation3 + $0x18] sm:$0xff] %vm935, 0
          %948 = vst.msk [vmem:[#allocation3 + $0x20] sm:$0xff] %vm935, 0
          %949 = vst.msk [vmem:[#allocation3 + $0x28] sm:$0xff] %vm935, 0
          %950 = vst.msk [vmem:[#allocation3 + $0x30] sm:$0xff] %vm935, 0
          %951 = vst.msk [vmem:[#allocation3 + $0x38] sm:$0xff] %vm935, 0
          %v952 = vld [vmem:[%s812] sm:$0xf]
          %v953 = vld [vmem:[%s21] sm:$0xf]
          %v954 = vld [vmem:[%s21 + $0x4] sm:$0xf]
          %v955 = vld [vmem:[%s21 + $0x8] sm:$0xf]
          %v956 = vld [vmem:[%s21 + $0xc] sm:$0xf]
          %v957 = vld [vmem:[%s22] sm:$0x1]
          %v959 = vlaneseq
          %v960 = vshrl.u32 %v959, 7
          %v961 = vsub.s32 0, %v960
          %v962 = vrot.slane %v957, %v961
          %v968 = vunpack.c.l.b16 %v953
          %v969 = vunpack.c.l.b16 %v954
          %v970 = vunpack.c.l.b16 %v955
          %v971 = vunpack.c.l.b16 %v956
          %v972 = vpack.c.b16 %v969, %v968
          %v973 = vpack.c.b16 %v971, %v970
          %vm976 = vcmask 261120
          %v978 = vsel %vm976, %v952, 0
          %980 = vmatprep.subr.bf16.mxu0 0
          %981 = vmatpush1.bf16.msra.mxu0 %v972
          %982 = vmatprep.subr.bf16.mxu0 0
          %983 = vmatpush1.bf16.msra.mxu0 %v973
          %984 = vmatprep.subr.bf16.mxu0 0
          %985 = vmatpush1.bf16.msra.mxu0 0
          %986 = vmatprep.subr.bf16.mxu0 0
          %987 = vmatpush1.bf16.msra.mxu0 0
          %988 = vmatprep.subr.bf16.mxu0 0
          %989 = vmatpush1.bf16.msra.mxu0 0
          %990 = vmatprep.subr.bf16.mxu0 0
          %991 = vmatpush1.bf16.msra.mxu0 0
          %992 = vmatprep.subr.bf16.mxu0 0
          %993 = vmatpush1.bf16.msra.mxu0 0
          %994 = vmatprep.subr.bf16.mxu0 0
          %995 = vmatpush1.bf16.msra.mxu0 0
          %996 = vmatprep.subr.bf16.mxu0 0
          %997 = vmatpush1.bf16.msra.mxu0 0
          %998 = vmatprep.subr.bf16.mxu0 0
          %999 = vmatpush1.bf16.msra.mxu0 0
          %1000 = vmatprep.subr.bf16.mxu0 0
          %1001 = vmatpush1.bf16.msra.mxu0 0
          %1002 = vmatprep.subr.bf16.mxu0 0
          %1003 = vmatpush1.bf16.msra.mxu0 0
          %1004 = vmatprep.subr.bf16.mxu0 0
          %1005 = vmatpush1.bf16.msra.mxu0 0
          %1006 = vmatprep.subr.bf16.mxu0 0
          %1007 = vmatpush1.bf16.msra.mxu0 0
          %1008 = vmatprep.subr.bf16.mxu0 0
          %1009 = vmatpush1.bf16.msra.mxu0 0
          %1010 = vmatprep.subr.bf16.mxu0 0
          %1011 = vmatpush1.bf16.msra.mxu0 0
          %1012 = vmatprep.mubr.bf16.mxu0 0
          %1013 = vmatmul.mubr.bf16.gmra.mrb[0].mxu0 %v978
          %v1014 = vpop.f32.mrb[0].mxu0
          %v1015 = vadd.f32 %v962, %v1014
          %v1016 = vpop.f32.mrb[0].mxu0
          %v1017 = vpop.f32.mrb[0].mxu0
          %v1018 = vpop.f32.mrb[0].mxu0
          %1019 = vdwg.mxu0
          %v1020 = vpack.c.bf16 %v1015, %v1015
          %vm1021 = vcmask 60416
          %1022 = vst.msk [vmem:[#allocation4] sm:$0xf] %vm1021, %v1020
          %v1024 = vunpack.c.l.b16 %v1020
          %v1025 = vpack.c.b16 %v1024, %v1024
          %1026 = vrot.lane.b32.xlu0 %v1025, 96
          %v1027 = vpop.permute.xlu0 %1026
          %1029 = vst.msk [vmem:[#allocation5] sm:$0xf] %vm1021, %v1027
          %1030 = vrot.lane.b32.xlu0 %v1025, 120
          %v1031 = vpop.permute.xlu0 %1030
          %s1033 = scalar_lea.vmem [#allocation4], 4
          %1034 = vst.msk [vmem:[%s1033] sm:$0xf] %vm1021, %v1031
          %1035 = vrot.lane.b32.xlu0 %v1025, 88
          %v1036 = vpop.permute.xlu0 %1035
          %s1038 = scalar_lea.vmem [#allocation5], 4
          %1039 = vst.msk [vmem:[%s1038] sm:$0xf] %vm1021, %v1036
          %1040 = vrot.lane.b32.xlu0 %v1025, 112
          %v1041 = vpop.permute.xlu0 %1040
          %s1043 = scalar_lea.vmem [#allocation4], 8
          %1044 = vst.msk [vmem:[%s1043] sm:$0xf] %vm1021, %v1041
          %1045 = vrot.lane.b32.xlu0 %v1025, 80
          %v1046 = vpop.permute.xlu0 %1045
          %s1048 = scalar_lea.vmem [#allocation5], 8
          %1049 = vst.msk [vmem:[%s1048] sm:$0xf] %vm1021, %v1046
          %1050 = vrot.lane.b32.xlu0 %v1025, 104
          %v1051 = vpop.permute.xlu0 %1050
          %s1053 = scalar_lea.vmem [#allocation4], 12
          %1054 = vst.msk [vmem:[%s1053] sm:$0xf] %vm1021, %v1051
          %1055 = vrot.lane.b32.xlu0 %v1025, 72
          %v1056 = vpop.permute.xlu0 %1055
          %s1058 = scalar_lea.vmem [#allocation5], 12
          %1059 = vst.msk [vmem:[%s1058] sm:$0xf] %vm1021, %v1056
        $region164: #{tpu_custom_call.1} parent=111 // pred_fallthru
          _
        %v1060 = vld [vmem:[%s803] sm:$0xff]
        %v1061 = vld [vmem:[%s803 + $0x8] sm:$0xff]
        %s1062 = smul.u32 %s53, 16
        %v1063 = vld [vmem:[#allocation15] sm:$0x1]
        %v1064 = vld [vmem:[#allocation17] sm:$0x1]
        %vm1065 = vcmask 261120
        %v1066 = vsel %vm1065, %v1060, 0.0
        %1067 = vadd.xlane.f32.xlu0 %v1066
        %v1068 = vpop.xlane.xlu0 %1067
        %v1069 = vsel %vm1065, %v1061, 0.0
        %1070 = vadd.xlane.f32.xlu0 %v1069
        %v1071 = vpop.xlane.xlu0 %1070
        %v1072 = vrcp.pop 32.0
        %v1073 = vmul.f32 %v1068, %v1072
        %v1074 = vmul.f32 %v1071, %v1072
        %v1075 = vsub.f32 %v1060, %v1073
        %v1076 = vsub.f32 %v1061, %v1074
        %v1077 = vmul.f32 %v1075, %v1075
        %v1078 = vmul.f32 %v1076, %v1076
        %v1079 = vsel %vm1065, %v1077, 0.0
        %1080 = vadd.xlane.f32.xlu0 %v1079
        %v1081 = vpop.xlane.xlu0 %1080
        %v1082 = vsel %vm1065, %v1078, 0.0
        %1083 = vadd.xlane.f32.xlu0 %v1082
        %v1084 = vpop.xlane.xlu0 %1083
        %v1085 = vmul.f32 %v1081, %v1072
        %v1086 = vmul.f32 %v1084, %v1072
        %v1087 = vadd.f32 %v1085, 1e-08
        %v1088 = vadd.f32 %v1086, 1e-08
        %v1089 = vrsqrt.pop %v1087
        %v1090 = vrsqrt.pop %v1088
        %v1091 = vmul.f32 %v1075, %v1089
        %v1092 = vmul.f32 %v1076, %v1090
        %v1094 = vlaneseq
        %v1095 = vshrl.u32 %v1094, 7
        %v1096 = vsub.s32 0, %v1095
        %v1097 = vrot.slane %v1063, %v1096
        %v1099 = vmul.f32 %v1091, %v1097
        %v1100 = vmul.f32 %v1092, %v1097
        %v1102 = vlaneseq
        %v1103 = vshrl.u32 %v1102, 7
        %v1104 = vsub.s32 0, %v1103
        %v1105 = vrot.slane %v1064, %v1104
        %v1107 = vadd.f32 %v1099, %v1105
        %v1108 = vadd.f32 %v1100, %v1105
        %v1109 = vpack.c.bf16 %v1108, %v1107
        %v1110 = vld [vmem:[%s3] sm:$0xf]
        %v1111 = vld [vmem:[%s3 + $0x4] sm:$0xf]
        %v1112 = vld [vmem:[%s3 + $0x8] sm:$0xf]
        %v1113 = vld [vmem:[%s3 + $0xc] sm:$0xf]
        %v1114 = vld [vmem:[#allocation12] sm:$0x1]
        %v1116 = vlaneseq
        %v1117 = vshrl.u32 %v1116, 7
        %v1118 = vsub.s32 0, %v1117
        %v1119 = vrot.slane %v1114, %v1118
        %v1125 = vunpack.c.l.b16 %v1110
        %v1126 = vunpack.c.l.b16 %v1111
        %v1127 = vunpack.c.l.b16 %v1112
        %v1128 = vunpack.c.l.b16 %v1113
        %v1129 = vpack.c.b16 %v1126, %v1125
        %v1130 = vpack.c.b16 %v1128, %v1127
        %v1134 = vsel %vm1065, %v1109, 0
        %1136 = vmatprep.subr.bf16.mxu0 0
        %1137 = vmatpush1.bf16.msra.mxu0 %v1129
        %1138 = vmatprep.subr.bf16.mxu0 0
        %1139 = vmatpush1.bf16.msra.mxu0 %v1130
        %1140 = vmatprep.subr.bf16.mxu0 0
        %1141 = vmatpush1.bf16.msra.mxu0 0
        %1142 = vmatprep.subr.bf16.mxu0 0
        %1143 = vmatpush1.bf16.msra.mxu0 0
        %1144 = vmatprep.subr.bf16.mxu0 0
        %1145 = vmatpush1.bf16.msra.mxu0 0
        %1146 = vmatprep.subr.bf16.mxu0 0
        %1147 = vmatpush1.bf16.msra.mxu0 0
        %1148 = vmatprep.subr.bf16.mxu0 0
        %1149 = vmatpush1.bf16.msra.mxu0 0
        %1150 = vmatprep.subr.bf16.mxu0 0
        %1151 = vmatpush1.bf16.msra.mxu0 0
        %1152 = vmatprep.subr.bf16.mxu0 0
        %1153 = vmatpush1.bf16.msra.mxu0 0
        %1154 = vmatprep.subr.bf16.mxu0 0
        %1155 = vmatpush1.bf16.msra.mxu0 0
        %1156 = vmatprep.subr.bf16.mxu0 0
        %1157 = vmatpush1.bf16.msra.mxu0 0
        %1158 = vmatprep.subr.bf16.mxu0 0
        %1159 = vmatpush1.bf16.msra.mxu0 0
        %1160 = vmatprep.subr.bf16.mxu0 0
        %1161 = vmatpush1.bf16.msra.mxu0 0
        %1162 = vmatprep.subr.bf16.mxu0 0
        %1163 = vmatpush1.bf16.msra.mxu0 0
        %1164 = vmatprep.subr.bf16.mxu0 0
        %1165 = vmatpush1.bf16.msra.mxu0 0
        %1166 = vmatprep.subr.bf16.mxu0 0
        %1167 = vmatpush1.bf16.msra.mxu0 0
        %1168 = vmatprep.mubr.bf16.mxu0 0
        %1169 = vmatmul.mubr.bf16.gmra.mrb[0].mxu0 %v1134
        %v1170 = vpop.f32.mrb[0].mxu0
        %v1171 = vadd.f32 %v1119, %v1170
        %v1172 = vpop.f32.mrb[0].mxu0
        %v1173 = vpop.f32.mrb[0].mxu0
        %v1174 = vadd.f32 %v1119, %v1173
        %v1175 = vpop.f32.mrb[0].mxu0
        %1176 = vdwg.mxu0
        %v1177 = vpack.c.bf16 %v1174, %v1171
        %1179 = vrot.lane.b32.xlu0 %v1177, 96
        %v1180 = vpop.permute.xlu0 %1179
        %s1182 = sshra.s32 %s1062, 4
        %s1183 = sand.u32 %s1062, 15
        %s1184 = smul.addr %s1182, 8
        %s1185 = scalar_lea.vmem [#allocation2], %s1184
        %vm1186 = vcmask 64512
        %1187 = vst.msk [vmem:[%s1185] sm:$0xff] %vm1186, %v1180
        %1188 = vrot.lane.b32.xlu0 %v1177, 64
        %v1189 = vpop.permute.xlu0 %1188
        %s1191 = smul.addr %s1182, 8
        %s1192 = scalar_lea.vmem [#allocation3], %s1191
        %1193 = vst.msk [vmem:[%s1192] sm:$0xff] %vm1186, %v1189
        %1194 = vrot.lane.b32.xlu0 %v1177, 88
        %v1195 = vpop.permute.xlu0 %1194
        %s1197 = sadd.s32 %s1182, 2
        %s1198 = smul.addr %s1197, 8
        %s1199 = scalar_lea.vmem [#allocation2], %s1198
        %1200 = vst.msk [vmem:[%s1199] sm:$0xff] %vm1186, %v1195
        %1201 = vrot.lane.b32.xlu0 %v1177, 56
        %v1202 = vpop.permute.xlu0 %1201
        %s1204 = smul.addr %s1197, 8
        %s1205 = scalar_lea.vmem [#allocation3], %s1204
        %1206 = vst.msk [vmem:[%s1205] sm:$0xff] %vm1186, %v1202
        %1207 = vrot.lane.b32.xlu0 %v1177, 80
        %v1208 = vpop.permute.xlu0 %1207
        %s1210 = sadd.s32 %s1182, 4
        %s1211 = smul.addr %s1210, 8
        %s1212 = scalar_lea.vmem [#allocation2], %s1211
        %1213 = vst.msk [vmem:[%s1212] sm:$0xff] %vm1186, %v1208
        %1214 = vrot.lane.b32.xlu0 %v1177, 48
        %v1215 = vpop.permute.xlu0 %1214
        %s1217 = smul.addr %s1210, 8
        %s1218 = scalar_lea.vmem [#allocation3], %s1217
        %1219 = vst.msk [vmem:[%s1218] sm:$0xff] %vm1186, %v1215
        %1220 = vrot.lane.b32.xlu0 %v1177, 72
        %v1221 = vpop.permute.xlu0 %1220
        %s1223 = sadd.s32 %s1182, 6
        %s1224 = smul.addr %s1223, 8
        %s1225 = scalar_lea.vmem [#allocation2], %s1224
        %1226 = vst.msk [vmem:[%s1225] sm:$0xff] %vm1186, %v1221
        %1227 = vrot.lane.b32.xlu0 %v1177, 40
        %v1228 = vpop.permute.xlu0 %1227
        %s1230 = smul.addr %s1223, 8
        %s1231 = scalar_lea.vmem [#allocation3], %s1230
        %1232 = vst.msk [vmem:[%s1231] sm:$0xff] %vm1186, %v1228
        %1235 = vrot.lane.b32.xlu0 %v1171, 120
        %v1236 = vpop.permute.xlu0 %1235
        %1237 = vrot.lane.b32.xlu0 %v1174, 120
        %v1238 = vpop.permute.xlu0 %1237
        %1241 = vrot.lane.b32.xlu0 %v1171, 112
        %v1242 = vpop.permute.xlu0 %1241
        %1243 = vrot.lane.b32.xlu0 %v1174, 112
        %v1244 = vpop.permute.xlu0 %1243
        %1247 = vrot.lane.b32.xlu0 %v1171, 104
        %v1248 = vpop.permute.xlu0 %1247
        %1249 = vrot.lane.b32.xlu0 %v1174, 104
        %v1250 = vpop.permute.xlu0 %1249
        %v1253 = vpack.c.bf16 %v1238, %v1236
        %v1254 = vpack.c.bf16 %v1244, %v1242
        %v1255 = vpack.c.bf16 %v1250, %v1248
        %v1256 = vld [vmem:[#allocation2] sm:$0xff]
        %v1257 = vld [vmem:[#allocation2 + $0x8] sm:$0xff]
        %v1258 = vld [vmem:[#allocation2 + $0x10] sm:$0xff]
        %v1259 = vld [vmem:[#allocation2 + $0x18] sm:$0xff]
        %v1260 = vld [vmem:[#allocation2 + $0x20] sm:$0xff]
        %v1261 = vld [vmem:[#allocation2 + $0x28] sm:$0xff]
        %v1262 = vld [vmem:[#allocation2 + $0x30] sm:$0xff]
        %v1263 = vld [vmem:[#allocation2 + $0x38] sm:$0xff]
        %v1265 = vsel %vm1186, %v1177, 0
        %v1268 = vsel %vm1186, %v1256, 0
        %v1271 = vsel %vm1186, %v1257, 0
        %1273 = vmatprep.subr.bf16.mxu0 0
        %1274 = vmatpush1.bf16.xpose.msra.mxu0 %v1268
        %1275 = vmatprep.subr.bf16.mxu0 0
        %1276 = vmatpush1.bf16.xpose.msra.mxu0 %v1271
        %1277 = vmatprep.subr.bf16.mxu0 0
        %1278 = vmatpush1.bf16.xpose.msra.mxu0 0
        %1279 = vmatprep.subr.bf16.mxu0 0
        %1280 = vmatpush1.bf16.xpose.msra.mxu0 0
        %1281 = vmatprep.subr.bf16.mxu0 0
        %1282 = vmatpush1.bf16.xpose.msra.mxu0 0
        %1283 = vmatprep.subr.bf16.mxu0 0
        %1284 = vmatpush1.bf16.xpose.msra.mxu0 0
        %1285 = vmatprep.subr.bf16.mxu0 0
        %1286 = vmatpush1.bf16.xpose.msra.mxu0 0
        %1287 = vmatprep.subr.bf16.mxu0 0
        %1288 = vmatpush1.bf16.xpose.msra.mxu0 0
        %1289 = vmatprep.subr.bf16.mxu0 0
        %1290 = vmatpush1.bf16.xpose.msra.mxu0 0
        %1291 = vmatprep.subr.bf16.mxu0 0
        %1292 = vmatpush1.bf16.xpose.msra.mxu0 0
        %1293 = vmatprep.subr.bf16.mxu0 0
        %1294 = vmatpush1.bf16.xpose.msra.mxu0 0
        %1295 = vmatprep.subr.bf16.mxu0 0
        %1296 = vmatpush1.bf16.xpose.msra.mxu0 0
        %1297 = vmatprep.subr.bf16.mxu0 0
        %1298 = vmatpush1.bf16.xpose.msra.mxu0 0
        %1299 = vmatprep.subr.bf16.mxu0 0
        %1300 = vmatpush1.bf16.xpose.msra.mxu0 0
        %1301 = vmatprep.subr.bf16.mxu0 0
        %1302 = vmatpush1.bf16.xpose.msra.mxu0 0
        %1303 = vmatprep.subr.bf16.mxu0 0
        %1304 = vmatpush1.bf16.xpose.msra.mxu0 0
        %1305 = vmatprep.mubr.bf16.mxu0 0
        %1306 = vmatmul.mubr.bf16.gmra.mrb[0].mxu0 %v1265
        %v1307 = vpop.f32.mrb[0].mxu0
        %v1308 = vadd.f32 0.0, %v1307
        %v1309 = vpop.f32.mrb[0].mxu0
        %v1310 = vpop.f32.mrb[0].mxu0
        %v1311 = vadd.f32 0.0, %v1310
        %v1312 = vpop.f32.mrb[0].mxu0
        %1313 = vdwg.mxu0
        %v1315 = vsel %vm1186, %v1253, 0
        %v1318 = vsel %vm1186, %v1258, 0
        %v1321 = vsel %vm1186, %v1259, 0
        %1323 = vmatprep.subr.bf16.mxu0 0
        %1324 = vmatpush1.bf16.xpose.msra.mxu0 %v1318
        %1325 = vmatprep.subr.bf16.mxu0 0
        %1326 = vmatpush1.bf16.xpose.msra.mxu0 %v1321
        %1327 = vmatprep.subr.bf16.mxu0 0
        %1328 = vmatpush1.bf16.xpose.msra.mxu0 0
        %1329 = vmatprep.subr.bf16.mxu0 0
        %1330 = vmatpush1.bf16.xpose.msra.mxu0 0
        %1331 = vmatprep.subr.bf16.mxu0 0
        %1332 = vmatpush1.bf16.xpose.msra.mxu0 0
        %1333 = vmatprep.subr.bf16.mxu0 0
        %1334 = vmatpush1.bf16.xpose.msra.mxu0 0
        %1335 = vmatprep.subr.bf16.mxu0 0
        %1336 = vmatpush1.bf16.xpose.msra.mxu0 0
        %1337 = vmatprep.subr.bf16.mxu0 0
        %1338 = vmatpush1.bf16.xpose.msra.mxu0 0
        %1339 = vmatprep.subr.bf16.mxu0 0
        %1340 = vmatpush1.bf16.xpose.msra.mxu0 0
        %1341 = vmatprep.subr.bf16.mxu0 0
        %1342 = vmatpush1.bf16.xpose.msra.mxu0 0
        %1343 = vmatprep.subr.bf16.mxu0 0
        %1344 = vmatpush1.bf16.xpose.msra.mxu0 0
        %1345 = vmatprep.subr.bf16.mxu0 0
        %1346 = vmatpush1.bf16.xpose.msra.mxu0 0
        %1347 = vmatprep.subr.bf16.mxu0 0
        %1348 = vmatpush1.bf16.xpose.msra.mxu0 0
        %1349 = vmatprep.subr.bf16.mxu0 0
        %1350 = vmatpush1.bf16.xpose.msra.mxu0 0
        %1351 = vmatprep.subr.bf16.mxu0 0
        %1352 = vmatpush1.bf16.xpose.msra.mxu0 0
        %1353 = vmatprep.subr.bf16.mxu0 0
        %1354 = vmatpush1.bf16.xpose.msra.mxu0 0
        %1355 = vmatprep.mubr.bf16.mxu0 0
        %1356 = vmatmul.mubr.bf16.gmra.mrb[0].mxu0 %v1315
        %v1357 = vpop.f32.mrb[0].mxu0
        %v1358 = vadd.f32 0.0, %v1357
        %v1359 = vpop.f32.mrb[0].mxu0
        %v1360 = vpop.f32.mrb[0].mxu0
        %v1361 = vadd.f32 0.0, %v1360
        %v1362 = vpop.f32.mrb[0].mxu0
        %1363 = vdwg.mxu0
        %v1365 = vsel %vm1186, %v1254, 0
        %v1368 = vsel %vm1186, %v1260, 0
        %v1371 = vsel %vm1186, %v1261, 0
        %1373 = vmatprep.subr.bf16.mxu0 0
        %1374 = vmatpush1.bf16.xpose.msra.mxu0 %v1368
        %1375 = vmatprep.subr.bf16.mxu0 0
        %1376 = vmatpush1.bf16.xpose.msra.mxu0 %v1371
        %1377 = vmatprep.subr.bf16.mxu0 0
        %1378 = vmatpush1.bf16.xpose.msra.mxu0 0
        %1379 = vmatprep.subr.bf16.mxu0 0
        %1380 = vmatpush1.bf16.xpose.msra.mxu0 0
        %1381 = vmatprep.subr.bf16.mxu0 0
        %1382 = vmatpush1.bf16.xpose.msra.mxu0 0
        %1383 = vmatprep.subr.bf16.mxu0 0
        %1384 = vmatpush1.bf16.xpose.msra.mxu0 0
        %1385 = vmatprep.subr.bf16.mxu0 0
        %1386 = vmatpush1.bf16.xpose.msra.mxu0 0
        %1387 = vmatprep.subr.bf16.mxu0 0
        %1388 = vmatpush1.bf16.xpose.msra.mxu0 0
        %1389 = vmatprep.subr.bf16.mxu0 0
        %1390 = vmatpush1.bf16.xpose.msra.mxu0 0
        %1391 = vmatprep.subr.bf16.mxu0 0
        %1392 = vmatpush1.bf16.xpose.msra.mxu0 0
        %1393 = vmatprep.subr.bf16.mxu0 0
        %1394 = vmatpush1.bf16.xpose.msra.mxu0 0
        %1395 = vmatprep.subr.bf16.mxu0 0
        %1396 = vmatpush1.bf16.xpose.msra.mxu0 0
        %1397 = vmatprep.subr.bf16.mxu0 0
        %1398 = vmatpush1.bf16.xpose.msra.mxu0 0
        %1399 = vmatprep.subr.bf16.mxu0 0
        %1400 = vmatpush1.bf16.xpose.msra.mxu0 0
        %1401 = vmatprep.subr.bf16.mxu0 0
        %1402 = vmatpush1.bf16.xpose.msra.mxu0 0
        %1403 = vmatprep.subr.bf16.mxu0 0
        %1404 = vmatpush1.bf16.xpose.msra.mxu0 0
        %1405 = vmatprep.mubr.bf16.mxu0 0
        %1406 = vmatmul.mubr.bf16.gmra.mrb[0].mxu0 %v1365
        %v1407 = vpop.f32.mrb[0].mxu0
        %v1408 = vadd.f32 0.0, %v1407
        %v1409 = vpop.f32.mrb[0].mxu0
        %v1410 = vpop.f32.mrb[0].mxu0
        %v1411 = vadd.f32 0.0, %v1410
        %v1412 = vpop.f32.mrb[0].mxu0
        %1413 = vdwg.mxu0
        %v1415 = vsel %vm1186, %v1255, 0
        %v1418 = vsel %vm1186, %v1262, 0
        %v1421 = vsel %vm1186, %v1263, 0
        %1423 = vmatprep.subr.bf16.mxu0 0
        %1424 = vmatpush1.bf16.xpose.msra.mxu0 %v1418
        %1425 = vmatprep.subr.bf16.mxu0 0
        %1426 = vmatpush1.bf16.xpose.msra.mxu0 %v1421
        %1427 = vmatprep.subr.bf16.mxu0 0
        %1428 = vmatpush1.bf16.xpose.msra.mxu0 0
        %1429 = vmatprep.subr.bf16.mxu0 0
        %1430 = vmatpush1.bf16.xpose.msra.mxu0 0
        %1431 = vmatprep.subr.bf16.mxu0 0
        %1432 = vmatpush1.bf16.xpose.msra.mxu0 0
        %1433 = vmatprep.subr.bf16.mxu0 0
        %1434 = vmatpush1.bf16.xpose.msra.mxu0 0
        %1435 = vmatprep.subr.bf16.mxu0 0
        %1436 = vmatpush1.bf16.xpose.msra.mxu0 0
        %1437 = vmatprep.subr.bf16.mxu0 0
        %1438 = vmatpush1.bf16.xpose.msra.mxu0 0
        %1439 = vmatprep.subr.bf16.mxu0 0
        %1440 = vmatpush1.bf16.xpose.msra.mxu0 0
        %1441 = vmatprep.subr.bf16.mxu0 0
        %1442 = vmatpush1.bf16.xpose.msra.mxu0 0
        %1443 = vmatprep.subr.bf16.mxu0 0
        %1444 = vmatpush1.bf16.xpose.msra.mxu0 0
        %1445 = vmatprep.subr.bf16.mxu0 0
        %1446 = vmatpush1.bf16.xpose.msra.mxu0 0
        %1447 = vmatprep.subr.bf16.mxu0 0
        %1448 = vmatpush1.bf16.xpose.msra.mxu0 0
        %1449 = vmatprep.subr.bf16.mxu0 0
        %1450 = vmatpush1.bf16.xpose.msra.mxu0 0
        %1451 = vmatprep.subr.bf16.mxu0 0
        %1452 = vmatpush1.bf16.xpose.msra.mxu0 0
        %1453 = vmatprep.subr.bf16.mxu0 0
        %1454 = vmatpush1.bf16.xpose.msra.mxu0 0
        %1455 = vmatprep.mubr.bf16.mxu0 0
        %1456 = vmatmul.mubr.bf16.gmra.mrb[0].mxu0 %v1415
        %v1457 = vpop.f32.mrb[0].mxu0
        %v1458 = vadd.f32 0.0, %v1457
        %v1459 = vpop.f32.mrb[0].mxu0
        %v1460 = vpop.f32.mrb[0].mxu0
        %v1461 = vadd.f32 0.0, %v1460
        %v1462 = vpop.f32.mrb[0].mxu0
        %1463 = vdwg.mxu0
        %v1464 = vmul.f32 %v1308, 0.35355338
        %v1465 = vmul.f32 %v1311, 0.35355338
        %v1466 = vmul.f32 %v1358, 0.35355338
        %v1467 = vmul.f32 %v1361, 0.35355338
        %v1468 = vmul.f32 %v1408, 0.35355338
        %v1469 = vmul.f32 %v1411, 0.35355338
        %v1470 = vmul.f32 %v1458, 0.35355338
        %v1471 = vmul.f32 %v1461, 0.35355338
        %v1472 = vlaneseq
        %v1473 = vshrl.u32 %v1472, 7
        %v1474 = vadd.s32 %v1473, 8
        %v1475 = vstv %s1062
        %v1476 = vadd.s32 %v1475, %v1473
        %v1477 = vadd.s32 %v1475, %v1474
        %v1478 = vlaneseq
        %v1479 = vand.u32 %v1478, 127
        %vm1480 = vcmp.ge.s32.totalorder %v1476, %v1479
        %vm1481 = vcmp.ge.s32.totalorder %v1477, %v1479
        %v1482 = vsel %vm1480, 1, 0
        %v1483 = vsel %vm1481, 1, 0
        %vm1484 = vcmp.eq.s32.totalorder %v1482, 1
        %vm1485 = vcmp.eq.s32.totalorder %v1483, 1
        %v1486 = vsel %vm1484, %v1464, -1e+09
        %v1487 = vsel %vm1485, %v1465, -1e+09
        %v1488 = vsel %vm1484, %v1466, -1e+09
        %v1489 = vsel %vm1485, %v1467, -1e+09
        %v1490 = vsel %vm1484, %v1468, -1e+09
        %v1491 = vsel %vm1485, %v1469, -1e+09
        %v1492 = vsel %vm1484, %v1470, -1e+09
        %v1493 = vsel %vm1485, %v1471, -1e+09
        %v1494 = vsel %vm1065, %v1486, -inf
        %1495 = vmax.xlane.f32.xlu0 %v1494
        %v1496 = vpop.xlane.xlu0 %1495
        %v1497 = vsel %vm1065, %v1487, -inf
        %1498 = vmax.xlane.f32.xlu0 %v1497
        %v1499 = vpop.xlane.xlu0 %1498
        %v1500 = vsel %vm1065, %v1488, -inf
        %1501 = vmax.xlane.f32.xlu0 %v1500
        %v1502 = vpop.xlane.xlu0 %1501
        %v1503 = vsel %vm1065, %v1489, -inf
        %1504 = vmax.xlane.f32.xlu0 %v1503
        %v1505 = vpop.xlane.xlu0 %1504
        %v1506 = vsel %vm1065, %v1490, -inf
        %1507 = vmax.xlane.f32.xlu0 %v1506
        %v1508 = vpop.xlane.xlu0 %1507
        %v1509 = vsel %vm1065, %v1491, -inf
        %1510 = vmax.xlane.f32.xlu0 %v1509
        %v1511 = vpop.xlane.xlu0 %1510
        %v1512 = vsel %vm1065, %v1492, -inf
        %1513 = vmax.xlane.f32.xlu0 %v1512
        %v1514 = vpop.xlane.xlu0 %1513
        %v1515 = vsel %vm1065, %v1493, -inf
        %1516 = vmax.xlane.f32.xlu0 %v1515
        %v1517 = vpop.xlane.xlu0 %1516
        %v1518 = vsub.f32 %v1486, %v1496
        %v1519 = vsub.f32 %v1487, %v1499
        %v1520 = vsub.f32 %v1488, %v1502
        %v1521 = vsub.f32 %v1489, %v1505
        %v1522 = vsub.f32 %v1490, %v1508
        %v1523 = vsub.f32 %v1491, %v1511
        %v1524 = vsub.f32 %v1492, %v1514
        %v1525 = vsub.f32 %v1493, %v1517
        %v1526 = vmul.f32 %v1518, 1.442695
        %v1527 = vpow.pop %v1526
        %v1528 = vmul.f32 %v1519, 1.442695
        %v1529 = vpow.pop %v1528
        %v1530 = vmul.f32 %v1520, 1.442695
        %v1531 = vpow.pop %v1530
        %v1532 = vmul.f32 %v1521, 1.442695
        %v1533 = vpow.pop %v1532
        %v1534 = vmul.f32 %v1522, 1.442695
        %v1535 = vpow.pop %v1534
        %v1536 = vmul.f32 %v1523, 1.442695
        %v1537 = vpow.pop %v1536
        %v1538 = vmul.f32 %v1524, 1.442695
        %v1539 = vpow.pop %v1538
        %v1540 = vmul.f32 %v1525, 1.442695
        %v1541 = vpow.pop %v1540
        %v1542 = vsel %vm1065, %v1527, 0.0
        %1543 = vadd.xlane.f32.xlu0 %v1542
        %v1544 = vpop.xlane.xlu0 %1543
        %v1545 = vsel %vm1065, %v1529, 0.0
        %1546 = vadd.xlane.f32.xlu0 %v1545
        %v1547 = vpop.xlane.xlu0 %1546
        %v1548 = vsel %vm1065, %v1531, 0.0
        %1549 = vadd.xlane.f32.xlu0 %v1548
        %v1550 = vpop.xlane.xlu0 %1549
        %v1551 = vsel %vm1065, %v1533, 0.0
        %1552 = vadd.xlane.f32.xlu0 %v1551
        %v1553 = vpop.xlane.xlu0 %1552
        %v1554 = vsel %vm1065, %v1535, 0.0
        %1555 = vadd.xlane.f32.xlu0 %v1554
        %v1556 = vpop.xlane.xlu0 %1555
        %v1557 = vsel %vm1065, %v1537, 0.0
        %1558 = vadd.xlane.f32.xlu0 %v1557
        %v1559 = vpop.xlane.xlu0 %1558
        %v1560 = vsel %vm1065, %v1539, 0.0
        %1561 = vadd.xlane.f32.xlu0 %v1560
        %v1562 = vpop.xlane.xlu0 %1561
        %v1563 = vsel %vm1065, %v1541, 0.0
        %1564 = vadd.xlane.f32.xlu0 %v1563
        %v1565 = vpop.xlane.xlu0 %1564
        %v1566 = vrcp.pop %v1544
        %v1567 = vrcp.pop %v1547
        %v1568 = vrcp.pop %v1550
        %v1569 = vrcp.pop %v1553
        %v1570 = vrcp.pop %v1556
        %v1571 = vrcp.pop %v1559
        %v1572 = vrcp.pop %v1562
        %v1573 = vrcp.pop %v1565
        %v1574 = vmul.f32 %v1527, %v1566
        %v1575 = vmul.f32 %v1529, %v1567
        %v1576 = vmul.f32 %v1531, %v1568
        %v1577 = vmul.f32 %v1533, %v1569
        %v1578 = vmul.f32 %v1535, %v1570
        %v1579 = vmul.f32 %v1537, %v1571
        %v1580 = vmul.f32 %v1539, %v1572
        %v1581 = vmul.f32 %v1541, %v1573
        %v1582 = vpack.c.bf16 %v1575, %v1574
        %v1583 = vpack.c.bf16 %v1577, %v1576
        %v1584 = vpack.c.bf16 %v1579, %v1578
        %v1585 = vpack.c.bf16 %v1581, %v1580
        %v1586 = vld [vmem:[#allocation3] sm:$0xff]
        %v1587 = vld [vmem:[#allocation3 + $0x8] sm:$0xff]
        %v1588 = vld [vmem:[#allocation3 + $0x10] sm:$0xff]
        %v1589 = vld [vmem:[#allocation3 + $0x18] sm:$0xff]
        %v1590 = vld [vmem:[#allocation3 + $0x20] sm:$0xff]
        %v1591 = vld [vmem:[#allocation3 + $0x28] sm:$0xff]
        %v1592 = vld [vmem:[#allocation3 + $0x30] sm:$0xff]
        %v1593 = vld [vmem:[#allocation3 + $0x38] sm:$0xff]
        %v1595 = vsel %vm1065, %v1582, 0
        %1597 = vmatprep.subr.bf16.mxu0 0
        %1598 = vmatpush1.bf16.msra.mxu0 %v1586
        %1599 = vmatprep.subr.bf16.mxu0 0
        %1600 = vmatpush1.bf16.msra.mxu0 %v1587
        %1601 = vmatprep.subr.bf16.mxu0 0
        %1602 = vmatpush1.bf16.msra.mxu0 0
        %1603 = vmatprep.subr.bf16.mxu0 0
        %1604 = vmatpush1.bf16.msra.mxu0 0
        %1605 = vmatprep.subr.bf16.mxu0 0
        %1606 = vmatpush1.bf16.msra.mxu0 0
        %1607 = vmatprep.subr.bf16.mxu0 0
        %1608 = vmatpush1.bf16.msra.mxu0 0
        %1609 = vmatprep.subr.bf16.mxu0 0
        %1610 = vmatpush1.bf16.msra.mxu0 0
        %1611 = vmatprep.subr.bf16.mxu0 0
        %1612 = vmatpush1.bf16.msra.mxu0 0
        %1613 = vmatprep.subr.bf16.mxu0 0
        %1614 = vmatpush1.bf16.msra.mxu0 0
        %1615 = vmatprep.subr.bf16.mxu0 0
        %1616 = vmatpush1.bf16.msra.mxu0 0
        %1617 = vmatprep.subr.bf16.mxu0 0
        %1618 = vmatpush1.bf16.msra.mxu0 0
        %1619 = vmatprep.subr.bf16.mxu0 0
        %1620 = vmatpush1.bf16.msra.mxu0 0
        %1621 = vmatprep.subr.bf16.mxu0 0
        %1622 = vmatpush1.bf16.msra.mxu0 0
        %1623 = vmatprep.subr.bf16.mxu0 0
        %1624 = vmatpush1.bf16.msra.mxu0 0
        %1625 = vmatprep.subr.bf16.mxu0 0
        %1626 = vmatpush1.bf16.msra.mxu0 0
        %1627 = vmatprep.subr.bf16.mxu0 0
        %1628 = vmatpush1.bf16.msra.mxu0 0
        %1629 = vmatprep.mubr.bf16.mxu0 0
        %1630 = vmatmul.mubr.bf16.gmra.mrb[0].mxu0 %v1595
        %v1631 = vpop.f32.mrb[0].mxu0
        %v1632 = vadd.f32 0.0, %v1631
        %v1633 = vpop.f32.mrb[0].mxu0
        %v1634 = vpop.f32.mrb[0].mxu0
        %v1635 = vadd.f32 0.0, %v1634
        %v1636 = vpop.f32.mrb[0].mxu0
        %1637 = vdwg.mxu0
        %v1639 = vsel %vm1065, %v1583, 0
        %1641 = vmatprep.subr.bf16.mxu0 0
        %1642 = vmatpush1.bf16.msra.mxu0 %v1588
        %1643 = vmatprep.subr.bf16.mxu0 0
        %1644 = vmatpush1.bf16.msra.mxu0 %v1589
        %1645 = vmatprep.subr.bf16.mxu0 0
        %1646 = vmatpush1.bf16.msra.mxu0 0
        %1647 = vmatprep.subr.bf16.mxu0 0
        %1648 = vmatpush1.bf16.msra.mxu0 0
        %1649 = vmatprep.subr.bf16.mxu0 0
        %1650 = vmatpush1.bf16.msra.mxu0 0
        %1651 = vmatprep.subr.bf16.mxu0 0
        %1652 = vmatpush1.bf16.msra.mxu0 0
        %1653 = vmatprep.subr.bf16.mxu0 0
        %1654 = vmatpush1.bf16.msra.mxu0 0
        %1655 = vmatprep.subr.bf16.mxu0 0
        %1656 = vmatpush1.bf16.msra.mxu0 0
        %1657 = vmatprep.subr.bf16.mxu0 0
        %1658 = vmatpush1.bf16.msra.mxu0 0
        %1659 = vmatprep.subr.bf16.mxu0 0
        %1660 = vmatpush1.bf16.msra.mxu0 0
        %1661 = vmatprep.subr.bf16.mxu0 0
        %1662 = vmatpush1.bf16.msra.mxu0 0
        %1663 = vmatprep.subr.bf16.mxu0 0
        %1664 = vmatpush1.bf16.msra.mxu0 0
        %1665 = vmatprep.subr.bf16.mxu0 0
        %1666 = vmatpush1.bf16.msra.mxu0 0
        %1667 = vmatprep.subr.bf16.mxu0 0
        %1668 = vmatpush1.bf16.msra.mxu0 0
        %1669 = vmatprep.subr.bf16.mxu0 0
        %1670 = vmatpush1.bf16.msra.mxu0 0
        %1671 = vmatprep.subr.bf16.mxu0 0
        %1672 = vmatpush1.bf16.msra.mxu0 0
        %1673 = vmatprep.mubr.bf16.mxu0 0
        %1674 = vmatmul.mubr.bf16.gmra.mrb[0].mxu0 %v1639
        %v1675 = vpop.f32.mrb[0].mxu0
        %v1676 = vadd.f32 0.0, %v1675
        %v1677 = vpop.f32.mrb[0].mxu0
        %v1678 = vpop.f32.mrb[0].mxu0
        %v1679 = vadd.f32 0.0, %v1678
        %v1680 = vpop.f32.mrb[0].mxu0
        %1681 = vdwg.mxu0
        %v1683 = vsel %vm1065, %v1584, 0
        %1685 = vmatprep.subr.bf16.mxu0 0
        %1686 = vmatpush1.bf16.msra.mxu0 %v1590
        %1687 = vmatprep.subr.bf16.mxu0 0
        %1688 = vmatpush1.bf16.msra.mxu0 %v1591
        %1689 = vmatprep.subr.bf16.mxu0 0
        %1690 = vmatpush1.bf16.msra.mxu0 0
        %1691 = vmatprep.subr.bf16.mxu0 0
        %1692 = vmatpush1.bf16.msra.mxu0 0
        %1693 = vmatprep.subr.bf16.mxu0 0
        %1694 = vmatpush1.bf16.msra.mxu0 0
        %1695 = vmatprep.subr.bf16.mxu0 0
        %1696 = vmatpush1.bf16.msra.mxu0 0
        %1697 = vmatprep.subr.bf16.mxu0 0
        %1698 = vmatpush1.bf16.msra.mxu0 0
        %1699 = vmatprep.subr.bf16.mxu0 0
        %1700 = vmatpush1.bf16.msra.mxu0 0
        %1701 = vmatprep.subr.bf16.mxu0 0
        %1702 = vmatpush1.bf16.msra.mxu0 0
        %1703 = vmatprep.subr.bf16.mxu0 0
        %1704 = vmatpush1.bf16.msra.mxu0 0
        %1705 = vmatprep.subr.bf16.mxu0 0
        %1706 = vmatpush1.bf16.msra.mxu0 0
        %1707 = vmatprep.subr.bf16.mxu0 0
        %1708 = vmatpush1.bf16.msra.mxu0 0
        %1709 = vmatprep.subr.bf16.mxu0 0
        %1710 = vmatpush1.bf16.msra.mxu0 0
        %1711 = vmatprep.subr.bf16.mxu0 0
        %1712 = vmatpush1.bf16.msra.mxu0 0
        %1713 = vmatprep.subr.bf16.mxu0 0
        %1714 = vmatpush1.bf16.msra.mxu0 0
        %1715 = vmatprep.subr.bf16.mxu0 0
        %1716 = vmatpush1.bf16.msra.mxu0 0
        %1717 = vmatprep.mubr.bf16.mxu0 0
        %1718 = vmatmul.mubr.bf16.gmra.mrb[0].mxu0 %v1683
        %v1719 = vpop.f32.mrb[0].mxu0
        %v1720 = vadd.f32 0.0, %v1719
        %v1721 = vpop.f32.mrb[0].mxu0
        %v1722 = vpop.f32.mrb[0].mxu0
        %v1723 = vadd.f32 0.0, %v1722
        %v1724 = vpop.f32.mrb[0].mxu0
        %1725 = vdwg.mxu0
        %v1727 = vsel %vm1065, %v1585, 0
        %1729 = vmatprep.subr.bf16.mxu0 0
        %1730 = vmatpush1.bf16.msra.mxu0 %v1592
        %1731 = vmatprep.subr.bf16.mxu0 0
        %1732 = vmatpush1.bf16.msra.mxu0 %v1593
        %1733 = vmatprep.subr.bf16.mxu0 0
        %1734 = vmatpush1.bf16.msra.mxu0 0
        %1735 = vmatprep.subr.bf16.mxu0 0
        %1736 = vmatpush1.bf16.msra.mxu0 0
        %1737 = vmatprep.subr.bf16.mxu0 0
        %1738 = vmatpush1.bf16.msra.mxu0 0
        %1739 = vmatprep.subr.bf16.mxu0 0
        %1740 = vmatpush1.bf16.msra.mxu0 0
        %1741 = vmatprep.subr.bf16.mxu0 0
        %1742 = vmatpush1.bf16.msra.mxu0 0
        %1743 = vmatprep.subr.bf16.mxu0 0
        %1744 = vmatpush1.bf16.msra.mxu0 0
        %1745 = vmatprep.subr.bf16.mxu0 0
        %1746 = vmatpush1.bf16.msra.mxu0 0
        %1747 = vmatprep.subr.bf16.mxu0 0
        %1748 = vmatpush1.bf16.msra.mxu0 0
        %1749 = vmatprep.subr.bf16.mxu0 0
        %1750 = vmatpush1.bf16.msra.mxu0 0
        %1751 = vmatprep.subr.bf16.mxu0 0
        %1752 = vmatpush1.bf16.msra.mxu0 0
        %1753 = vmatprep.subr.bf16.mxu0 0
        %1754 = vmatpush1.bf16.msra.mxu0 0
        %1755 = vmatprep.subr.bf16.mxu0 0
        %1756 = vmatpush1.bf16.msra.mxu0 0
        %1757 = vmatprep.subr.bf16.mxu0 0
        %1758 = vmatpush1.bf16.msra.mxu0 0
        %1759 = vmatprep.subr.bf16.mxu0 0
        %1760 = vmatpush1.bf16.msra.mxu0 0
        %1761 = vmatprep.mubr.bf16.mxu0 0
        %1762 = vmatmul.mubr.bf16.gmra.mrb[0].mxu0 %v1727
        %v1763 = vpop.f32.mrb[0].mxu0
        %v1764 = vadd.f32 0.0, %v1763
        %v1765 = vpop.f32.mrb[0].mxu0
        %v1766 = vpop.f32.mrb[0].mxu0
        %v1767 = vadd.f32 0.0, %v1766
        %v1768 = vpop.f32.mrb[0].mxu0
        %1769 = vdwg.mxu0
        %v1770 = vpack.c.bf16 %v1635, %v1632
        %v1771 = vpack.c.bf16 %v1679, %v1676
        %v1772 = vpack.c.bf16 %v1723, %v1720
        %v1773 = vpack.c.bf16 %v1767, %v1764
        %v1774 = vld [vmem:[%s5] sm:$0xf]
        %v1775 = vld [vmem:[%s5 + $0x4] sm:$0xf]
        %v1776 = vld [vmem:[%s5 + $0x8] sm:$0xf]
        %v1777 = vld [vmem:[%s5 + $0xc] sm:$0xf]
        %v1779 = vsel %vm1186, %v1770, 0
        %vm1781 = vcmask 1043456
        %v1783 = vsel %vm1781, %v1774, 0
        %1785 = vmatprep.subr.bf16.mxu0 0
        %1786 = vmatpush1.bf16.msra.mxu0 %v1783
        %1787 = vmatprep.subr.bf16.mxu0 0
        %1788 = vmatpush1.bf16.msra.mxu0 0
        %1789 = vmatprep.subr.bf16.mxu0 0
        %1790 = vmatpush1.bf16.msra.mxu0 0
        %1791 = vmatprep.subr.bf16.mxu0 0
        %1792 = vmatpush1.bf16.msra.mxu0 0
        %1793 = vmatprep.subr.bf16.mxu0 0
        %1794 = vmatpush1.bf16.msra.mxu0 0
        %1795 = vmatprep.subr.bf16.mxu0 0
        %1796 = vmatpush1.bf16.msra.mxu0 0
        %1797 = vmatprep.subr.bf16.mxu0 0
        %1798 = vmatpush1.bf16.msra.mxu0 0
        %1799 = vmatprep.subr.bf16.mxu0 0
        %1800 = vmatpush1.bf16.msra.mxu0 0
        %1801 = vmatprep.subr.bf16.mxu0 0
        %1802 = vmatpush1.bf16.msra.mxu0 0
        %1803 = vmatprep.subr.bf16.mxu0 0
        %1804 = vmatpush1.bf16.msra.mxu0 0
        %1805 = vmatprep.subr.bf16.mxu0 0
        %1806 = vmatpush1.bf16.msra.mxu0 0
        %1807 = vmatprep.subr.bf16.mxu0 0
        %1808 = vmatpush1.bf16.msra.mxu0 0
        %1809 = vmatprep.subr.bf16.mxu0 0
        %1810 = vmatpush1.bf16.msra.mxu0 0
        %1811 = vmatprep.subr.bf16.mxu0 0
        %1812 = vmatpush1.bf16.msra.mxu0 0
        %1813 = vmatprep.subr.bf16.mxu0 0
        %1814 = vmatpush1.bf16.msra.mxu0 0
        %1815 = vmatprep.subr.bf16.mxu0 0
        %1816 = vmatpush1.bf16.msra.mxu0 0
        %1817 = vmatprep.mubr.bf16.mxu0 0
        %1818 = vmatmul.mubr.bf16.gmra.mrb[0].mxu0 %v1779
        %v1819 = vpop.f32.mrb[0].mxu0
        %v1820 = vadd.f32 0.0, %v1819
        %v1821 = vpop.f32.mrb[0].mxu0
        %v1822 = vpop.f32.mrb[0].mxu0
        %v1823 = vadd.f32 0.0, %v1822
        %v1824 = vpop.f32.mrb[0].mxu0
        %1825 = vdwg.mxu0
        %v1827 = vsel %vm1186, %v1771, 0
        %v1830 = vsel %vm1781, %v1775, 0
        %1832 = vmatprep.subr.bf16.mxu0 0
        %1833 = vmatpush1.bf16.msra.mxu0 %v1830
        %1834 = vmatprep.subr.bf16.mxu0 0
        %1835 = vmatpush1.bf16.msra.mxu0 0
        %1836 = vmatprep.subr.bf16.mxu0 0
        %1837 = vmatpush1.bf16.msra.mxu0 0
        %1838 = vmatprep.subr.bf16.mxu0 0
        %1839 = vmatpush1.bf16.msra.mxu0 0
        %1840 = vmatprep.subr.bf16.mxu0 0
        %1841 = vmatpush1.bf16.msra.mxu0 0
        %1842 = vmatprep.subr.bf16.mxu0 0
        %1843 = vmatpush1.bf16.msra.mxu0 0
        %1844 = vmatprep.subr.bf16.mxu0 0
        %1845 = vmatpush1.bf16.msra.mxu0 0
        %1846 = vmatprep.subr.bf16.mxu0 0
        %1847 = vmatpush1.bf16.msra.mxu0 0
        %1848 = vmatprep.subr.bf16.mxu0 0
        %1849 = vmatpush1.bf16.msra.mxu0 0
        %1850 = vmatprep.subr.bf16.mxu0 0
        %1851 = vmatpush1.bf16.msra.mxu0 0
        %1852 = vmatprep.subr.bf16.mxu0 0
        %1853 = vmatpush1.bf16.msra.mxu0 0
        %1854 = vmatprep.subr.bf16.mxu0 0
        %1855 = vmatpush1.bf16.msra.mxu0 0
        %1856 = vmatprep.subr.bf16.mxu0 0
        %1857 = vmatpush1.bf16.msra.mxu0 0
        %1858 = vmatprep.subr.bf16.mxu0 0
        %1859 = vmatpush1.bf16.msra.mxu0 0
        %1860 = vmatprep.subr.bf16.mxu0 0
        %1861 = vmatpush1.bf16.msra.mxu0 0
        %1862 = vmatprep.subr.bf16.mxu0 0
        %1863 = vmatpush1.bf16.msra.mxu0 0
        %1864 = vmatprep.mubr.bf16.mxu0 0
        %1865 = vmatmul.mubr.bf16.gmra.mrb[0].mxu0 %v1827
        %v1866 = vpop.f32.mrb[0].mxu0
        %v1867 = vadd.f32 0.0, %v1866
        %v1868 = vpop.f32.mrb[0].mxu0
        %v1869 = vpop.f32.mrb[0].mxu0
        %v1870 = vadd.f32 0.0, %v1869
        %v1871 = vpop.f32.mrb[0].mxu0
        %1872 = vdwg.mxu0
        %v1874 = vsel %vm1186, %v1772, 0
        %v1877 = vsel %vm1781, %v1776, 0
        %1879 = vmatprep.subr.bf16.mxu0 0
        %1880 = vmatpush1.bf16.msra.mxu0 %v1877
        %1881 = vmatprep.subr.bf16.mxu0 0
        %1882 = vmatpush1.bf16.msra.mxu0 0
        %1883 = vmatprep.subr.bf16.mxu0 0
        %1884 = vmatpush1.bf16.msra.mxu0 0
        %1885 = vmatprep.subr.bf16.mxu0 0
        %1886 = vmatpush1.bf16.msra.mxu0 0
        %1887 = vmatprep.subr.bf16.mxu0 0
        %1888 = vmatpush1.bf16.msra.mxu0 0
        %1889 = vmatprep.subr.bf16.mxu0 0
        %1890 = vmatpush1.bf16.msra.mxu0 0
        %1891 = vmatprep.subr.bf16.mxu0 0
        %1892 = vmatpush1.bf16.msra.mxu0 0
        %1893 = vmatprep.subr.bf16.mxu0 0
        %1894 = vmatpush1.bf16.msra.mxu0 0
        %1895 = vmatprep.subr.bf16.mxu0 0
        %1896 = vmatpush1.bf16.msra.mxu0 0
        %1897 = vmatprep.subr.bf16.mxu0 0
        %1898 = vmatpush1.bf16.msra.mxu0 0
        %1899 = vmatprep.subr.bf16.mxu0 0
        %1900 = vmatpush1.bf16.msra.mxu0 0
        %1901 = vmatprep.subr.bf16.mxu0 0
        %1902 = vmatpush1.bf16.msra.mxu0 0
        %1903 = vmatprep.subr.bf16.mxu0 0
        %1904 = vmatpush1.bf16.msra.mxu0 0
        %1905 = vmatprep.subr.bf16.mxu0 0
        %1906 = vmatpush1.bf16.msra.mxu0 0
        %1907 = vmatprep.subr.bf16.mxu0 0
        %1908 = vmatpush1.bf16.msra.mxu0 0
        %1909 = vmatprep.subr.bf16.mxu0 0
        %1910 = vmatpush1.bf16.msra.mxu0 0
        %1911 = vmatprep.mubr.bf16.mxu0 0
        %1912 = vmatmul.mubr.bf16.gmra.mrb[0].mxu0 %v1874
        %v1913 = vpop.f32.mrb[0].mxu0
        %v1914 = vadd.f32 0.0, %v1913
        %v1915 = vpop.f32.mrb[0].mxu0
        %v1916 = vpop.f32.mrb[0].mxu0
        %v1917 = vadd.f32 0.0, %v1916
        %v1918 = vpop.f32.mrb[0].mxu0
        %1919 = vdwg.mxu0
        %v1921 = vsel %vm1186, %v1773, 0
        %v1924 = vsel %vm1781, %v1777, 0
        %1926 = vmatprep.subr.bf16.mxu0 0
        %1927 = vmatpush1.bf16.msra.mxu0 %v1924
        %1928 = vmatprep.subr.bf16.mxu0 0
        %1929 = vmatpush1.bf16.msra.mxu0 0
        %1930 = vmatprep.subr.bf16.mxu0 0
        %1931 = vmatpush1.bf16.msra.mxu0 0
        %1932 = vmatprep.subr.bf16.mxu0 0
        %1933 = vmatpush1.bf16.msra.mxu0 0
        %1934 = vmatprep.subr.bf16.mxu0 0
        %1935 = vmatpush1.bf16.msra.mxu0 0
        %1936 = vmatprep.subr.bf16.mxu0 0
        %1937 = vmatpush1.bf16.msra.mxu0 0
        %1938 = vmatprep.subr.bf16.mxu0 0
        %1939 = vmatpush1.bf16.msra.mxu0 0
        %1940 = vmatprep.subr.bf16.mxu0 0
        %1941 = vmatpush1.bf16.msra.mxu0 0
        %1942 = vmatprep.subr.bf16.mxu0 0
        %1943 = vmatpush1.bf16.msra.mxu0 0
        %1944 = vmatprep.subr.bf16.mxu0 0
        %1945 = vmatpush1.bf16.msra.mxu0 0
        %1946 = vmatprep.subr.bf16.mxu0 0
        %1947 = vmatpush1.bf16.msra.mxu0 0
        %1948 = vmatprep.subr.bf16.mxu0 0
        %1949 = vmatpush1.bf16.msra.mxu0 0
        %1950 = vmatprep.subr.bf16.mxu0 0
        %1951 = vmatpush1.bf16.msra.mxu0 0
        %1952 = vmatprep.subr.bf16.mxu0 0
        %1953 = vmatpush1.bf16.msra.mxu0 0
        %1954 = vmatprep.subr.bf16.mxu0 0
        %1955 = vmatpush1.bf16.msra.mxu0 0
        %1956 = vmatprep.subr.bf16.mxu0 0
        %1957 = vmatpush1.bf16.msra.mxu0 0
        %1958 = vmatprep.mubr.bf16.mxu0 0
        %1959 = vmatmul.mubr.bf16.gmra.mrb[0].mxu0 %v1921
        %v1960 = vpop.f32.mrb[0].mxu0
        %v1961 = vadd.f32 0.0, %v1960
        %v1962 = vpop.f32.mrb[0].mxu0
        %v1963 = vpop.f32.mrb[0].mxu0
        %v1964 = vadd.f32 0.0, %v1963
        %v1965 = vpop.f32.mrb[0].mxu0
        %1966 = vdwg.mxu0
        %v1967 = vsel %vm1065, %v1820, 0.0
        %v1968 = vsel %vm1065, %v1867, 0.0
        %v1969 = vadd.f32 %v1967, %v1968
        %v1970 = vsel %vm1065, %v1914, 0.0
        %v1971 = vadd.f32 %v1969, %v1970
        %v1972 = vsel %vm1065, %v1961, 0.0
        %v1973 = vadd.f32 %v1971, %v1972
        %v1974 = vsel %vm1065, %v1823, 0.0
        %v1975 = vsel %vm1065, %v1870, 0.0
        %v1976 = vadd.f32 %v1974, %v1975
        %v1977 = vsel %vm1065, %v1917, 0.0
        %v1978 = vadd.f32 %v1976, %v1977
        %v1979 = vsel %vm1065, %v1964, 0.0
        %v1980 = vadd.f32 %v1978, %v1979
        %v1981 = vld [vmem:[#allocation14] sm:$0x1]
        %v1983 = vlaneseq
        %v1984 = vshrl.u32 %v1983, 7
        %v1985 = vsub.s32 0, %v1984
        %v1986 = vrot.slane %v1981, %v1985
        %v1988 = vadd.f32 %v1973, %v1986
        %v1989 = vadd.f32 %v1980, %v1986
        %v1990 = vadd.f32 %v1060, %v1988
        %v1991 = vadd.f32 %v1061, %v1989
        %v1992 = vld [vmem:[#allocation21] sm:$0x1]
        %v1993 = vld [vmem:[#allocation23] sm:$0x1]
        %v1994 = vsel %vm1065, %v1990, 0.0
        %1995 = vadd.xlane.f32.xlu0 %v1994
        %v1996 = vpop.xlane.xlu0 %1995
        %v1997 = vsel %vm1065, %v1991, 0.0
        %1998 = vadd.xlane.f32.xlu0 %v1997
        %v1999 = vpop.xlane.xlu0 %1998
        %v2000 = vmul.f32 %v1996, %v1072
        %v2001 = vmul.f32 %v1999, %v1072
        %v2002 = vsub.f32 %v1990, %v2000
        %v2003 = vsub.f32 %v1991, %v2001
        %v2004 = vmul.f32 %v2002, %v2002
        %v2005 = vmul.f32 %v2003, %v2003
        %v2006 = vsel %vm1065, %v2004, 0.0
        %2007 = vadd.xlane.f32.xlu0 %v2006
        %v2008 = vpop.xlane.xlu0 %2007
        %v2009 = vsel %vm1065, %v2005, 0.0
        %2010 = vadd.xlane.f32.xlu0 %v2009
        %v2011 = vpop.xlane.xlu0 %2010
        %v2012 = vmul.f32 %v2008, %v1072
        %v2013 = vmul.f32 %v2011, %v1072
        %v2014 = vadd.f32 %v2012, 1e-08
        %v2015 = vadd.f32 %v2013, 1e-08
        %v2016 = vrsqrt.pop %v2014
        %v2017 = vrsqrt.pop %v2015
        %v2018 = vmul.f32 %v2002, %v2016
        %v2019 = vmul.f32 %v2003, %v2017
        %v2021 = vlaneseq
        %v2022 = vshrl.u32 %v2021, 7
        %v2023 = vsub.s32 0, %v2022
        %v2024 = vrot.slane %v1992, %v2023
        %v2026 = vmul.f32 %v2018, %v2024
        %v2027 = vmul.f32 %v2019, %v2024
        %v2029 = vlaneseq
        %v2030 = vshrl.u32 %v2029, 7
        %v2031 = vsub.s32 0, %v2030
        %v2032 = vrot.slane %v1993, %v2031
        %v2034 = vadd.f32 %v2026, %v2032
        %v2035 = vadd.f32 %v2027, %v2032
        %v2036 = vpack.c.bf16 %v2035, %v2034
        %v2037 = vld [vmem:[%s9] sm:$0xf]
        %v2038 = vld [vmem:[%s9 + $0x4] sm:$0xf]
        %v2039 = vld [vmem:[%s9 + $0x8] sm:$0xf]
        %v2040 = vld [vmem:[%s9 + $0xc] sm:$0xf]
        %v2041 = vld [vmem:[#allocation18] sm:$0x1]
        %v2043 = vlaneseq
        %v2044 = vshrl.u32 %v2043, 7
        %v2045 = vsub.s32 0, %v2044
        %v2046 = vrot.slane %v2041, %v2045
        %v2052 = vunpack.c.l.b16 %v2037
        %v2053 = vunpack.c.l.b16 %v2038
        %v2054 = vunpack.c.l.b16 %v2039
        %v2055 = vunpack.c.l.b16 %v2040
        %v2056 = vpack.c.b16 %v2053, %v2052
        %v2057 = vpack.c.b16 %v2055, %v2054
        %v2061 = vsel %vm1065, %v2036, 0
        %2063 = vmatprep.subr.bf16.mxu0 0
        %2064 = vmatpush1.bf16.msra.mxu0 %v2056
        %2065 = vmatprep.subr.bf16.mxu0 0
        %2066 = vmatpush1.bf16.msra.mxu0 %v2057
        %2067 = vmatprep.subr.bf16.mxu0 0
        %2068 = vmatpush1.bf16.msra.mxu0 0
        %2069 = vmatprep.subr.bf16.mxu0 0
        %2070 = vmatpush1.bf16.msra.mxu0 0
        %2071 = vmatprep.subr.bf16.mxu0 0
        %2072 = vmatpush1.bf16.msra.mxu0 0
        %2073 = vmatprep.subr.bf16.mxu0 0
        %2074 = vmatpush1.bf16.msra.mxu0 0
        %2075 = vmatprep.subr.bf16.mxu0 0
        %2076 = vmatpush1.bf16.msra.mxu0 0
        %2077 = vmatprep.subr.bf16.mxu0 0
        %2078 = vmatpush1.bf16.msra.mxu0 0
        %2079 = vmatprep.subr.bf16.mxu0 0
        %2080 = vmatpush1.bf16.msra.mxu0 0
        %2081 = vmatprep.subr.bf16.mxu0 0
        %2082 = vmatpush1.bf16.msra.mxu0 0
        %2083 = vmatprep.subr.bf16.mxu0 0
        %2084 = vmatpush1.bf16.msra.mxu0 0
        %2085 = vmatprep.subr.bf16.mxu0 0
        %2086 = vmatpush1.bf16.msra.mxu0 0
        %2087 = vmatprep.subr.bf16.mxu0 0
        %2088 = vmatpush1.bf16.msra.mxu0 0
        %2089 = vmatprep.subr.bf16.mxu0 0
        %2090 = vmatpush1.bf16.msra.mxu0 0
        %2091 = vmatprep.subr.bf16.mxu0 0
        %2092 = vmatpush1.bf16.msra.mxu0 0
        %2093 = vmatprep.subr.bf16.mxu0 0
        %2094 = vmatpush1.bf16.msra.mxu0 0
        %2095 = vmatprep.mubr.bf16.mxu0 0
        %2096 = vmatmul.mubr.bf16.gmra.mrb[0].mxu0 %v2061
        %v2097 = vpop.f32.mrb[0].mxu0
        %v2098 = vadd.f32 %v2046, %v2097
        %v2099 = vpop.f32.mrb[0].mxu0
        %v2100 = vpop.f32.mrb[0].mxu0
        %v2101 = vadd.f32 %v2046, %v2100
        %v2102 = vpop.f32.mrb[0].mxu0
        %2103 = vdwg.mxu0
        %2106 = vrot.lane.b32.xlu0 %v2098, 120
        %v2107 = vpop.permute.xlu0 %2106
        %2108 = vrot.lane.b32.xlu0 %v2101, 120
        %v2109 = vpop.permute.xlu0 %2108
        %2112 = vrot.lane.b32.xlu0 %v2098, 112
        %v2113 = vpop.permute.xlu0 %2112
        %2114 = vrot.lane.b32.xlu0 %v2101, 112
        %v2115 = vpop.permute.xlu0 %2114
        %2118 = vrot.lane.b32.xlu0 %v2098, 104
        %v2119 = vpop.permute.xlu0 %2118
        %2120 = vrot.lane.b32.xlu0 %v2101, 104
        %v2121 = vpop.permute.xlu0 %2120
        %v2124 = vpack.c.bf16 %v2101, %v2098
        %v2125 = vpack.c.bf16 %v2109, %v2107
        %v2126 = vpack.c.bf16 %v2115, %v2113
        %v2127 = vpack.c.bf16 %v2121, %v2119
        %v2128 = vld [vmem:[#allocation4] sm:$0xf]
        %v2129 = vld [vmem:[#allocation4 + $0x4] sm:$0xf]
        %v2130 = vld [vmem:[#allocation4 + $0x8] sm:$0xf]
        %v2131 = vld [vmem:[#allocation4 + $0xc] sm:$0xf]
        %v2133 = vsel %vm1186, %v2124, 0
        %v2136 = vsel %vm1186, %v2128, 0
        %2138 = vmatprep.subr.bf16.mxu0 0
        %2139 = vmatpush1.bf16.xpose.msra.mxu0 %v2136
        %2140 = vmatprep.subr.bf16.mxu0 0
        %2141 = vmatpush1.bf16.xpose.msra.mxu0 0
        %2142 = vmatprep.subr.bf16.mxu0 0
        %2143 = vmatpush1.bf16.xpose.msra.mxu0 0
        %2144 = vmatprep.subr.bf16.mxu0 0
        %2145 = vmatpush1.bf16.xpose.msra.mxu0 0
        %2146 = vmatprep.subr.bf16.mxu0 0
        %2147 = vmatpush1.bf16.xpose.msra.mxu0 0
        %2148 = vmatprep.subr.bf16.mxu0 0
        %2149 = vmatpush1.bf16.xpose.msra.mxu0 0
        %2150 = vmatprep.subr.bf16.mxu0 0
        %2151 = vmatpush1.bf16.xpose.msra.mxu0 0
        %2152 = vmatprep.subr.bf16.mxu0 0
        %2153 = vmatpush1.bf16.xpose.msra.mxu0 0
        %2154 = vmatprep.subr.bf16.mxu0 0
        %2155 = vmatpush1.bf16.xpose.msra.mxu0 0
        %2156 = vmatprep.subr.bf16.mxu0 0
        %2157 = vmatpush1.bf16.xpose.msra.mxu0 0
        %2158 = vmatprep.subr.bf16.mxu0 0
        %2159 = vmatpush1.bf16.xpose.msra.mxu0 0
        %2160 = vmatprep.subr.bf16.mxu0 0
        %2161 = vmatpush1.bf16.xpose.msra.mxu0 0
        %2162 = vmatprep.subr.bf16.mxu0 0
        %2163 = vmatpush1.bf16.xpose.msra.mxu0 0
        %2164 = vmatprep.subr.bf16.mxu0 0
        %2165 = vmatpush1.bf16.xpose.msra.mxu0 0
        %2166 = vmatprep.subr.bf16.mxu0 0
        %2167 = vmatpush1.bf16.xpose.msra.mxu0 0
        %2168 = vmatprep.subr.bf16.mxu0 0
        %2169 = vmatpush1.bf16.xpose.msra.mxu0 0
        %2170 = vmatprep.mubr.bf16.mxu0 0
        %2171 = vmatmul.mubr.bf16.gmra.mrb[0].mxu0 %v2133
        %v2172 = vpop.f32.mrb[0].mxu0
        %v2173 = vadd.f32 0.0, %v2172
        %v2174 = vpop.f32.mrb[0].mxu0
        %v2175 = vpop.f32.mrb[0].mxu0
        %v2176 = vadd.f32 0.0, %v2175
        %v2177 = vpop.f32.mrb[0].mxu0
        %2178 = vdwg.mxu0
        %v2180 = vsel %vm1186, %v2125, 0
        %v2183 = vsel %vm1186, %v2129, 0
        %2185 = vmatprep.subr.bf16.mxu0 0
        %2186 = vmatpush1.bf16.xpose.msra.mxu0 %v2183
        %2187 = vmatprep.subr.bf16.mxu0 0
        %2188 = vmatpush1.bf16.xpose.msra.mxu0 0
        %2189 = vmatprep.subr.bf16.mxu0 0
        %2190 = vmatpush1.bf16.xpose.msra.mxu0 0
        %2191 = vmatprep.subr.bf16.mxu0 0
        %2192 = vmatpush1.bf16.xpose.msra.mxu0 0
        %2193 = vmatprep.subr.bf16.mxu0 0
        %2194 = vmatpush1.bf16.xpose.msra.mxu0 0
        %2195 = vmatprep.subr.bf16.mxu0 0
        %2196 = vmatpush1.bf16.xpose.msra.mxu0 0
        %2197 = vmatprep.subr.bf16.mxu0 0
        %2198 = vmatpush1.bf16.xpose.msra.mxu0 0
        %2199 = vmatprep.subr.bf16.mxu0 0
        %2200 = vmatpush1.bf16.xpose.msra.mxu0 0
        %2201 = vmatprep.subr.bf16.mxu0 0
        %2202 = vmatpush1.bf16.xpose.msra.mxu0 0
        %2203 = vmatprep.subr.bf16.mxu0 0
        %2204 = vmatpush1.bf16.xpose.msra.mxu0 0
        %2205 = vmatprep.subr.bf16.mxu0 0
        %2206 = vmatpush1.bf16.xpose.msra.mxu0 0
        %2207 = vmatprep.subr.bf16.mxu0 0
        %2208 = vmatpush1.bf16.xpose.msra.mxu0 0
        %2209 = vmatprep.subr.bf16.mxu0 0
        %2210 = vmatpush1.bf16.xpose.msra.mxu0 0
        %2211 = vmatprep.subr.bf16.mxu0 0
        %2212 = vmatpush1.bf16.xpose.msra.mxu0 0
        %2213 = vmatprep.subr.bf16.mxu0 0
        %2214 = vmatpush1.bf16.xpose.msra.mxu0 0
        %2215 = vmatprep.subr.bf16.mxu0 0
        %2216 = vmatpush1.bf16.xpose.msra.mxu0 0
        %2217 = vmatprep.mubr.bf16.mxu0 0
        %2218 = vmatmul.mubr.bf16.gmra.mrb[0].mxu0 %v2180
        %v2219 = vpop.f32.mrb[0].mxu0
        %v2220 = vadd.f32 0.0, %v2219
        %v2221 = vpop.f32.mrb[0].mxu0
        %v2222 = vpop.f32.mrb[0].mxu0
        %v2223 = vadd.f32 0.0, %v2222
        %v2224 = vpop.f32.mrb[0].mxu0
        %2225 = vdwg.mxu0
        %v2227 = vsel %vm1186, %v2126, 0
        %v2230 = vsel %vm1186, %v2130, 0
        %2232 = vmatprep.subr.bf16.mxu0 0
        %2233 = vmatpush1.bf16.xpose.msra.mxu0 %v2230
        %2234 = vmatprep.subr.bf16.mxu0 0
        %2235 = vmatpush1.bf16.xpose.msra.mxu0 0
        %2236 = vmatprep.subr.bf16.mxu0 0
        %2237 = vmatpush1.bf16.xpose.msra.mxu0 0
        %2238 = vmatprep.subr.bf16.mxu0 0
        %2239 = vmatpush1.bf16.xpose.msra.mxu0 0
        %2240 = vmatprep.subr.bf16.mxu0 0
        %2241 = vmatpush1.bf16.xpose.msra.mxu0 0
        %2242 = vmatprep.subr.bf16.mxu0 0
        %2243 = vmatpush1.bf16.xpose.msra.mxu0 0
        %2244 = vmatprep.subr.bf16.mxu0 0
        %2245 = vmatpush1.bf16.xpose.msra.mxu0 0
        %2246 = vmatprep.subr.bf16.mxu0 0
        %2247 = vmatpush1.bf16.xpose.msra.mxu0 0
        %2248 = vmatprep.subr.bf16.mxu0 0
        %2249 = vmatpush1.bf16.xpose.msra.mxu0 0
        %2250 = vmatprep.subr.bf16.mxu0 0
        %2251 = vmatpush1.bf16.xpose.msra.mxu0 0
        %2252 = vmatprep.subr.bf16.mxu0 0
        %2253 = vmatpush1.bf16.xpose.msra.mxu0 0
        %2254 = vmatprep.subr.bf16.mxu0 0
        %2255 = vmatpush1.bf16.xpose.msra.mxu0 0
        %2256 = vmatprep.subr.bf16.mxu0 0
        %2257 = vmatpush1.bf16.xpose.msra.mxu0 0
        %2258 = vmatprep.subr.bf16.mxu0 0
        %2259 = vmatpush1.bf16.xpose.msra.mxu0 0
        %2260 = vmatprep.subr.bf16.mxu0 0
        %2261 = vmatpush1.bf16.xpose.msra.mxu0 0
        %2262 = vmatprep.subr.bf16.mxu0 0
        %2263 = vmatpush1.bf16.xpose.msra.mxu0 0
        %2264 = vmatprep.mubr.bf16.mxu0 0
        %2265 = vmatmul.mubr.bf16.gmra.mrb[0].mxu0 %v2227
        %v2266 = vpop.f32.mrb[0].mxu0
        %v2267 = vadd.f32 0.0, %v2266
        %v2268 = vpop.f32.mrb[0].mxu0
        %v2269 = vpop.f32.mrb[0].mxu0
        %v2270 = vadd.f32 0.0, %v2269
        %v2271 = vpop.f32.mrb[0].mxu0
        %2272 = vdwg.mxu0
        %v2274 = vsel %vm1186, %v2127, 0
        %v2277 = vsel %vm1186, %v2131, 0
        %2279 = vmatprep.subr.bf16.mxu0 0
        %2280 = vmatpush1.bf16.xpose.msra.mxu0 %v2277
        %2281 = vmatprep.subr.bf16.mxu0 0
        %2282 = vmatpush1.bf16.xpose.msra.mxu0 0
        %2283 = vmatprep.subr.bf16.mxu0 0
        %2284 = vmatpush1.bf16.xpose.msra.mxu0 0
        %2285 = vmatprep.subr.bf16.mxu0 0
        %2286 = vmatpush1.bf16.xpose.msra.mxu0 0
        %2287 = vmatprep.subr.bf16.mxu0 0
        %2288 = vmatpush1.bf16.xpose.msra.mxu0 0
        %2289 = vmatprep.subr.bf16.mxu0 0
        %2290 = vmatpush1.bf16.xpose.msra.mxu0 0
        %2291 = vmatprep.subr.bf16.mxu0 0
        %2292 = vmatpush1.bf16.xpose.msra.mxu0 0
        %2293 = vmatprep.subr.bf16.mxu0 0
        %2294 = vmatpush1.bf16.xpose.msra.mxu0 0
        %2295 = vmatprep.subr.bf16.mxu0 0
        %2296 = vmatpush1.bf16.xpose.msra.mxu0 0
        %2297 = vmatprep.subr.bf16.mxu0 0
        %2298 = vmatpush1.bf16.xpose.msra.mxu0 0
        %2299 = vmatprep.subr.bf16.mxu0 0
        %2300 = vmatpush1.bf16.xpose.msra.mxu0 0
        %2301 = vmatprep.subr.bf16.mxu0 0
        %2302 = vmatpush1.bf16.xpose.msra.mxu0 0
        %2303 = vmatprep.subr.bf16.mxu0 0
        %2304 = vmatpush1.bf16.xpose.msra.mxu0 0
        %2305 = vmatprep.subr.bf16.mxu0 0
        %2306 = vmatpush1.bf16.xpose.msra.mxu0 0
        %2307 = vmatprep.subr.bf16.mxu0 0
        %2308 = vmatpush1.bf16.xpose.msra.mxu0 0
        %2309 = vmatprep.subr.bf16.mxu0 0
        %2310 = vmatpush1.bf16.xpose.msra.mxu0 0
        %2311 = vmatprep.mubr.bf16.mxu0 0
        %2312 = vmatmul.mubr.bf16.gmra.mrb[0].mxu0 %v2274
        %v2313 = vpop.f32.mrb[0].mxu0
        %v2314 = vadd.f32 0.0, %v2313
        %v2315 = vpop.f32.mrb[0].mxu0
        %v2316 = vpop.f32.mrb[0].mxu0
        %v2317 = vadd.f32 0.0, %v2316
        %v2318 = vpop.f32.mrb[0].mxu0
        %2319 = vdwg.mxu0
        %v2320 = vmul.f32 %v2173, 0.35355338
        %v2321 = vmul.f32 %v2176, 0.35355338
        %v2322 = vmul.f32 %v2220, 0.35355338
        %v2323 = vmul.f32 %v2223, 0.35355338
        %v2324 = vmul.f32 %v2267, 0.35355338
        %v2325 = vmul.f32 %v2270, 0.35355338
        %v2326 = vmul.f32 %v2314, 0.35355338
        %v2327 = vmul.f32 %v2317, 0.35355338
        %v2328 = vld [vmem:[%s820] sm:$0x1]
        %v2330 = vlaneseq
        %v2331 = vshrl.u32 %v2330, 7
        %v2332 = vsub.s32 0, %v2331
        %v2333 = vrot.slane %v2328, %v2332
        %v2335 = vadd.f32 %v2320, %v2333
        %v2336 = vadd.f32 %v2321, %v2333
        %v2337 = vadd.f32 %v2322, %v2333
        %v2338 = vadd.f32 %v2323, %v2333
        %v2339 = vadd.f32 %v2324, %v2333
        %v2340 = vadd.f32 %v2325, %v2333
        %v2341 = vadd.f32 %v2326, %v2333
        %v2342 = vadd.f32 %v2327, %v2333
        %v2343 = vsel %vm1186, %v2335, -inf
        %2344 = vmax.xlane.f32.xlu0 %v2343
        %v2345 = vpop.xlane.xlu0 %2344
        %v2346 = vsel %vm1186, %v2336, -inf
        %2347 = vmax.xlane.f32.xlu0 %v2346
        %v2348 = vpop.xlane.xlu0 %2347
        %v2349 = vsel %vm1186, %v2337, -inf
        %2350 = vmax.xlane.f32.xlu0 %v2349
        %v2351 = vpop.xlane.xlu0 %2350
        %v2352 = vsel %vm1186, %v2338, -inf
        %2353 = vmax.xlane.f32.xlu0 %v2352
        %v2354 = vpop.xlane.xlu0 %2353
        %v2355 = vsel %vm1186, %v2339, -inf
        %2356 = vmax.xlane.f32.xlu0 %v2355
        %v2357 = vpop.xlane.xlu0 %2356
        %v2358 = vsel %vm1186, %v2340, -inf
        %2359 = vmax.xlane.f32.xlu0 %v2358
        %v2360 = vpop.xlane.xlu0 %2359
        %v2361 = vsel %vm1186, %v2341, -inf
        %2362 = vmax.xlane.f32.xlu0 %v2361
        %v2363 = vpop.xlane.xlu0 %2362
        %v2364 = vsel %vm1186, %v2342, -inf
        %2365 = vmax.xlane.f32.xlu0 %v2364
        %v2366 = vpop.xlane.xlu0 %2365
        %v2367 = vsub.f32 %v2335, %v2345
        %v2368 = vsub.f32 %v2336, %v2348
        %v2369 = vsub.f32 %v2337, %v2351
        %v2370 = vsub.f32 %v2338, %v2354
        %v2371 = vsub.f32 %v2339, %v2357
        %v2372 = vsub.f32 %v2340, %v2360
        %v2373 = vsub.f32 %v2341, %v2363
        %v2374 = vsub.f32 %v2342, %v2366
        %v2375 = vmul.f32 %v2367, 1.442695
        %v2376 = vpow.pop %v2375
        %v2377 = vmul.f32 %v2368, 1.442695
        %v2378 = vpow.pop %v2377
        %v2379 = vmul.f32 %v2369, 1.442695
        %v2380 = vpow.pop %v2379
        %v2381 = vmul.f32 %v2370, 1.442695
        %v2382 = vpow.pop %v2381
        %v2383 = vmul.f32 %v2371, 1.442695
        %v2384 = vpow.pop %v2383
        %v2385 = vmul.f32 %v2372, 1.442695
        %v2386 = vpow.pop %v2385
        %v2387 = vmul.f32 %v2373, 1.442695
        %v2388 = vpow.pop %v2387
        %v2389 = vmul.f32 %v2374, 1.442695
        %v2390 = vpow.pop %v2389
        %v2391 = vsel %vm1186, %v2376, 0.0
        %2392 = vadd.xlane.f32.xlu0 %v2391
        %v2393 = vpop.xlane.xlu0 %2392
        %v2394 = vsel %vm1186, %v2378, 0.0
        %2395 = vadd.xlane.f32.xlu0 %v2394
        %v2396 = vpop.xlane.xlu0 %2395
        %v2397 = vsel %vm1186, %v2380, 0.0
        %2398 = vadd.xlane.f32.xlu0 %v2397
        %v2399 = vpop.xlane.xlu0 %2398
        %v2400 = vsel %vm1186, %v2382, 0.0
        %2401 = vadd.xlane.f32.xlu0 %v2400
        %v2402 = vpop.xlane.xlu0 %2401
        %v2403 = vsel %vm1186, %v2384, 0.0
        %2404 = vadd.xlane.f32.xlu0 %v2403
        %v2405 = vpop.xlane.xlu0 %2404
        %v2406 = vsel %vm1186, %v2386, 0.0
        %2407 = vadd.xlane.f32.xlu0 %v2406
        %v2408 = vpop.xlane.xlu0 %2407
        %v2409 = vsel %vm1186, %v2388, 0.0
        %2410 = vadd.xlane.f32.xlu0 %v2409
        %v2411 = vpop.xlane.xlu0 %2410
        %v2412 = vsel %vm1186, %v2390, 0.0
        %2413 = vadd.xlane.f32.xlu0 %v2412
        %v2414 = vpop.xlane.xlu0 %2413
        %v2415 = vrcp.pop %v2393
        %v2416 = vrcp.pop %v2396
        %v2417 = vrcp.pop %v2399
        %v2418 = vrcp.pop %v2402
        %v2419 = vrcp.pop %v2405
        %v2420 = vrcp.pop %v2408
        %v2421 = vrcp.pop %v2411
        %v2422 = vrcp.pop %v2414
        %v2423 = vmul.f32 %v2376, %v2415
        %v2424 = vmul.f32 %v2378, %v2416
        %v2425 = vmul.f32 %v2380, %v2417
        %v2426 = vmul.f32 %v2382, %v2418
        %v2427 = vmul.f32 %v2384, %v2419
        %v2428 = vmul.f32 %v2386, %v2420
        %v2429 = vmul.f32 %v2388, %v2421
        %v2430 = vmul.f32 %v2390, %v2422
        %v2431 = vpack.c.bf16 %v2424, %v2423
        %v2432 = vpack.c.bf16 %v2426, %v2425
        %v2433 = vpack.c.bf16 %v2428, %v2427
        %v2434 = vpack.c.bf16 %v2430, %v2429
        %v2435 = vld [vmem:[#allocation5] sm:$0xf]
        %v2436 = vld [vmem:[#allocation5 + $0x4] sm:$0xf]
        %v2437 = vld [vmem:[#allocation5 + $0x8] sm:$0xf]
        %v2438 = vld [vmem:[#allocation5 + $0xc] sm:$0xf]
        %v2440 = vsel %vm1186, %v2431, 0
        %v2443 = vsel %vm1781, %v2435, 0
        %2445 = vmatprep.subr.bf16.mxu0 0
        %2446 = vmatpush1.bf16.msra.mxu0 %v2443
        %2447 = vmatprep.subr.bf16.mxu0 0
        %2448 = vmatpush1.bf16.msra.mxu0 0
        %2449 = vmatprep.subr.bf16.mxu0 0
        %2450 = vmatpush1.bf16.msra.mxu0 0
        %2451 = vmatprep.subr.bf16.mxu0 0
        %2452 = vmatpush1.bf16.msra.mxu0 0
        %2453 = vmatprep.subr.bf16.mxu0 0
        %2454 = vmatpush1.bf16.msra.mxu0 0
        %2455 = vmatprep.subr.bf16.mxu0 0
        %2456 = vmatpush1.bf16.msra.mxu0 0
        %2457 = vmatprep.subr.bf16.mxu0 0
        %2458 = vmatpush1.bf16.msra.mxu0 0
        %2459 = vmatprep.subr.bf16.mxu0 0
        %2460 = vmatpush1.bf16.msra.mxu0 0
        %2461 = vmatprep.subr.bf16.mxu0 0
        %2462 = vmatpush1.bf16.msra.mxu0 0
        %2463 = vmatprep.subr.bf16.mxu0 0
        %2464 = vmatpush1.bf16.msra.mxu0 0
        %2465 = vmatprep.subr.bf16.mxu0 0
        %2466 = vmatpush1.bf16.msra.mxu0 0
        %2467 = vmatprep.subr.bf16.mxu0 0
        %2468 = vmatpush1.bf16.msra.mxu0 0
        %2469 = vmatprep.subr.bf16.mxu0 0
        %2470 = vmatpush1.bf16.msra.mxu0 0
        %2471 = vmatprep.subr.bf16.mxu0 0
        %2472 = vmatpush1.bf16.msra.mxu0 0
        %2473 = vmatprep.subr.bf16.mxu0 0
        %2474 = vmatpush1.bf16.msra.mxu0 0
        %2475 = vmatprep.subr.bf16.mxu0 0
        %2476 = vmatpush1.bf16.msra.mxu0 0
        %2477 = vmatprep.mubr.bf16.mxu0 0
        %2478 = vmatmul.mubr.bf16.gmra.mrb[0].mxu0 %v2440
        %v2479 = vpop.f32.mrb[0].mxu0
        %v2480 = vadd.f32 0.0, %v2479
        %v2481 = vpop.f32.mrb[0].mxu0
        %v2482 = vpop.f32.mrb[0].mxu0
        %v2483 = vadd.f32 0.0, %v2482
        %v2484 = vpop.f32.mrb[0].mxu0
        %2485 = vdwg.mxu0
        %v2487 = vsel %vm1186, %v2432, 0
        %v2490 = vsel %vm1781, %v2436, 0
        %2492 = vmatprep.subr.bf16.mxu0 0
        %2493 = vmatpush1.bf16.msra.mxu0 %v2490
        %2494 = vmatprep.subr.bf16.mxu0 0
        %2495 = vmatpush1.bf16.msra.mxu0 0
        %2496 = vmatprep.subr.bf16.mxu0 0
        %2497 = vmatpush1.bf16.msra.mxu0 0
        %2498 = vmatprep.subr.bf16.mxu0 0
        %2499 = vmatpush1.bf16.msra.mxu0 0
        %2500 = vmatprep.subr.bf16.mxu0 0
        %2501 = vmatpush1.bf16.msra.mxu0 0
        %2502 = vmatprep.subr.bf16.mxu0 0
        %2503 = vmatpush1.bf16.msra.mxu0 0
        %2504 = vmatprep.subr.bf16.mxu0 0
        %2505 = vmatpush1.bf16.msra.mxu0 0
        %2506 = vmatprep.subr.bf16.mxu0 0
        %2507 = vmatpush1.bf16.msra.mxu0 0
        %2508 = vmatprep.subr.bf16.mxu0 0
        %2509 = vmatpush1.bf16.msra.mxu0 0
        %2510 = vmatprep.subr.bf16.mxu0 0
        %2511 = vmatpush1.bf16.msra.mxu0 0
        %2512 = vmatprep.subr.bf16.mxu0 0
        %2513 = vmatpush1.bf16.msra.mxu0 0
        %2514 = vmatprep.subr.bf16.mxu0 0
        %2515 = vmatpush1.bf16.msra.mxu0 0
        %2516 = vmatprep.subr.bf16.mxu0 0
        %2517 = vmatpush1.bf16.msra.mxu0 0
        %2518 = vmatprep.subr.bf16.mxu0 0
        %2519 = vmatpush1.bf16.msra.mxu0 0
        %2520 = vmatprep.subr.bf16.mxu0 0
        %2521 = vmatpush1.bf16.msra.mxu0 0
        %2522 = vmatprep.subr.bf16.mxu0 0
        %2523 = vmatpush1.bf16.msra.mxu0 0
        %2524 = vmatprep.mubr.bf16.mxu0 0
        %2525 = vmatmul.mubr.bf16.gmra.mrb[0].mxu0 %v2487
        %v2526 = vpop.f32.mrb[0].mxu0
        %v2527 = vadd.f32 0.0, %v2526
        %v2528 = vpop.f32.mrb[0].mxu0
        %v2529 = vpop.f32.mrb[0].mxu0
        %v2530 = vadd.f32 0.0, %v2529
        %v2531 = vpop.f32.mrb[0].mxu0
        %2532 = vdwg.mxu0
        %v2534 = vsel %vm1186, %v2433, 0
        %v2537 = vsel %vm1781, %v2437, 0
        %2539 = vmatprep.subr.bf16.mxu0 0
        %2540 = vmatpush1.bf16.msra.mxu0 %v2537
        %2541 = vmatprep.subr.bf16.mxu0 0
        %2542 = vmatpush1.bf16.msra.mxu0 0
        %2543 = vmatprep.subr.bf16.mxu0 0
        %2544 = vmatpush1.bf16.msra.mxu0 0
        %2545 = vmatprep.subr.bf16.mxu0 0
        %2546 = vmatpush1.bf16.msra.mxu0 0
        %2547 = vmatprep.subr.bf16.mxu0 0
        %2548 = vmatpush1.bf16.msra.mxu0 0
        %2549 = vmatprep.subr.bf16.mxu0 0
        %2550 = vmatpush1.bf16.msra.mxu0 0
        %2551 = vmatprep.subr.bf16.mxu0 0
        %2552 = vmatpush1.bf16.msra.mxu0 0
        %2553 = vmatprep.subr.bf16.mxu0 0
        %2554 = vmatpush1.bf16.msra.mxu0 0
        %2555 = vmatprep.subr.bf16.mxu0 0
        %2556 = vmatpush1.bf16.msra.mxu0 0
        %2557 = vmatprep.subr.bf16.mxu0 0
        %2558 = vmatpush1.bf16.msra.mxu0 0
        %2559 = vmatprep.subr.bf16.mxu0 0
        %2560 = vmatpush1.bf16.msra.mxu0 0
        %2561 = vmatprep.subr.bf16.mxu0 0
        %2562 = vmatpush1.bf16.msra.mxu0 0
        %2563 = vmatprep.subr.bf16.mxu0 0
        %2564 = vmatpush1.bf16.msra.mxu0 0
        %2565 = vmatprep.subr.bf16.mxu0 0
        %2566 = vmatpush1.bf16.msra.mxu0 0
        %2567 = vmatprep.subr.bf16.mxu0 0
        %2568 = vmatpush1.bf16.msra.mxu0 0
        %2569 = vmatprep.subr.bf16.mxu0 0
        %2570 = vmatpush1.bf16.msra.mxu0 0
        %2571 = vmatprep.mubr.bf16.mxu0 0
        %2572 = vmatmul.mubr.bf16.gmra.mrb[0].mxu0 %v2534
        %v2573 = vpop.f32.mrb[0].mxu0
        %v2574 = vadd.f32 0.0, %v2573
        %v2575 = vpop.f32.mrb[0].mxu0
        %v2576 = vpop.f32.mrb[0].mxu0
        %v2577 = vadd.f32 0.0, %v2576
        %v2578 = vpop.f32.mrb[0].mxu0
        %2579 = vdwg.mxu0
        %v2581 = vsel %vm1186, %v2434, 0
        %v2584 = vsel %vm1781, %v2438, 0
        %2586 = vmatprep.subr.bf16.mxu0 0
        %2587 = vmatpush1.bf16.msra.mxu0 %v2584
        %2588 = vmatprep.subr.bf16.mxu0 0
        %2589 = vmatpush1.bf16.msra.mxu0 0
        %2590 = vmatprep.subr.bf16.mxu0 0
        %2591 = vmatpush1.bf16.msra.mxu0 0
        %2592 = vmatprep.subr.bf16.mxu0 0
        %2593 = vmatpush1.bf16.msra.mxu0 0
        %2594 = vmatprep.subr.bf16.mxu0 0
        %2595 = vmatpush1.bf16.msra.mxu0 0
        %2596 = vmatprep.subr.bf16.mxu0 0
        %2597 = vmatpush1.bf16.msra.mxu0 0
        %2598 = vmatprep.subr.bf16.mxu0 0
        %2599 = vmatpush1.bf16.msra.mxu0 0
        %2600 = vmatprep.subr.bf16.mxu0 0
        %2601 = vmatpush1.bf16.msra.mxu0 0
        %2602 = vmatprep.subr.bf16.mxu0 0
        %2603 = vmatpush1.bf16.msra.mxu0 0
        %2604 = vmatprep.subr.bf16.mxu0 0
        %2605 = vmatpush1.bf16.msra.mxu0 0
        %2606 = vmatprep.subr.bf16.mxu0 0
        %2607 = vmatpush1.bf16.msra.mxu0 0
        %2608 = vmatprep.subr.bf16.mxu0 0
        %2609 = vmatpush1.bf16.msra.mxu0 0
        %2610 = vmatprep.subr.bf16.mxu0 0
        %2611 = vmatpush1.bf16.msra.mxu0 0
        %2612 = vmatprep.subr.bf16.mxu0 0
        %2613 = vmatpush1.bf16.msra.mxu0 0
        %2614 = vmatprep.subr.bf16.mxu0 0
        %2615 = vmatpush1.bf16.msra.mxu0 0
        %2616 = vmatprep.subr.bf16.mxu0 0
        %2617 = vmatpush1.bf16.msra.mxu0 0
        %2618 = vmatprep.mubr.bf16.mxu0 0
        %2619 = vmatmul.mubr.bf16.gmra.mrb[0].mxu0 %v2581
        %v2620 = vpop.f32.mrb[0].mxu0
        %v2621 = vadd.f32 0.0, %v2620
        %v2622 = vpop.f32.mrb[0].mxu0
        %v2623 = vpop.f32.mrb[0].mxu0
        %v2624 = vadd.f32 0.0, %v2623
        %v2625 = vpop.f32.mrb[0].mxu0
        %2626 = vdwg.mxu0
        %v2627 = vpack.c.bf16 %v2483, %v2480
        %v2628 = vpack.c.bf16 %v2530, %v2527
        %v2629 = vpack.c.bf16 %v2577, %v2574
        %v2630 = vpack.c.bf16 %v2624, %v2621
        %v2631 = vld [vmem:[%s11] sm:$0xf]
        %v2632 = vld [vmem:[%s11 + $0x4] sm:$0xf]
        %v2633 = vld [vmem:[%s11 + $0x8] sm:$0xf]
        %v2634 = vld [vmem:[%s11 + $0xc] sm:$0xf]
        %v2636 = vsel %vm1186, %v2627, 0
        %v2639 = vsel %vm1781, %v2631, 0
        %2641 = vmatprep.subr.bf16.mxu0 0
        %2642 = vmatpush1.bf16.msra.mxu0 %v2639
        %2643 = vmatprep.subr.bf16.mxu0 0
        %2644 = vmatpush1.bf16.msra.mxu0 0
        %2645 = vmatprep.subr.bf16.mxu0 0
        %2646 = vmatpush1.bf16.msra.mxu0 0
        %2647 = vmatprep.subr.bf16.mxu0 0
        %2648 = vmatpush1.bf16.msra.mxu0 0
        %2649 = vmatprep.subr.bf16.mxu0 0
        %2650 = vmatpush1.bf16.msra.mxu0 0
        %2651 = vmatprep.subr.bf16.mxu0 0
        %2652 = vmatpush1.bf16.msra.mxu0 0
        %2653 = vmatprep.subr.bf16.mxu0 0
        %2654 = vmatpush1.bf16.msra.mxu0 0
        %2655 = vmatprep.subr.bf16.mxu0 0
        %2656 = vmatpush1.bf16.msra.mxu0 0
        %2657 = vmatprep.subr.bf16.mxu0 0
        %2658 = vmatpush1.bf16.msra.mxu0 0
        %2659 = vmatprep.subr.bf16.mxu0 0
        %2660 = vmatpush1.bf16.msra.mxu0 0
        %2661 = vmatprep.subr.bf16.mxu0 0
        %2662 = vmatpush1.bf16.msra.mxu0 0
        %2663 = vmatprep.subr.bf16.mxu0 0
        %2664 = vmatpush1.bf16.msra.mxu0 0
        %2665 = vmatprep.subr.bf16.mxu0 0
        %2666 = vmatpush1.bf16.msra.mxu0 0
        %2667 = vmatprep.subr.bf16.mxu0 0
        %2668 = vmatpush1.bf16.msra.mxu0 0
        %2669 = vmatprep.subr.bf16.mxu0 0
        %2670 = vmatpush1.bf16.msra.mxu0 0
        %2671 = vmatprep.subr.bf16.mxu0 0
        %2672 = vmatpush1.bf16.msra.mxu0 0
        %2673 = vmatprep.mubr.bf16.mxu0 0
        %2674 = vmatmul.mubr.bf16.gmra.mrb[0].mxu0 %v2636
        %v2675 = vpop.f32.mrb[0].mxu0
        %v2676 = vadd.f32 0.0, %v2675
        %v2677 = vpop.f32.mrb[0].mxu0
        %v2678 = vpop.f32.mrb[0].mxu0
        %v2679 = vadd.f32 0.0, %v2678
        %v2680 = vpop.f32.mrb[0].mxu0
        %2681 = vdwg.mxu0
        %v2683 = vsel %vm1186, %v2628, 0
        %v2686 = vsel %vm1781, %v2632, 0
        %2688 = vmatprep.subr.bf16.mxu0 0
        %2689 = vmatpush1.bf16.msra.mxu0 %v2686
        %2690 = vmatprep.subr.bf16.mxu0 0
        %2691 = vmatpush1.bf16.msra.mxu0 0
        %2692 = vmatprep.subr.bf16.mxu0 0
        %2693 = vmatpush1.bf16.msra.mxu0 0
        %2694 = vmatprep.subr.bf16.mxu0 0
        %2695 = vmatpush1.bf16.msra.mxu0 0
        %2696 = vmatprep.subr.bf16.mxu0 0
        %2697 = vmatpush1.bf16.msra.mxu0 0
        %2698 = vmatprep.subr.bf16.mxu0 0
        %2699 = vmatpush1.bf16.msra.mxu0 0
        %2700 = vmatprep.subr.bf16.mxu0 0
        %2701 = vmatpush1.bf16.msra.mxu0 0
        %2702 = vmatprep.subr.bf16.mxu0 0
        %2703 = vmatpush1.bf16.msra.mxu0 0
        %2704 = vmatprep.subr.bf16.mxu0 0
        %2705 = vmatpush1.bf16.msra.mxu0 0
        %2706 = vmatprep.subr.bf16.mxu0 0
        %2707 = vmatpush1.bf16.msra.mxu0 0
        %2708 = vmatprep.subr.bf16.mxu0 0
        %2709 = vmatpush1.bf16.msra.mxu0 0
        %2710 = vmatprep.subr.bf16.mxu0 0
        %2711 = vmatpush1.bf16.msra.mxu0 0
        %2712 = vmatprep.subr.bf16.mxu0 0
        %2713 = vmatpush1.bf16.msra.mxu0 0
        %2714 = vmatprep.subr.bf16.mxu0 0
        %2715 = vmatpush1.bf16.msra.mxu0 0
        %2716 = vmatprep.subr.bf16.mxu0 0
        %2717 = vmatpush1.bf16.msra.mxu0 0
        %2718 = vmatprep.subr.bf16.mxu0 0
        %2719 = vmatpush1.bf16.msra.mxu0 0
        %2720 = vmatprep.mubr.bf16.mxu0 0
        %2721 = vmatmul.mubr.bf16.gmra.mrb[0].mxu0 %v2683
        %v2722 = vpop.f32.mrb[0].mxu0
        %v2723 = vadd.f32 0.0, %v2722
        %v2724 = vpop.f32.mrb[0].mxu0
        %v2725 = vpop.f32.mrb[0].mxu0
        %v2726 = vadd.f32 0.0, %v2725
        %v2727 = vpop.f32.mrb[0].mxu0
        %2728 = vdwg.mxu0
        %v2730 = vsel %vm1186, %v2629, 0
        %v2733 = vsel %vm1781, %v2633, 0
        %2735 = vmatprep.subr.bf16.mxu0 0
        %2736 = vmatpush1.bf16.msra.mxu0 %v2733
        %2737 = vmatprep.subr.bf16.mxu0 0
        %2738 = vmatpush1.bf16.msra.mxu0 0
        %2739 = vmatprep.subr.bf16.mxu0 0
        %2740 = vmatpush1.bf16.msra.mxu0 0
        %2741 = vmatprep.subr.bf16.mxu0 0
        %2742 = vmatpush1.bf16.msra.mxu0 0
        %2743 = vmatprep.subr.bf16.mxu0 0
        %2744 = vmatpush1.bf16.msra.mxu0 0
        %2745 = vmatprep.subr.bf16.mxu0 0
        %2746 = vmatpush1.bf16.msra.mxu0 0
        %2747 = vmatprep.subr.bf16.mxu0 0
        %2748 = vmatpush1.bf16.msra.mxu0 0
        %2749 = vmatprep.subr.bf16.mxu0 0
        %2750 = vmatpush1.bf16.msra.mxu0 0
        %2751 = vmatprep.subr.bf16.mxu0 0
        %2752 = vmatpush1.bf16.msra.mxu0 0
        %2753 = vmatprep.subr.bf16.mxu0 0
        %2754 = vmatpush1.bf16.msra.mxu0 0
        %2755 = vmatprep.subr.bf16.mxu0 0
        %2756 = vmatpush1.bf16.msra.mxu0 0
        %2757 = vmatprep.subr.bf16.mxu0 0
        %2758 = vmatpush1.bf16.msra.mxu0 0
        %2759 = vmatprep.subr.bf16.mxu0 0
        %2760 = vmatpush1.bf16.msra.mxu0 0
        %2761 = vmatprep.subr.bf16.mxu0 0
        %2762 = vmatpush1.bf16.msra.mxu0 0
        %2763 = vmatprep.subr.bf16.mxu0 0
        %2764 = vmatpush1.bf16.msra.mxu0 0
        %2765 = vmatprep.subr.bf16.mxu0 0
        %2766 = vmatpush1.bf16.msra.mxu0 0
        %2767 = vmatprep.mubr.bf16.mxu0 0
        %2768 = vmatmul.mubr.bf16.gmra.mrb[0].mxu0 %v2730
        %v2769 = vpop.f32.mrb[0].mxu0
        %v2770 = vadd.f32 0.0, %v2769
        %v2771 = vpop.f32.mrb[0].mxu0
        %v2772 = vpop.f32.mrb[0].mxu0
        %v2773 = vadd.f32 0.0, %v2772
        %v2774 = vpop.f32.mrb[0].mxu0
        %2775 = vdwg.mxu0
        %v2777 = vsel %vm1186, %v2630, 0
        %v2780 = vsel %vm1781, %v2634, 0
        %2782 = vmatprep.subr.bf16.mxu0 0
        %2783 = vmatpush1.bf16.msra.mxu0 %v2780
        %2784 = vmatprep.subr.bf16.mxu0 0
        %2785 = vmatpush1.bf16.msra.mxu0 0
        %2786 = vmatprep.subr.bf16.mxu0 0
        %2787 = vmatpush1.bf16.msra.mxu0 0
        %2788 = vmatprep.subr.bf16.mxu0 0
        %2789 = vmatpush1.bf16.msra.mxu0 0
        %2790 = vmatprep.subr.bf16.mxu0 0
        %2791 = vmatpush1.bf16.msra.mxu0 0
        %2792 = vmatprep.subr.bf16.mxu0 0
        %2793 = vmatpush1.bf16.msra.mxu0 0
        %2794 = vmatprep.subr.bf16.mxu0 0
        %2795 = vmatpush1.bf16.msra.mxu0 0
        %2796 = vmatprep.subr.bf16.mxu0 0
        %2797 = vmatpush1.bf16.msra.mxu0 0
        %2798 = vmatprep.subr.bf16.mxu0 0
        %2799 = vmatpush1.bf16.msra.mxu0 0
        %2800 = vmatprep.subr.bf16.mxu0 0
        %2801 = vmatpush1.bf16.msra.mxu0 0
        %2802 = vmatprep.subr.bf16.mxu0 0
        %2803 = vmatpush1.bf16.msra.mxu0 0
        %2804 = vmatprep.subr.bf16.mxu0 0
        %2805 = vmatpush1.bf16.msra.mxu0 0
        %2806 = vmatprep.subr.bf16.mxu0 0
        %2807 = vmatpush1.bf16.msra.mxu0 0
        %2808 = vmatprep.subr.bf16.mxu0 0
        %2809 = vmatpush1.bf16.msra.mxu0 0
        %2810 = vmatprep.subr.bf16.mxu0 0
        %2811 = vmatpush1.bf16.msra.mxu0 0
        %2812 = vmatprep.subr.bf16.mxu0 0
        %2813 = vmatpush1.bf16.msra.mxu0 0
        %2814 = vmatprep.mubr.bf16.mxu0 0
        %2815 = vmatmul.mubr.bf16.gmra.mrb[0].mxu0 %v2777
        %v2816 = vpop.f32.mrb[0].mxu0
        %v2817 = vadd.f32 0.0, %v2816
        %v2818 = vpop.f32.mrb[0].mxu0
        %v2819 = vpop.f32.mrb[0].mxu0
        %v2820 = vadd.f32 0.0, %v2819
        %v2821 = vpop.f32.mrb[0].mxu0
        %2822 = vdwg.mxu0
        %v2823 = vsel %vm1065, %v2676, 0.0
        %v2824 = vsel %vm1065, %v2723, 0.0
        %v2825 = vadd.f32 %v2823, %v2824
        %v2826 = vsel %vm1065, %v2770, 0.0
        %v2827 = vadd.f32 %v2825, %v2826
        %v2828 = vsel %vm1065, %v2817, 0.0
        %v2829 = vadd.f32 %v2827, %v2828
        %v2830 = vsel %vm1065, %v2679, 0.0
        %v2831 = vsel %vm1065, %v2726, 0.0
        %v2832 = vadd.f32 %v2830, %v2831
        %v2833 = vsel %vm1065, %v2773, 0.0
        %v2834 = vadd.f32 %v2832, %v2833
        %v2835 = vsel %vm1065, %v2820, 0.0
        %v2836 = vadd.f32 %v2834, %v2835
        %v2837 = vld [vmem:[#allocation20] sm:$0x1]
        %v2839 = vlaneseq
        %v2840 = vshrl.u32 %v2839, 7
        %v2841 = vsub.s32 0, %v2840
        %v2842 = vrot.slane %v2837, %v2841
        %v2844 = vadd.f32 %v2829, %v2842
        %v2845 = vadd.f32 %v2836, %v2842
        %v2846 = vadd.f32 %v1990, %v2844
        %v2847 = vadd.f32 %v1991, %v2845
        %v2848 = vld [vmem:[%s19] sm:$0x1]
        %v2849 = vld [vmem:[%s20] sm:$0x1]
        %v2850 = vsel %vm1065, %v2846, 0.0
        %2851 = vadd.xlane.f32.xlu0 %v2850
        %v2852 = vpop.xlane.xlu0 %2851
        %v2853 = vsel %vm1065, %v2847, 0.0
        %2854 = vadd.xlane.f32.xlu0 %v2853
        %v2855 = vpop.xlane.xlu0 %2854
        %v2856 = vmul.f32 %v2852, %v1072
        %v2857 = vmul.f32 %v2855, %v1072
        %v2858 = vsub.f32 %v2846, %v2856
        %v2859 = vsub.f32 %v2847, %v2857
        %v2860 = vmul.f32 %v2858, %v2858
        %v2861 = vmul.f32 %v2859, %v2859
        %v2862 = vsel %vm1065, %v2860, 0.0
        %2863 = vadd.xlane.f32.xlu0 %v2862
        %v2864 = vpop.xlane.xlu0 %2863
        %v2865 = vsel %vm1065, %v2861, 0.0
        %2866 = vadd.xlane.f32.xlu0 %v2865
        %v2867 = vpop.xlane.xlu0 %2866
        %v2868 = vmul.f32 %v2864, %v1072
        %v2869 = vmul.f32 %v2867, %v1072
        %v2870 = vadd.f32 %v2868, 1e-08
        %v2871 = vadd.f32 %v2869, 1e-08
        %v2872 = vrsqrt.pop %v2870
        %v2873 = vrsqrt.pop %v2871
        %v2874 = vmul.f32 %v2858, %v2872
        %v2875 = vmul.f32 %v2859, %v2873
        %v2877 = vlaneseq
        %v2878 = vshrl.u32 %v2877, 7
        %v2879 = vsub.s32 0, %v2878
        %v2880 = vrot.slane %v2848, %v2879
        %v2882 = vmul.f32 %v2874, %v2880
        %v2883 = vmul.f32 %v2875, %v2880
        %v2885 = vlaneseq
        %v2886 = vshrl.u32 %v2885, 7
        %v2887 = vsub.s32 0, %v2886
        %v2888 = vrot.slane %v2849, %v2887
        %v2890 = vadd.f32 %v2882, %v2888
        %v2891 = vadd.f32 %v2883, %v2888
        %v2892 = vpack.c.bf16 %v2891, %v2890
        %v2893 = vld [vmem:[%s15] sm:$0xf]
        %v2894 = vld [vmem:[%s15 + $0x4] sm:$0xf]
        %v2895 = vld [vmem:[%s15 + $0x8] sm:$0xf]
        %v2896 = vld [vmem:[%s15 + $0xc] sm:$0xf]
        %v2897 = vld [vmem:[#allocation24] sm:$0x1]
        %v2899 = vlaneseq
        %v2900 = vshrl.u32 %v2899, 7
        %v2901 = vsub.s32 0, %v2900
        %v2902 = vrot.slane %v2897, %v2901
        %v2908 = vunpack.c.l.b16 %v2893
        %v2909 = vunpack.c.l.b16 %v2894
        %v2910 = vunpack.c.l.b16 %v2895
        %v2911 = vunpack.c.l.b16 %v2896
        %v2912 = vpack.c.b16 %v2909, %v2908
        %v2913 = vpack.c.b16 %v2911, %v2910
        %v2917 = vsel %vm1065, %v2892, 0
        %2919 = vmatprep.subr.bf16.mxu0 0
        %2920 = vmatpush1.bf16.msra.mxu0 %v2912
        %2921 = vmatprep.subr.bf16.mxu0 0
        %2922 = vmatpush1.bf16.msra.mxu0 %v2913
        %2923 = vmatprep.subr.bf16.mxu0 0
        %2924 = vmatpush1.bf16.msra.mxu0 0
        %2925 = vmatprep.subr.bf16.mxu0 0
        %2926 = vmatpush1.bf16.msra.mxu0 0
        %2927 = vmatprep.subr.bf16.mxu0 0
        %2928 = vmatpush1.bf16.msra.mxu0 0
        %2929 = vmatprep.subr.bf16.mxu0 0
        %2930 = vmatpush1.bf16.msra.mxu0 0
        %2931 = vmatprep.subr.bf16.mxu0 0
        %2932 = vmatpush1.bf16.msra.mxu0 0
        %2933 = vmatprep.subr.bf16.mxu0 0
        %2934 = vmatpush1.bf16.msra.mxu0 0
        %2935 = vmatprep.subr.bf16.mxu0 0
        %2936 = vmatpush1.bf16.msra.mxu0 0
        %2937 = vmatprep.subr.bf16.mxu0 0
        %2938 = vmatpush1.bf16.msra.mxu0 0
        %2939 = vmatprep.subr.bf16.mxu0 0
        %2940 = vmatpush1.bf16.msra.mxu0 0
        %2941 = vmatprep.subr.bf16.mxu0 0
        %2942 = vmatpush1.bf16.msra.mxu0 0
        %2943 = vmatprep.subr.bf16.mxu0 0
        %2944 = vmatpush1.bf16.msra.mxu0 0
        %2945 = vmatprep.subr.bf16.mxu0 0
        %2946 = vmatpush1.bf16.msra.mxu0 0
        %2947 = vmatprep.subr.bf16.mxu0 0
        %2948 = vmatpush1.bf16.msra.mxu0 0
        %2949 = vmatprep.subr.bf16.mxu0 0
        %2950 = vmatpush1.bf16.msra.mxu0 0
        %2951 = vmatprep.mubr.bf16.mxu0 0
        %2952 = vmatmul.mubr.bf16.gmra.mrb[0].mxu0 %v2917
        %v2953 = vpop.f32.mrb[0].mxu0
        %v2954 = vadd.f32 %v2902, %v2953
        %v2955 = vpop.f32.mrb[0].mxu0
        %v2956 = vpop.f32.mrb[0].mxu0
        %v2957 = vadd.f32 %v2902, %v2956
        %v2958 = vpop.f32.mrb[0].mxu0
        %2959 = vdwg.mxu0
        %v2960 = vmax.f32 %v2954, 0.0
        %v2961 = vmax.f32 %v2957, 0.0
        %v2962 = vpack.c.bf16 %v2961, %v2960
        %v2963 = vld [vmem:[%s17] sm:$0xf]
        %v2964 = vld [vmem:[%s17 + $0x4] sm:$0xf]
        %v2965 = vld [vmem:[%s17 + $0x8] sm:$0xf]
        %v2966 = vld [vmem:[%s17 + $0xc] sm:$0xf]
        %v2967 = vld [vmem:[%s17 + $0x10] sm:$0xf]
        %v2968 = vld [vmem:[%s17 + $0x14] sm:$0xf]
        %v2969 = vld [vmem:[%s17 + $0x18] sm:$0xf]
        %v2970 = vld [vmem:[%s17 + $0x1c] sm:$0xf]
        %v2971 = vld [vmem:[%s18] sm:$0x1]
        %v2973 = vlaneseq
        %v2974 = vshrl.u32 %v2973, 7
        %v2975 = vsub.s32 0, %v2974
        %v2976 = vrot.slane %v2971, %v2975
        %v2986 = vunpack.c.l.b16 %v2963
        %v2987 = vunpack.c.l.b16 %v2964
        %v2988 = vunpack.c.l.b16 %v2965
        %v2989 = vunpack.c.l.b16 %v2966
        %v2990 = vunpack.c.l.b16 %v2967
        %v2991 = vunpack.c.l.b16 %v2968
        %v2992 = vunpack.c.l.b16 %v2969
        %v2993 = vunpack.c.l.b16 %v2970
        %v2994 = vpack.c.b16 %v2987, %v2986
        %v2995 = vpack.c.b16 %v2989, %v2988
        %v2996 = vpack.c.b16 %v2991, %v2990
        %v2997 = vpack.c.b16 %v2993, %v2992
        %vm3002 = vcmask 523264
        %v3004 = vsel %vm3002, %v2962, 0
        %3006 = vmatprep.subr.bf16.mxu0 0
        %3007 = vmatpush1.bf16.msra.mxu0 %v2994
        %3008 = vmatprep.subr.bf16.mxu0 0
        %3009 = vmatpush1.bf16.msra.mxu0 %v2995
        %3010 = vmatprep.subr.bf16.mxu0 0
        %3011 = vmatpush1.bf16.msra.mxu0 %v2996
        %3012 = vmatprep.subr.bf16.mxu0 0
        %3013 = vmatpush1.bf16.msra.mxu0 %v2997
        %3014 = vmatprep.subr.bf16.mxu0 0
        %3015 = vmatpush1.bf16.msra.mxu0 0
        %3016 = vmatprep.subr.bf16.mxu0 0
        %3017 = vmatpush1.bf16.msra.mxu0 0
        %3018 = vmatprep.subr.bf16.mxu0 0
        %3019 = vmatpush1.bf16.msra.mxu0 0
        %3020 = vmatprep.subr.bf16.mxu0 0
        %3021 = vmatpush1.bf16.msra.mxu0 0
        %3022 = vmatprep.subr.bf16.mxu0 0
        %3023 = vmatpush1.bf16.msra.mxu0 0
        %3024 = vmatprep.subr.bf16.mxu0 0
        %3025 = vmatpush1.bf16.msra.mxu0 0
        %3026 = vmatprep.subr.bf16.mxu0 0
        %3027 = vmatpush1.bf16.msra.mxu0 0
        %3028 = vmatprep.subr.bf16.mxu0 0
        %3029 = vmatpush1.bf16.msra.mxu0 0
        %3030 = vmatprep.subr.bf16.mxu0 0
        %3031 = vmatpush1.bf16.msra.mxu0 0
        %3032 = vmatprep.subr.bf16.mxu0 0
        %3033 = vmatpush1.bf16.msra.mxu0 0
        %3034 = vmatprep.subr.bf16.mxu0 0
        %3035 = vmatpush1.bf16.msra.mxu0 0
        %3036 = vmatprep.subr.bf16.mxu0 0
        %3037 = vmatpush1.bf16.msra.mxu0 0
        %3038 = vmatprep.mubr.bf16.mxu0 0
        %3039 = vmatmul.mubr.bf16.gmra.mrb[0].mxu0 %v3004
        %v3040 = vpop.f32.mrb[0].mxu0
        %v3041 = vadd.f32 %v2976, %v3040
        %v3042 = vpop.f32.mrb[0].mxu0
        %v3043 = vpop.f32.mrb[0].mxu0
        %v3044 = vadd.f32 %v2976, %v3043
        %v3045 = vpop.f32.mrb[0].mxu0
        %3046 = vdwg.mxu0
        %v3047 = vadd.f32 %v2846, %v3041
        %v3048 = vadd.f32 %v2847, %v3044
        %3049 = vst.msk [vmem:[%s927] sm:$0xff] %vm1065, %v3047
        %3050 = vst.msk [vmem:[%s927 + $0x8] sm:$0xff] %vm1065, %v3048
        %s3051 = sand.u32 %s570, 1
        %s3052 = scalar_lea.sflag [#allocation8], %s3051
        %s3053 = sand.u32 %s570, 1
        %s3054 = smul.addr %s3053, 16
        %s3055 = scalar_lea.vmem [#allocation26], %s3054
        // Predicated region
        $region165: #{tpu_custom_call.1} parent=111 // pred_check
          %p3056 = pneg %p580
        $region166: #{tpu_custom_call.1} parent=111 // pred_check_branch
          %3058 = sbr.rel (%p3056) target = $region168
        $region167: #{tpu_custom_call.1} parent=111 // pred_region
          %s3059 = smul.u32 2, %s53
          %s3061 = ssub.s32 256, 256
          %3062 = vsyncadd %s3052, %s3061
          %s3063 = smul.addr %s52, 4
          %s3064 = sadd.s32 %s3059, %s3063
          %s3065 = smul.addr %s3064, 128
          %s3066 = scalar_lea.hbm %s23, %s3065
          %s3067 = sshll.u32 %s3055, 4
          %s3068 = int_to_ptr.vmem [resolvable:$true] %s3067
          %3073 = dma.vmem_to_hbm [thread:$0]  %s3068, 256, %s3066, %s3052, 128, 128, 8
        $region168: #{tpu_custom_call.1} parent=111 // pred_fallthru
          _
      $region112: #{tpu_custom_call.1} parent=5 // pred_fallthru
        _
      %p3074 = scmp.le.s32.totalorder 2, %s43
      // Predicated region
      $region169: #{tpu_custom_call.1} parent=5 // pred_check
        %p3075 = pneg %p3074
      $region170: #{tpu_custom_call.1} parent=5 // pred_check_branch
        %3077 = sbr.rel (%p3075) target = $region172
      $region171: #{tpu_custom_call.1} parent=5 // pred_region
        %s3078 = ssub.s32 %s43, 2
        // Predicated region
        $region173: #{tpu_custom_call.1} parent=171 // pred_check
          %p3079 = pneg %p586
        $region174: #{tpu_custom_call.1} parent=171 // pred_check_branch
          %3081 = sbr.rel (%p3079) target = $region176
        $region175: #{tpu_custom_call.1} parent=171 // pred_region
          %s3082 = sand.u32 %s571, 1
          %s3083 = scalar_lea.sflag [#allocation8], %s3082
          %s3084 = sand.u32 %s571, 1
          %s3085 = smul.addr %s3084, 16
          %s3086 = scalar_lea.vmem [#allocation26], %s3085
          %3087 = dma.done %s3083, 256
        $region176: #{tpu_custom_call.1} parent=171 // pred_fallthru
          _
      $region172: #{tpu_custom_call.1} parent=5 // pred_fallthru
        _
    $region6: #{tpu_custom_call.1} parent=1 // loop_footer
      %s47 = sadd.s32 1, %s43
    $region7: #{tpu_custom_call.1} parent=1 // loop_footer_branch
      %42 = sbr.rel target = $region3
    $region8: #{tpu_custom_call.1} parent=1 // loop_exit
      _
    %3088 = vsyncpa [#allocation7], 1
    %s3089 = scalar_lea.sflag [#allocation7], 1
    %3090 = vsyncpa %s3089, 1
    %3091 = vsyncpa [#allocation10], 1
    %s3092 = scalar_lea.sflag [#allocation10], 1
    %3093 = vsyncpa %s3092, 1
    %3094 = vsyncpa [#allocation13], 1
    %3095 = vsyncpa [#allocation16], 1
    %3096 = vsyncpa [#allocation19], 1
    %3097 = vsyncpa [#allocation22], 1
    %3098 = vsyncpa [#allocation25], 1
    %3099 = vsyncpa [#allocation8], 1
    %s3100 = scalar_lea.sflag [#allocation8], 1
    %3101 = vsyncpa %s3100, 1

</llo_original>
